<compile_context>
chip_gen: v6e
topology: v6e:2x2x1
jax: 0.10.0
libtpu: 0.0.40
codegen_flags: <defaults>
</compile_context>

<pallas_src>
import functools

import jax
import jax.numpy as jnp
from jax.experimental import pallas as pl
from jax.experimental.pallas import tpu as pltpu

# Scoped (per-dot) matmul precision — see header note on why HIGH (bf16_3x) was not adopted.
_DOT_PREC = jax.lax.Precision.HIGHEST


def decoder_kernel(x_ref, w_pre_ref, b_pre_ref, w_blk_ref, b_fc_ref, out_ref,
                   *, T, B, H, C):
    """Wavefronted 2-layer LSTM with the FC head fused into the recurrent matmul.

    Per wavefront step s (one MXU push, one sigmoid, two tanh):
      comb = [h0(s) | h1(s-1)] @ w_blk                       # (B, 8H + C)
        packed gate cols : layer-0 recurrent part for t=s+1 interleaved with
                           layer-1 full (pre-bias) gates for t=s
        cols 8H:8H+C     : h1(s-1) @ w_fc  (FC output for t=s-1, pre-bias)
      g = comb[:, :8H] + addend(s+1)                         # addend = [xg0(t) | b1] packed row
      h, c = packed_cell(g, c)                               # h is the next step's matmul LHS
    """
    f32 = jnp.float32
    H2, H4, H8 = 2 * H, 4 * H, 8 * H

    w_pre = w_pre_ref[...]          # (F, 8H)  x -> packed layer-0 gates (zeros in layer-1 cols)
    b_pre = b_pre_ref[...]          # (1, 8H)  b0 in layer-0 cols, b1 in layer-1 cols
    w_blk = w_blk_ref[...]          # (2H, 8H + C) wavefront block weight (FC folded in)

    # ---- one-shot precompute: packed layer-0 input gates for every (b, t), held in vregs ----
    # x is consumed per batch row, so no wrapper transpose / time-major reshape is needed.
    # NOTE(scale, v7x): chunk this precompute over T (emit_pipeline) once B*T*8H*4 bytes
    # approaches ~8-16 MiB (v7x: 64 MiB physical / 32 MiB default scoped VMEM); here it is 4 KiB.
    tab = [
        jnp.dot(x_ref[b], w_pre, precision=_DOT_PREC, preferred_element_type=f32) + b_pre
        for b in range(B)
    ]
    # Static, loop-invariant (B, 8H) addend per timestep: [xg0_i(t)|b1_i|xg0_f(t)|b1_f|...].
    adds = [
        jnp.concatenate([tab[b][t:t + 1, :] for b in range(B)], axis=0)
        for t in range(T)
    ]

    def packed_cell(g, c):
        # Both layers share ONE sigmoid + ONE tanh over the packed (B, 8H) gate vector.
        # Column order [i0 i1 | f0 f1 | g0 g1 | o0 o1]; carries are [layer0 | layer1].
        sg = jax.nn.sigmoid(g)
        th = jnp.tanh(g)
        i = sg[:, 0:H2]
        f = sg[:, H2:H4]
        gg = th[:, H4:H4 + H2]
        o = sg[:, H4 + H2:H8]
        c_new = f * c + i * gg
        h_new = o * jnp.tanh(c_new)
        return h_new, c_new

    # ---- prologue: layer-0 cell at t=0 (h0(-1)=c0(-1)=0) ----
    # The packed cell also produces a spurious layer-1 half (zero input / zero state);
    # mask it back to zero so h1(-1) = c1(-1) = 0 as required.
    h, c = packed_cell(adds[0], jnp.zeros((B, H2), f32))
    keep_l0 = jax.lax.broadcasted_iota(jnp.int32, (B, H2), 1) < H
    h = jnp.where(keep_l0, h, 0.0)
    c = jnp.where(keep_l0, c, 0.0)

    # ---- wavefront loop: fully unrolled Python loop -> all slices static, state in vregs ----
    fc_chunks = []
    for s in range(T):
        comb = jnp.dot(h, w_blk, precision=_DOT_PREC, preferred_element_type=f32)
        if s >= 1:
            fc_chunks.append(comb[:, H8:])                 # FC (pre-bias) for t = s-1
        # Last step's layer-0 half (t = T) is dead; min() is a static Python clamp (free).
        g = comb[:, :H8] + adds[min(s + 1, T - 1)]
        h, c = packed_cell(g, c)                           # -> [h0(s+1) | h1(s)]

    # ---- epilogue: FC for the final timestep; w_fc is the last C columns of w_blk ----
    fc_chunks.append(jnp.dot(h[:, H:H2], w_blk[H:H2, H8:],
                             precision=_DOT_PREC, preferred_element_type=f32))

    # Single consolidated store, batch-major (B, T*C): the wrapper reshape to (B, T, C) is a
    # free row-major reshape, so there is no output transpose either.
    out_ref[...] = jnp.concatenate(fc_chunks, axis=1) + b_fc_ref[...]


@jax.jit
def decoder_forward(x, packed):
    """x: (B, T, F) batch-first, identical to torch nn.LSTM(batch_first=True)."""
    B, T, F = x.shape
    H = F // 4
    TC = packed["b_fc_rep"].shape[1]
    C = TC // T

    args = (x, packed["w_pre"], packed["b_pre"], packed["w_blk"], packed["b_fc_rep"])
    vmem = pl.BlockSpec(memory_space=pltpu.MemorySpace.VMEM)
    # Single invocation, no grid: at B=2 / T=8 the kernel is bound by the T-step serial chain,
    # not by any throughput unit.
    # NOTE(scale, v7x megacore): once B >= 16 (>= one 8-sublane tile per TensorCore), add a
    # leading batch grid axis with dimension_semantics=("parallel",) to engage both cores;
    # splitting at B=2 buys nothing (both rows share one vreg).
    out2d = pl.pallas_call(
        functools.partial(decoder_kernel, T=T, B=B, H=H, C=C),
        out_shape=jax.ShapeDtypeStruct((B, T * C), jnp.float32),
        in_specs=[vmem] * len(args),
        out_specs=vmem,
    )(*args)
    return out2d.reshape(B, T, C)


def pack_params(params, T):
    """One-time repack of PyTorch-layout params into the kernel's fused layout.

    Done outside the jitted forward so the per-call wrapper is just pallas_call + a free
    reshape (at these sizes wrapper XLA ops can rival the kernel itself).
    """
    H = params["w_hh0_T"].shape[0]
    F = params["w_ih0_T"].shape[0]
    C = params["w_fc_T"].shape[1]
    zF = jnp.zeros((F, H), jnp.float32)
    zH = jnp.zeros((H, H), jnp.float32)

    def gate(w, k):               # k-th [i, f, g, o] gate block of a (*, 4H) matrix
        return w[:, k * H:(k + 1) * H]

    # x -> packed layer-0 gate columns (layer-1 columns are 0; their addend is just b1).
    w_pre = jnp.concatenate(
        [jnp.concatenate([gate(params["w_ih0_T"], k), zF], axis=1) for k in range(4)],
        axis=1)
    b_pre = jnp.concatenate(
        [jnp.concatenate([gate(params["b0"], k), gate(params["b1"], k)], axis=1)
         for k in range(4)], axis=1)

    # Wavefront block weight: rows 0:H multiply h0(s), rows H:2H multiply h1(s-1).
    # Columns: packed gates [i0 i1 | f0 f1 | g0 g1 | o0 o1] followed by the C FC columns.
    top = jnp.concatenate(
        [jnp.concatenate([gate(params["w_hh0_T"], k), gate(params["w_ih1_T"], k)], axis=1)
         for k in range(4)] + [jnp.zeros((H, C), jnp.float32)], axis=1)
    bot = jnp.concatenate(
        [jnp.concatenate([zH, gate(params["w_hh1_T"], k)], axis=1) for k in range(4)]
        + [params["w_fc_T"]], axis=1)
    w_blk = jnp.concatenate([top, bot], axis=0)

    return {"w_pre": w_pre, "b_pre": b_pre, "w_blk": w_blk,
            "b_fc_rep": jnp.tile(params["b_fc"], (1, T))}


def init_params(key, nfeatures, nclasses):
    """Deterministic init matching PyTorch default shapes / uniform(-1/sqrt(H), 1/sqrt(H))."""
    H = nfeatures // 4
    keys = jax.random.split(key, 10)
    bound = 1.0 / (H ** 0.5)

    def u(k, shape):
        return jax.random.uniform(k, shape, jnp.float32, -bound, bound)

    w_ih0 = u(keys[0], (4 * H, nfeatures))
    w_hh0 = u(keys[1], (4 * H, H))
    b_ih0 = u(keys[2], (4 * H,))
    b_hh0 = u(keys[3], (4 * H,))
    w_ih1 = u(keys[4], (4 * H, H))
    w_hh1 = u(keys[5], (4 * H, H))
    b_ih1 = u(keys[6], (4 * H,))
    b_hh1 = u(keys[7], (4 * H,))
    w_fc = u(keys[8], (nclasses, H))
    b_fc = u(keys[9], (nclasses,))
    return {
        "w_ih0_T": w_ih0.T, "w_hh0_T": w_hh0.T, "b0": (b_ih0 + b_hh0)[None, :],
        "w_ih1_T": w_ih1.T, "w_hh1_T": w_hh1.T, "b1": (b_ih1 + b_hh1)[None, :],
        "w_fc_T": w_fc.T, "b_fc": b_fc[None, :],
    }


def ref_decoder(x, params):
    """Pure-JAX reference (same math as torch.nn.LSTM(num_layers=2) + Linear), f32 dots."""
    hp = jax.lax.Precision.HIGHEST

    def lstm_layer(xs, w_ih_T, w_hh_T, b):
        B, T, _ = xs.shape
        H = w_hh_T.shape[0]

        def step(carry, x_t):
            h, c = carry
            g = (jnp.dot(x_t, w_ih_T, precision=hp)
                 + jnp.dot(h, w_hh_T, precision=hp) + b)
            i = jax.nn.sigmoid(g[:, 0 * H:1 * H])
            f = jax.nn.sigmoid(g[:, 1 * H:2 * H])
            gg = jnp.tanh(g[:, 2 * H:3 * H])
            o = jax.nn.sigmoid(g[:, 3 * H:4 * H])
            c = f * c + i * gg
            h = o * jnp.tanh(c)
            return (h, c), h

        init = (jnp.zeros((B, H), jnp.float32), jnp.zeros((B, H), jnp.float32))
        _, hs = jax.lax.scan(step, init, jnp.swapaxes(xs, 0, 1))
        return jnp.swapaxes(hs, 0, 1)

    h1 = lstm_layer(x, params["w_ih0_T"], params["w_hh0_T"], params["b0"])
    h2 = lstm_layer(h1, params["w_ih1_T"], params["w_hh1_T"], params["b1"])
    return jnp.dot(h2, params["w_fc_T"], precision=hp) + params["b_fc"]


if __name__ == "__main__":
    B, T, NFEAT, NCLASS = 2, 8, 32, 4   # args.nfeatures=32, args.nclasses=4
    key = jax.random.PRNGKey(0)
    kx, kp = jax.random.split(key)
    x = jax.random.normal(kx, (B, T, NFEAT), jnp.float32)
    params = init_params(kp, NFEAT, NCLASS)
    packed = pack_params(params, T)

    out = jax.block_until_ready(decoder_forward(x, packed))
    ref = ref_decoder(x, params)

    assert out.shape == (B, T, NCLASS), out.shape
    max_err = float(jnp.max(jnp.abs(out - ref)))
    assert jnp.allclose(out, ref, atol=1e-4, rtol=1e-4), max_err
    print("KERNEL_OK")
</pallas_src>

<mosaic_0001>
module attributes {stable_mosaic.version = 11 : i64} {
  func.func @decoder_kernel(%arg0: memref<2x8x32xf32, #tpu.memory_space<vmem>>, %arg1: memref<32x64xf32, #tpu.memory_space<vmem>>, %arg2: memref<1x64xf32, #tpu.memory_space<vmem>>, %arg3: memref<16x68xf32, #tpu.memory_space<vmem>>, %arg4: memref<1x32xf32, #tpu.memory_space<vmem>>, %arg5: memref<2x32xf32, #tpu.memory_space<vmem>>) attributes {dimension_semantics = [], scalar_prefetch = 0 : i64, scratch_operands = 0 : i64, tpu.core_type = #tpu.core_type<tc>} {
    %c0 = arith.constant 0 : index
    %c0_0 = arith.constant 0 : index
    %0 = vector.load %arg1[%c0, %c0_0] : memref<32x64xf32, #tpu.memory_space<vmem>>, vector<32x64xf32>
    %c0_1 = arith.constant 0 : index
    %c0_2 = arith.constant 0 : index
    %1 = vector.load %arg2[%c0_1, %c0_2] : memref<1x64xf32, #tpu.memory_space<vmem>>, vector<1x64xf32>
    %c0_3 = arith.constant 0 : index
    %c0_4 = arith.constant 0 : index
    %2 = vector.load %arg3[%c0_3, %c0_4] : memref<16x68xf32, #tpu.memory_space<vmem>>, vector<16x68xf32>
    %c0_5 = arith.constant 0 : index
    %c0_6 = arith.constant 0 : index
    %c0_7 = arith.constant 0 : index
    %3 = vector.load %arg0[%c0_5, %c0_6, %c0_7] : memref<2x8x32xf32, #tpu.memory_space<vmem>>, vector<1x8x32xf32>
    %4 = vector.shape_cast %3 : vector<1x8x32xf32> to vector<8x32xf32>
    %cst = arith.constant dense<0.000000e+00> : vector<8x64xf32>
    %5 = tpu.matmul %4, %0, %cst {dimension_numbers = #tpu.dot_dimension_numbers<[1], [0], [0], [1], [0, 0, 1, 1], [], []>, precision = #tpu.contract_precision<fp32>} : vector<8x32xf32>, vector<32x64xf32>, vector<8x64xf32> -> vector<8x64xf32>
    %6 = vector.broadcast %1 : vector<1x64xf32> to vector<8x64xf32>
    %7 = arith.addf %5, %6 : vector<8x64xf32>
    %c1 = arith.constant 1 : index
    %c0_8 = arith.constant 0 : index
    %c0_9 = arith.constant 0 : index
    %8 = vector.load %arg0[%c1, %c0_8, %c0_9] : memref<2x8x32xf32, #tpu.memory_space<vmem>>, vector<1x8x32xf32>
    %9 = vector.shape_cast %8 : vector<1x8x32xf32> to vector<8x32xf32>
    %cst_10 = arith.constant dense<0.000000e+00> : vector<8x64xf32>
    %10 = tpu.matmul %9, %0, %cst_10 {dimension_numbers = #tpu.dot_dimension_numbers<[1], [0], [0], [1], [0, 0, 1, 1], [], []>, precision = #tpu.contract_precision<fp32>} : vector<8x32xf32>, vector<32x64xf32>, vector<8x64xf32> -> vector<8x64xf32>
    %11 = vector.broadcast %1 : vector<1x64xf32> to vector<8x64xf32>
    %12 = arith.addf %10, %11 : vector<8x64xf32>
    %13 = vector.extract_strided_slice %7 {offsets = [0, 0], sizes = [1, 64], strides = [1, 1]} : vector<8x64xf32> to vector<1x64xf32>
    %14 = vector.extract_strided_slice %12 {offsets = [0, 0], sizes = [1, 64], strides = [1, 1]} : vector<8x64xf32> to vector<1x64xf32>
    %15 = tpu.concatenate %13, %14 in 0 : vector<1x64xf32>, vector<1x64xf32> -> vector<2x64xf32>
    %16 = vector.extract_strided_slice %7 {offsets = [1, 0], sizes = [1, 64], strides = [1, 1]} : vector<8x64xf32> to vector<1x64xf32>
    %17 = vector.extract_strided_slice %12 {offsets = [1, 0], sizes = [1, 64], strides = [1, 1]} : vector<8x64xf32> to vector<1x64xf32>
    %18 = tpu.concatenate %16, %17 in 0 : vector<1x64xf32>, vector<1x64xf32> -> vector<2x64xf32>
    %19 = vector.extract_strided_slice %7 {offsets = [2, 0], sizes = [1, 64], strides = [1, 1]} : vector<8x64xf32> to vector<1x64xf32>
    %20 = vector.extract_strided_slice %12 {offsets = [2, 0], sizes = [1, 64], strides = [1, 1]} : vector<8x64xf32> to vector<1x64xf32>
    %21 = tpu.concatenate %19, %20 in 0 : vector<1x64xf32>, vector<1x64xf32> -> vector<2x64xf32>
    %22 = vector.extract_strided_slice %7 {offsets = [3, 0], sizes = [1, 64], strides = [1, 1]} : vector<8x64xf32> to vector<1x64xf32>
    %23 = vector.extract_strided_slice %12 {offsets = [3, 0], sizes = [1, 64], strides = [1, 1]} : vector<8x64xf32> to vector<1x64xf32>
    %24 = tpu.concatenate %22, %23 in 0 : vector<1x64xf32>, vector<1x64xf32> -> vector<2x64xf32>
    %25 = vector.extract_strided_slice %7 {offsets = [4, 0], sizes = [1, 64], strides = [1, 1]} : vector<8x64xf32> to vector<1x64xf32>
    %26 = vector.extract_strided_slice %12 {offsets = [4, 0], sizes = [1, 64], strides = [1, 1]} : vector<8x64xf32> to vector<1x64xf32>
    %27 = tpu.concatenate %25, %26 in 0 : vector<1x64xf32>, vector<1x64xf32> -> vector<2x64xf32>
    %28 = vector.extract_strided_slice %7 {offsets = [5, 0], sizes = [1, 64], strides = [1, 1]} : vector<8x64xf32> to vector<1x64xf32>
    %29 = vector.extract_strided_slice %12 {offsets = [5, 0], sizes = [1, 64], strides = [1, 1]} : vector<8x64xf32> to vector<1x64xf32>
    %30 = tpu.concatenate %28, %29 in 0 : vector<1x64xf32>, vector<1x64xf32> -> vector<2x64xf32>
    %31 = vector.extract_strided_slice %7 {offsets = [6, 0], sizes = [1, 64], strides = [1, 1]} : vector<8x64xf32> to vector<1x64xf32>
    %32 = vector.extract_strided_slice %12 {offsets = [6, 0], sizes = [1, 64], strides = [1, 1]} : vector<8x64xf32> to vector<1x64xf32>
    %33 = tpu.concatenate %31, %32 in 0 : vector<1x64xf32>, vector<1x64xf32> -> vector<2x64xf32>
    %34 = vector.extract_strided_slice %7 {offsets = [7, 0], sizes = [1, 64], strides = [1, 1]} : vector<8x64xf32> to vector<1x64xf32>
    %35 = vector.extract_strided_slice %12 {offsets = [7, 0], sizes = [1, 64], strides = [1, 1]} : vector<8x64xf32> to vector<1x64xf32>
    %36 = tpu.concatenate %34, %35 in 0 : vector<1x64xf32>, vector<1x64xf32> -> vector<2x64xf32>
    %cst_11 = arith.constant 0.000000e+00 : f32
    %37 = vector.broadcast %cst_11 : f32 to vector<2x16xf32>
    %38 = arith.negf %15 : vector<2x64xf32>
    %39 = math.exp %38 : vector<2x64xf32>
    %cst_12 = arith.constant 1.000000e+00 : f32
    %40 = vector.broadcast %cst_12 : f32 to vector<2x64xf32>
    %41 = arith.addf %40, %39 : vector<2x64xf32>
    %42 = arith.divf %40, %41 : vector<2x64xf32>
    %43 = math.tanh %15 : vector<2x64xf32>
    %44 = vector.extract_strided_slice %42 {offsets = [0, 0], sizes = [2, 16], strides = [1, 1]} : vector<2x64xf32> to vector<2x16xf32>
    %45 = vector.extract_strided_slice %42 {offsets = [0, 16], sizes = [2, 16], strides = [1, 1]} : vector<2x64xf32> to vector<2x16xf32>
    %46 = vector.extract_strided_slice %43 {offsets = [0, 32], sizes = [2, 16], strides = [1, 1]} : vector<2x64xf32> to vector<2x16xf32>
    %47 = vector.extract_strided_slice %42 {offsets = [0, 48], sizes = [2, 16], strides = [1, 1]} : vector<2x64xf32> to vector<2x16xf32>
    %48 = arith.mulf %45, %37 : vector<2x16xf32>
    %49 = arith.mulf %44, %46 : vector<2x16xf32>
    %50 = arith.addf %48, %49 : vector<2x16xf32>
    %51 = math.tanh %50 : vector<2x16xf32>
    %52 = arith.mulf %47, %51 : vector<2x16xf32>
    %53 = tpu.iota {dimensions = array<i32: 1>} : vector<2x16xi32>
    %c8_i32 = arith.constant 8 : i32
    %54 = vector.broadcast %c8_i32 : i32 to vector<2x16xi32>
    %55 = arith.cmpi slt, %53, %54 : vector<2x16xi32>
    %cst_13 = arith.constant 0.000000e+00 : f32
    %56 = vector.broadcast %cst_13 : f32 to vector<2x16xf32>
    %57 = arith.select %55, %52, %56 : vector<2x16xi1>, vector<2x16xf32>
    %cst_14 = arith.constant 0.000000e+00 : f32
    %58 = vector.broadcast %cst_14 : f32 to vector<2x16xf32>
    %59 = arith.select %55, %50, %58 : vector<2x16xi1>, vector<2x16xf32>
    %cst_15 = arith.constant dense<0.000000e+00> : vector<2x68xf32>
    %60 = tpu.matmul %57, %2, %cst_15 {dimension_numbers = #tpu.dot_dimension_numbers<[1], [0], [0], [1], [0, 0, 1, 1], [], []>, precision = #tpu.contract_precision<fp32>} : vector<2x16xf32>, vector<16x68xf32>, vector<2x68xf32> -> vector<2x68xf32>
    %61 = vector.extract_strided_slice %60 {offsets = [0, 0], sizes = [2, 64], strides = [1, 1]} : vector<2x68xf32> to vector<2x64xf32>
    %62 = arith.addf %61, %18 : vector<2x64xf32>
    %63 = arith.negf %62 : vector<2x64xf32>
    %64 = math.exp %63 : vector<2x64xf32>
    %cst_16 = arith.constant 1.000000e+00 : f32
    %65 = vector.broadcast %cst_16 : f32 to vector<2x64xf32>
    %66 = arith.addf %65, %64 : vector<2x64xf32>
    %67 = arith.divf %65, %66 : vector<2x64xf32>
    %68 = math.tanh %62 : vector<2x64xf32>
    %69 = vector.extract_strided_slice %67 {offsets = [0, 0], sizes = [2, 16], strides = [1, 1]} : vector<2x64xf32> to vector<2x16xf32>
    %70 = vector.extract_strided_slice %67 {offsets = [0, 16], sizes = [2, 16], strides = [1, 1]} : vector<2x64xf32> to vector<2x16xf32>
    %71 = vector.extract_strided_slice %68 {offsets = [0, 32], sizes = [2, 16], strides = [1, 1]} : vector<2x64xf32> to vector<2x16xf32>
    %72 = vector.extract_strided_slice %67 {offsets = [0, 48], sizes = [2, 16], strides = [1, 1]} : vector<2x64xf32> to vector<2x16xf32>
    %73 = arith.mulf %70, %59 : vector<2x16xf32>
    %74 = arith.mulf %69, %71 : vector<2x16xf32>
    %75 = arith.addf %73, %74 : vector<2x16xf32>
    %76 = math.tanh %75 : vector<2x16xf32>
    %77 = arith.mulf %72, %76 : vector<2x16xf32>
    %cst_17 = arith.constant dense<0.000000e+00> : vector<2x68xf32>
    %78 = tpu.matmul %77, %2, %cst_17 {dimension_numbers = #tpu.dot_dimension_numbers<[1], [0], [0], [1], [0, 0, 1, 1], [], []>, precision = #tpu.contract_precision<fp32>} : vector<2x16xf32>, vector<16x68xf32>, vector<2x68xf32> -> vector<2x68xf32>
    %79 = vector.extract_strided_slice %78 {offsets = [0, 64], sizes = [2, 4], strides = [1, 1]} : vector<2x68xf32> to vector<2x4xf32>
    %80 = vector.extract_strided_slice %78 {offsets = [0, 0], sizes = [2, 64], strides = [1, 1]} : vector<2x68xf32> to vector<2x64xf32>
    %81 = arith.addf %80, %21 : vector<2x64xf32>
    %82 = arith.negf %81 : vector<2x64xf32>
    %83 = math.exp %82 : vector<2x64xf32>
    %cst_18 = arith.constant 1.000000e+00 : f32
    %84 = vector.broadcast %cst_18 : f32 to vector<2x64xf32>
    %85 = arith.addf %84, %83 : vector<2x64xf32>
    %86 = arith.divf %84, %85 : vector<2x64xf32>
    %87 = math.tanh %81 : vector<2x64xf32>
    %88 = vector.extract_strided_slice %86 {offsets = [0, 0], sizes = [2, 16], strides = [1, 1]} : vector<2x64xf32> to vector<2x16xf32>
    %89 = vector.extract_strided_slice %86 {offsets = [0, 16], sizes = [2, 16], strides = [1, 1]} : vector<2x64xf32> to vector<2x16xf32>
    %90 = vector.extract_strided_slice %87 {offsets = [0, 32], sizes = [2, 16], strides = [1, 1]} : vector<2x64xf32> to vector<2x16xf32>
    %91 = vector.extract_strided_slice %86 {offsets = [0, 48], sizes = [2, 16], strides = [1, 1]} : vector<2x64xf32> to vector<2x16xf32>
    %92 = arith.mulf %89, %75 : vector<2x16xf32>
    %93 = arith.mulf %88, %90 : vector<2x16xf32>
    %94 = arith.addf %92, %93 : vector<2x16xf32>
    %95 = math.tanh %94 : vector<2x16xf32>
    %96 = arith.mulf %91, %95 : vector<2x16xf32>
    %cst_19 = arith.constant dense<0.000000e+00> : vector<2x68xf32>
    %97 = tpu.matmul %96, %2, %cst_19 {dimension_numbers = #tpu.dot_dimension_numbers<[1], [0], [0], [1], [0, 0, 1, 1], [], []>, precision = #tpu.contract_precision<fp32>} : vector<2x16xf32>, vector<16x68xf32>, vector<2x68xf32> -> vector<2x68xf32>
    %98 = vector.extract_strided_slice %97 {offsets = [0, 64], sizes = [2, 4], strides = [1, 1]} : vector<2x68xf32> to vector<2x4xf32>
    %99 = vector.extract_strided_slice %97 {offsets = [0, 0], sizes = [2, 64], strides = [1, 1]} : vector<2x68xf32> to vector<2x64xf32>
    %100 = arith.addf %99, %24 : vector<2x64xf32>
    %101 = arith.negf %100 : vector<2x64xf32>
    %102 = math.exp %101 : vector<2x64xf32>
    %cst_20 = arith.constant 1.000000e+00 : f32
    %103 = vector.broadcast %cst_20 : f32 to vector<2x64xf32>
    %104 = arith.addf %103, %102 : vector<2x64xf32>
    %105 = arith.divf %103, %104 : vector<2x64xf32>
    %106 = math.tanh %100 : vector<2x64xf32>
    %107 = vector.extract_strided_slice %105 {offsets = [0, 0], sizes = [2, 16], strides = [1, 1]} : vector<2x64xf32> to vector<2x16xf32>
    %108 = vector.extract_strided_slice %105 {offsets = [0, 16], sizes = [2, 16], strides = [1, 1]} : vector<2x64xf32> to vector<2x16xf32>
    %109 = vector.extract_strided_slice %106 {offsets = [0, 32], sizes = [2, 16], strides = [1, 1]} : vector<2x64xf32> to vector<2x16xf32>
    %110 = vector.extract_strided_slice %105 {offsets = [0, 48], sizes = [2, 16], strides = [1, 1]} : vector<2x64xf32> to vector<2x16xf32>
    %111 = arith.mulf %108, %94 : vector<2x16xf32>
    %112 = arith.mulf %107, %109 : vector<2x16xf32>
    %113 = arith.addf %111, %112 : vector<2x16xf32>
    %114 = math.tanh %113 : vector<2x16xf32>
    %115 = arith.mulf %110, %114 : vector<2x16xf32>
    %cst_21 = arith.constant dense<0.000000e+00> : vector<2x68xf32>
    %116 = tpu.matmul %115, %2, %cst_21 {dimension_numbers = #tpu.dot_dimension_numbers<[1], [0], [0], [1], [0, 0, 1, 1], [], []>, precision = #tpu.contract_precision<fp32>} : vector<2x16xf32>, vector<16x68xf32>, vector<2x68xf32> -> vector<2x68xf32>
    %117 = vector.extract_strided_slice %116 {offsets = [0, 64], sizes = [2, 4], strides = [1, 1]} : vector<2x68xf32> to vector<2x4xf32>
    %118 = vector.extract_strided_slice %116 {offsets = [0, 0], sizes = [2, 64], strides = [1, 1]} : vector<2x68xf32> to vector<2x64xf32>
    %119 = arith.addf %118, %27 : vector<2x64xf32>
    %120 = arith.negf %119 : vector<2x64xf32>
    %121 = math.exp %120 : vector<2x64xf32>
    %cst_22 = arith.constant 1.000000e+00 : f32
    %122 = vector.broadcast %cst_22 : f32 to vector<2x64xf32>
    %123 = arith.addf %122, %121 : vector<2x64xf32>
    %124 = arith.divf %122, %123 : vector<2x64xf32>
    %125 = math.tanh %119 : vector<2x64xf32>
    %126 = vector.extract_strided_slice %124 {offsets = [0, 0], sizes = [2, 16], strides = [1, 1]} : vector<2x64xf32> to vector<2x16xf32>
    %127 = vector.extract_strided_slice %124 {offsets = [0, 16], sizes = [2, 16], strides = [1, 1]} : vector<2x64xf32> to vector<2x16xf32>
    %128 = vector.extract_strided_slice %125 {offsets = [0, 32], sizes = [2, 16], strides = [1, 1]} : vector<2x64xf32> to vector<2x16xf32>
    %129 = vector.extract_strided_slice %124 {offsets = [0, 48], sizes = [2, 16], strides = [1, 1]} : vector<2x64xf32> to vector<2x16xf32>
    %130 = arith.mulf %127, %113 : vector<2x16xf32>
    %131 = arith.mulf %126, %128 : vector<2x16xf32>
    %132 = arith.addf %130, %131 : vector<2x16xf32>
    %133 = math.tanh %132 : vector<2x16xf32>
    %134 = arith.mulf %129, %133 : vector<2x16xf32>
    %cst_23 = arith.constant dense<0.000000e+00> : vector<2x68xf32>
    %135 = tpu.matmul %134, %2, %cst_23 {dimension_numbers = #tpu.dot_dimension_numbers<[1], [0], [0], [1], [0, 0, 1, 1], [], []>, precision = #tpu.contract_precision<fp32>} : vector<2x16xf32>, vector<16x68xf32>, vector<2x68xf32> -> vector<2x68xf32>
    %136 = vector.extract_strided_slice %135 {offsets = [0, 64], sizes = [2, 4], strides = [1, 1]} : vector<2x68xf32> to vector<2x4xf32>
    %137 = vector.extract_strided_slice %135 {offsets = [0, 0], sizes = [2, 64], strides = [1, 1]} : vector<2x68xf32> to vector<2x64xf32>
    %138 = arith.addf %137, %30 : vector<2x64xf32>
    %139 = arith.negf %138 : vector<2x64xf32>
    %140 = math.exp %139 : vector<2x64xf32>
    %cst_24 = arith.constant 1.000000e+00 : f32
    %141 = vector.broadcast %cst_24 : f32 to vector<2x64xf32>
    %142 = arith.addf %141, %140 : vector<2x64xf32>
    %143 = arith.divf %141, %142 : vector<2x64xf32>
    %144 = math.tanh %138 : vector<2x64xf32>
    %145 = vector.extract_strided_slice %143 {offsets = [0, 0], sizes = [2, 16], strides = [1, 1]} : vector<2x64xf32> to vector<2x16xf32>
    %146 = vector.extract_strided_slice %143 {offsets = [0, 16], sizes = [2, 16], strides = [1, 1]} : vector<2x64xf32> to vector<2x16xf32>
    %147 = vector.extract_strided_slice %144 {offsets = [0, 32], sizes = [2, 16], strides = [1, 1]} : vector<2x64xf32> to vector<2x16xf32>
    %148 = vector.extract_strided_slice %143 {offsets = [0, 48], sizes = [2, 16], strides = [1, 1]} : vector<2x64xf32> to vector<2x16xf32>
    %149 = arith.mulf %146, %132 : vector<2x16xf32>
    %150 = arith.mulf %145, %147 : vector<2x16xf32>
    %151 = arith.addf %149, %150 : vector<2x16xf32>
    %152 = math.tanh %151 : vector<2x16xf32>
    %153 = arith.mulf %148, %152 : vector<2x16xf32>
    %cst_25 = arith.constant dense<0.000000e+00> : vector<2x68xf32>
    %154 = tpu.matmul %153, %2, %cst_25 {dimension_numbers = #tpu.dot_dimension_numbers<[1], [0], [0], [1], [0, 0, 1, 1], [], []>, precision = #tpu.contract_precision<fp32>} : vector<2x16xf32>, vector<16x68xf32>, vector<2x68xf32> -> vector<2x68xf32>
    %155 = vector.extract_strided_slice %154 {offsets = [0, 64], sizes = [2, 4], strides = [1, 1]} : vector<2x68xf32> to vector<2x4xf32>
    %156 = vector.extract_strided_slice %154 {offsets = [0, 0], sizes = [2, 64], strides = [1, 1]} : vector<2x68xf32> to vector<2x64xf32>
    %157 = arith.addf %156, %33 : vector<2x64xf32>
    %158 = arith.negf %157 : vector<2x64xf32>
    %159 = math.exp %158 : vector<2x64xf32>
    %cst_26 = arith.constant 1.000000e+00 : f32
    %160 = vector.broadcast %cst_26 : f32 to vector<2x64xf32>
    %161 = arith.addf %160, %159 : vector<2x64xf32>
    %162 = arith.divf %160, %161 : vector<2x64xf32>
    %163 = math.tanh %157 : vector<2x64xf32>
    %164 = vector.extract_strided_slice %162 {offsets = [0, 0], sizes = [2, 16], strides = [1, 1]} : vector<2x64xf32> to vector<2x16xf32>
    %165 = vector.extract_strided_slice %162 {offsets = [0, 16], sizes = [2, 16], strides = [1, 1]} : vector<2x64xf32> to vector<2x16xf32>
    %166 = vector.extract_strided_slice %163 {offsets = [0, 32], sizes = [2, 16], strides = [1, 1]} : vector<2x64xf32> to vector<2x16xf32>
    %167 = vector.extract_strided_slice %162 {offsets = [0, 48], sizes = [2, 16], strides = [1, 1]} : vector<2x64xf32> to vector<2x16xf32>
    %168 = arith.mulf %165, %151 : vector<2x16xf32>
    %169 = arith.mulf %164, %166 : vector<2x16xf32>
    %170 = arith.addf %168, %169 : vector<2x16xf32>
    %171 = math.tanh %170 : vector<2x16xf32>
    %172 = arith.mulf %167, %171 : vector<2x16xf32>
    %cst_27 = arith.constant dense<0.000000e+00> : vector<2x68xf32>
    %173 = tpu.matmul %172, %2, %cst_27 {dimension_numbers = #tpu.dot_dimension_numbers<[1], [0], [0], [1], [0, 0, 1, 1], [], []>, precision = #tpu.contract_precision<fp32>} : vector<2x16xf32>, vector<16x68xf32>, vector<2x68xf32> -> vector<2x68xf32>
    %174 = vector.extract_strided_slice %173 {offsets = [0, 64], sizes = [2, 4], strides = [1, 1]} : vector<2x68xf32> to vector<2x4xf32>
    %175 = vector.extract_strided_slice %173 {offsets = [0, 0], sizes = [2, 64], strides = [1, 1]} : vector<2x68xf32> to vector<2x64xf32>
    %176 = arith.addf %175, %36 : vector<2x64xf32>
    %177 = arith.negf %176 : vector<2x64xf32>
    %178 = math.exp %177 : vector<2x64xf32>
    %cst_28 = arith.constant 1.000000e+00 : f32
    %179 = vector.broadcast %cst_28 : f32 to vector<2x64xf32>
    %180 = arith.addf %179, %178 : vector<2x64xf32>
    %181 = arith.divf %179, %180 : vector<2x64xf32>
    %182 = math.tanh %176 : vector<2x64xf32>
    %183 = vector.extract_strided_slice %181 {offsets = [0, 0], sizes = [2, 16], strides = [1, 1]} : vector<2x64xf32> to vector<2x16xf32>
    %184 = vector.extract_strided_slice %181 {offsets = [0, 16], sizes = [2, 16], strides = [1, 1]} : vector<2x64xf32> to vector<2x16xf32>
    %185 = vector.extract_strided_slice %182 {offsets = [0, 32], sizes = [2, 16], strides = [1, 1]} : vector<2x64xf32> to vector<2x16xf32>
    %186 = vector.extract_strided_slice %181 {offsets = [0, 48], sizes = [2, 16], strides = [1, 1]} : vector<2x64xf32> to vector<2x16xf32>
    %187 = arith.mulf %184, %170 : vector<2x16xf32>
    %188 = arith.mulf %183, %185 : vector<2x16xf32>
    %189 = arith.addf %187, %188 : vector<2x16xf32>
    %190 = math.tanh %189 : vector<2x16xf32>
    %191 = arith.mulf %186, %190 : vector<2x16xf32>
    %cst_29 = arith.constant dense<0.000000e+00> : vector<2x68xf32>
    %192 = tpu.matmul %191, %2, %cst_29 {dimension_numbers = #tpu.dot_dimension_numbers<[1], [0], [0], [1], [0, 0, 1, 1], [], []>, precision = #tpu.contract_precision<fp32>} : vector<2x16xf32>, vector<16x68xf32>, vector<2x68xf32> -> vector<2x68xf32>
    %193 = vector.extract_strided_slice %192 {offsets = [0, 64], sizes = [2, 4], strides = [1, 1]} : vector<2x68xf32> to vector<2x4xf32>
    %194 = vector.extract_strided_slice %192 {offsets = [0, 0], sizes = [2, 64], strides = [1, 1]} : vector<2x68xf32> to vector<2x64xf32>
    %195 = arith.addf %194, %36 : vector<2x64xf32>
    %196 = arith.negf %195 : vector<2x64xf32>
    %197 = math.exp %196 : vector<2x64xf32>
    %cst_30 = arith.constant 1.000000e+00 : f32
    %198 = vector.broadcast %cst_30 : f32 to vector<2x64xf32>
    %199 = arith.addf %198, %197 : vector<2x64xf32>
    %200 = arith.divf %198, %199 : vector<2x64xf32>
    %201 = math.tanh %195 : vector<2x64xf32>
    %202 = vector.extract_strided_slice %200 {offsets = [0, 0], sizes = [2, 16], strides = [1, 1]} : vector<2x64xf32> to vector<2x16xf32>
    %203 = vector.extract_strided_slice %200 {offsets = [0, 16], sizes = [2, 16], strides = [1, 1]} : vector<2x64xf32> to vector<2x16xf32>
    %204 = vector.extract_strided_slice %201 {offsets = [0, 32], sizes = [2, 16], strides = [1, 1]} : vector<2x64xf32> to vector<2x16xf32>
    %205 = vector.extract_strided_slice %200 {offsets = [0, 48], sizes = [2, 16], strides = [1, 1]} : vector<2x64xf32> to vector<2x16xf32>
    %206 = arith.mulf %203, %189 : vector<2x16xf32>
    %207 = arith.mulf %202, %204 : vector<2x16xf32>
    %208 = arith.addf %206, %207 : vector<2x16xf32>
    %209 = math.tanh %208 : vector<2x16xf32>
    %210 = arith.mulf %205, %209 : vector<2x16xf32>
    %211 = vector.extract_strided_slice %210 {offsets = [0, 8], sizes = [2, 8], strides = [1, 1]} : vector<2x16xf32> to vector<2x8xf32>
    %212 = vector.extract_strided_slice %2 {offsets = [8, 64], sizes = [8, 4], strides = [1, 1]} : vector<16x68xf32> to vector<8x4xf32>
    %cst_31 = arith.constant dense<0.000000e+00> : vector<2x4xf32>
    %213 = tpu.matmul %211, %212, %cst_31 {dimension_numbers = #tpu.dot_dimension_numbers<[1], [0], [0], [1], [0, 0, 1, 1], [], []>, precision = #tpu.contract_precision<fp32>} : vector<2x8xf32>, vector<8x4xf32>, vector<2x4xf32> -> vector<2x4xf32>
    %214 = tpu.concatenate %79, %98, %117, %136, %155, %174, %193, %213 in 1 : vector<2x4xf32>, vector<2x4xf32>, vector<2x4xf32>, vector<2x4xf32>, vector<2x4xf32>, vector<2x4xf32>, vector<2x4xf32>, vector<2x4xf32> -> vector<2x32xf32>
    %c0_32 = arith.constant 0 : index
    %c0_33 = arith.constant 0 : index
    %215 = vector.load %arg4[%c0_32, %c0_33] : memref<1x32xf32, #tpu.memory_space<vmem>>, vector<1x32xf32>
    %216 = vector.broadcast %215 : vector<1x32xf32> to vector<2x32xf32>
    %217 = arith.addf %214, %216 : vector<2x32xf32>
    %c0_34 = arith.constant 0 : index
    %c0_35 = arith.constant 0 : index
    %218 = vector.load %arg5[%c0_34, %c0_35] : memref<2x32xf32, #tpu.memory_space<vmem>>, vector<2x32xf32>
    tpu.vector_store %arg5[%c0_34, %c0_35], %217 {strides = array<i32>} : memref<2x32xf32, #tpu.memory_space<vmem>>, vector<2x32xf32>,
    return
  }
}

</mosaic_0001>

<llo_original>
// kernel: decoder_forward.1
$region0: #{decoder_forward.1}
  #allocation0 [shape = 'u32[]', space=smem, size = 0x4, offset = 0x4, fixed_abs, tag = 'smem constant byte address 0x4 - core index']
  #allocation1 [shape = 'u32[144,128]{1,0:T(1,128)}', space=vmem, size = 0x12000, scoped, tag = 'internal scratch']
  %s0 = inlined_call_operand.hbm [shape: f32[2,8,32], index: 0, kind: input, shape index: {}]
  %s1 = inlined_call_operand.hbm [shape: f32[32,64], index: 1, kind: input, shape index: {}]
  %s2 = inlined_call_operand.vmem [shape: f32[1,64], index: 2, kind: input, shape index: {}]
  %s3 = inlined_call_operand.hbm [shape: f32[16,68], index: 3, kind: input, shape index: {}]
  %s4 = inlined_call_operand.hbm [shape: f32[1,32], index: 4, kind: input, shape index: {}]
  %s5 = inlined_call_operand.vmem [shape: f32[2,32], index: 5, kind: output, shape index: {}]
  %s6 = sld [smem:[#allocation0]]
  $region46: #{decoder_forward.1} parent=0
    _
  %s8 = ssub.s32 1, %s6
  %s9 = scalar_select 0, %s8, %s6
  $region1: #{decoder_forward.1} parent=0
    #allocation2 [shape = 'u8[8192]{0}', space=vmem, size = 0x2000, scoped, tag = 'input window, operand 0, single buffered']
    #allocation3 [shape = 's32[1]{0}', space=sflag, size = 0x4, scoped, tag = 'scoped memory for decoder_forward.1']
    #allocation4 [shape = 'u8[16384]{0}', space=vmem, size = 0x4000, scoped, tag = 'input window, operand 1, single buffered']
    #allocation5 [shape = 's32[1]{0}', space=sflag, size = 0x4, scoped, tag = 'scoped memory for decoder_forward.1']
    #allocation6 [shape = 'u8[8192]{0}', space=vmem, size = 0x2000, scoped, tag = 'input window, operand 3, single buffered']
    #allocation7 [shape = 'u8[512]{0}', space=vmem, size = 0x400, scoped, tag = 'input window, operand 4, single buffered']
    #allocation8 [shape = 's32[1]{0}', space=sflag, size = 0x4, scoped, tag = 'scoped memory for decoder_forward.1']
    %10 = vsyncpa [#allocation3], 0
    %11 = vsyncpa [#allocation5], 0
    %12 = vsyncpa [#allocation8], 0
    // Predicated region
    $region2: #{decoder_forward.1} parent=1 // pred_check
      _
    $region3: #{decoder_forward.1} parent=1 // pred_check_branch
      %14 = sbr.rel (0) target = $region5
    $region4: #{decoder_forward.1} parent=1 // pred_region
      %s16 = ssub.s32 256, 256
      %17 = vsyncadd [#allocation3], %s16
      %s18 = sshll.u32 [#allocation2], 4
      %s19 = int_to_ptr.vmem [resolvable:$true] %s18
      %24 = dma.hbm_to_vmem [thread:$0]  %s0, 256, %s19, [#allocation3], 128, 128, 8
    $region5: #{decoder_forward.1} parent=1 // pred_fallthru
      _
    // Predicated region
    $region6: #{decoder_forward.1} parent=1 // pred_check
      _
    $region7: #{decoder_forward.1} parent=1 // pred_check_branch
      %26 = sbr.rel (0) target = $region9
    $region8: #{decoder_forward.1} parent=1 // pred_region
      %s28 = ssub.s32 512, 512
      %29 = vsyncadd [#allocation5], %s28
      %s30 = sshll.u32 [#allocation4], 4
      %s31 = int_to_ptr.vmem [resolvable:$true] %s30
      %36 = dma.hbm_to_vmem [thread:$0]  %s1, 512, %s31, [#allocation5], 128, 128, 8
    $region9: #{decoder_forward.1} parent=1 // pred_fallthru
      _
    // Predicated region
    $region10: #{decoder_forward.1} parent=1 // pred_check
      _
    $region11: #{decoder_forward.1} parent=1 // pred_check_branch
      %38 = sbr.rel (0) target = $region13
    $region12: #{decoder_forward.1} parent=1 // pred_region
      _
    $region13: #{decoder_forward.1} parent=1 // pred_fallthru
      _
    // Predicated region
    $region14: #{decoder_forward.1} parent=1 // pred_check
      _
    $region15: #{decoder_forward.1} parent=1 // pred_check_branch
      %40 = sbr.rel (0) target = $region17
    $region16: #{decoder_forward.1} parent=1 // pred_region
      %s42 = ssub.s32 256, 256
      %43 = vsyncadd [#allocation5], %s42
      %s44 = sshll.u32 [#allocation6], 4
      %s45 = int_to_ptr.vmem [resolvable:$true] %s44
      %50 = dma.hbm_to_vmem [thread:$0]  %s3, 256, %s45, [#allocation5], 128, 128, 8
    $region17: #{decoder_forward.1} parent=1 // pred_fallthru
      _
    // Predicated region
    $region18: #{decoder_forward.1} parent=1 // pred_check
      _
    $region19: #{decoder_forward.1} parent=1 // pred_check_branch
      %52 = sbr.rel (0) target = $region21
    $region20: #{decoder_forward.1} parent=1 // pred_region
      %s54 = ssub.s32 16, 16
      %55 = vsyncadd [#allocation8], %s54
      %s57 = sshll.u32 [#allocation7], 4
      %s58 = int_to_ptr.vmem [resolvable:$true] %s57
      %60 = dma.hbm_to_vmem [thread:$0]  %s4, 16, %s58, [#allocation8]
    $region21: #{decoder_forward.1} parent=1 // pred_fallthru
      _
    // Predicated region
    $region22: #{decoder_forward.1} parent=1 // pred_check
      _
    $region23: #{decoder_forward.1} parent=1 // pred_check_branch
      %62 = sbr.rel (0) target = $region25
    $region24: #{decoder_forward.1} parent=1 // pred_region
      %63 = dma.done [#allocation3], 256
    $region25: #{decoder_forward.1} parent=1 // pred_fallthru
      _
    // Predicated region
    $region26: #{decoder_forward.1} parent=1 // pred_check
      _
    $region27: #{decoder_forward.1} parent=1 // pred_check_branch
      %65 = sbr.rel (0) target = $region29
    $region28: #{decoder_forward.1} parent=1 // pred_region
      %66 = dma.done [#allocation5], 512
    $region29: #{decoder_forward.1} parent=1 // pred_fallthru
      _
    // Predicated region
    $region30: #{decoder_forward.1} parent=1 // pred_check
      _
    $region31: #{decoder_forward.1} parent=1 // pred_check_branch
      %68 = sbr.rel (0) target = $region33
    $region32: #{decoder_forward.1} parent=1 // pred_region
      %69 = dma.done [#allocation5], 256
    $region33: #{decoder_forward.1} parent=1 // pred_fallthru
      _
    // Predicated region
    $region34: #{decoder_forward.1} parent=1 // pred_check
      _
    $region35: #{decoder_forward.1} parent=1 // pred_check_branch
      %71 = sbr.rel (0) target = $region37
    $region36: #{decoder_forward.1} parent=1 // pred_region
      %72 = dma.done [#allocation8], 16
    $region37: #{decoder_forward.1} parent=1 // pred_fallthru
      _
    %v73 = vld [vmem:[#allocation4] sm:$0xff]
    %v74 = vld [vmem:[#allocation4 + $0x8] sm:$0xff]
    %v75 = vld [vmem:[#allocation4 + $0x10] sm:$0xff]
    %v76 = vld [vmem:[#allocation4 + $0x18] sm:$0xff]
    %v77 = vld [vmem:[%s2] sm:$0x1]
    %v78 = vld [vmem:[#allocation6] sm:$0xff]
    %v79 = vld [vmem:[#allocation6 + $0x8] sm:$0xff]
    %v80 = vld [vmem:[#allocation2] sm:$0xff]
    %v82 = vlaneseq
    %v83 = vshrl.u32 %v82, 7
    %v84 = vsub.s32 0, %v83
    %v85 = vrot.slane %v77, %v84
    %vm87 = vcmask 261120
    %v89 = vsel %vm87, %v80, 0
    %91 = vmatprep.subr.mxu0 0.0
    %92 = vmatpush1.msra.mxu0 0.0
    %93 = vmatprep.subr.mxu0 0.0
    %94 = vmatpush1.msra.mxu0 0.0
    %95 = vmatprep.subr.mxu0 0.0
    %96 = vmatpush1.msra.mxu0 0.0
    %97 = vmatprep.subr.mxu0 0.0
    %98 = vmatpush1.msra.mxu0 0.0
    %99 = vmatprep.subr.mxu0 0.0
    %100 = vmatpush1.msra.mxu0 0.0
    %101 = vmatprep.subr.mxu0 0.0
    %102 = vmatpush1.msra.mxu0 0.0
    %103 = vmatprep.subr.mxu0 0.0
    %104 = vmatpush1.msra.mxu0 0.0
    %105 = vmatprep.subr.mxu0 0.0
    %106 = vmatpush1.msra.mxu0 0.0
    %107 = vmatprep.subr.mxu0 0.0
    %108 = vmatpush1.msra.mxu0 0.0
    %109 = vmatprep.subr.mxu0 0.0
    %110 = vmatpush1.msra.mxu0 0.0
    %111 = vmatprep.subr.mxu0 0.0
    %112 = vmatpush1.msra.mxu0 0.0
    %113 = vmatprep.subr.mxu0 0.0
    %114 = vmatpush1.msra.mxu0 0.0
    %115 = vmatprep.subr.mxu0 0.0
    %v116 = vand.u32 %v76, 4294901760
    %117 = vmatpush1.msra.mxu0 %v116
    %118 = vmatprep.subr.mxu0 0.0
    %v119 = vand.u32 %v75, 4294901760
    %120 = vmatpush1.msra.mxu0 %v119
    %121 = vmatprep.subr.mxu0 0.0
    %v122 = vand.u32 %v74, 4294901760
    %123 = vmatpush1.msra.mxu0 %v122
    %124 = vmatprep.subr.mxu0 0.0
    %v125 = vand.u32 %v73, 4294901760
    %126 = vmatpush1.msra.mxu0 %v125
    %127 = vmatprep.subr.mxu0 0.0
    %128 = vmatpush2.msra.mxu0 0.0
    %129 = vmatprep.subr.mxu0 0.0
    %130 = vmatpush2.msra.mxu0 0.0
    %131 = vmatprep.subr.mxu0 0.0
    %132 = vmatpush2.msra.mxu0 0.0
    %133 = vmatprep.subr.mxu0 0.0
    %134 = vmatpush2.msra.mxu0 0.0
    %135 = vmatprep.subr.mxu0 0.0
    %136 = vmatpush2.msra.mxu0 0.0
    %137 = vmatprep.subr.mxu0 0.0
    %138 = vmatpush2.msra.mxu0 0.0
    %139 = vmatprep.subr.mxu0 0.0
    %140 = vmatpush2.msra.mxu0 0.0
    %141 = vmatprep.subr.mxu0 0.0
    %142 = vmatpush2.msra.mxu0 0.0
    %143 = vmatprep.subr.mxu0 0.0
    %144 = vmatpush2.msra.mxu0 0.0
    %145 = vmatprep.subr.mxu0 0.0
    %146 = vmatpush2.msra.mxu0 0.0
    %147 = vmatprep.subr.mxu0 0.0
    %148 = vmatpush2.msra.mxu0 0.0
    %149 = vmatprep.subr.mxu0 0.0
    %150 = vmatpush2.msra.mxu0 0.0
    %151 = vmatprep.subr.mxu0 0.0
    %152 = vmatpush2.msra.mxu0 0.0
    %153 = vmatprep.subr.mxu0 0.0
    %154 = vmatpush2.msra.mxu0 0.0
    %155 = vmatprep.subr.mxu0 0.0
    %156 = vmatpush2.msra.mxu0 0.0
    %157 = vmatprep.subr.mxu0 0.0
    %158 = vmatpush2.msra.mxu0 0.0
    %159 = vmatprep.mubr.f32.mxu0 0.0
    %v160 = vand.u32 %v89, 4294901760
    %v161 = vsub.f32 %v89, %v160
    %v162 = vand.u32 %v161, 4294901760
    %v163 = vsub.f32 %v161, %v162
    %v164 = vand.u32 %v163, 4294901760
    %165 = vmatmul.mubr.f32.gmra.mxu0 %v164
    %v166 = vpop.f32.mrf.mxu0
    %v167 = vadd.f32 %v85, %v166
    %v168 = vpop.f32.mrf.mxu0
    %169 = vdwg.mxu0
    %170 = vmatprep.subr.mxu0 0.0
    %171 = vmatpush1.msra.mxu0 0.0
    %172 = vmatprep.subr.mxu0 0.0
    %173 = vmatpush1.msra.mxu0 0.0
    %174 = vmatprep.subr.mxu0 0.0
    %175 = vmatpush1.msra.mxu0 0.0
    %176 = vmatprep.subr.mxu0 0.0
    %177 = vmatpush1.msra.mxu0 0.0
    %178 = vmatprep.subr.mxu0 0.0
    %179 = vmatpush1.msra.mxu0 0.0
    %180 = vmatprep.subr.mxu0 0.0
    %181 = vmatpush1.msra.mxu0 0.0
    %182 = vmatprep.subr.mxu0 0.0
    %183 = vmatpush1.msra.mxu0 0.0
    %184 = vmatprep.subr.mxu0 0.0
    %185 = vmatpush1.msra.mxu0 0.0
    %186 = vmatprep.subr.mxu0 0.0
    %187 = vmatpush1.msra.mxu0 0.0
    %188 = vmatprep.subr.mxu0 0.0
    %189 = vmatpush1.msra.mxu0 0.0
    %190 = vmatprep.subr.mxu0 0.0
    %191 = vmatpush1.msra.mxu0 0.0
    %192 = vmatprep.subr.mxu0 0.0
    %193 = vmatpush1.msra.mxu0 0.0
    %194 = vmatprep.subr.mxu0 0.0
    %v195 = vand.u32 %v76, 4294901760
    %v196 = vsub.f32 %v76, %v195
    %v197 = vand.u32 %v196, 4294901760
    %v198 = vsub.f32 %v196, %v197
    %v199 = vand.u32 %v198, 4294901760
    %200 = vmatpush1.msra.mxu0 %v199
    %201 = vmatprep.subr.mxu0 0.0
    %v202 = vand.u32 %v75, 4294901760
    %v203 = vsub.f32 %v75, %v202
    %v204 = vand.u32 %v203, 4294901760
    %v205 = vsub.f32 %v203, %v204
    %v206 = vand.u32 %v205, 4294901760
    %207 = vmatpush1.msra.mxu0 %v206
    %208 = vmatprep.subr.mxu0 0.0
    %v209 = vand.u32 %v74, 4294901760
    %v210 = vsub.f32 %v74, %v209
    %v211 = vand.u32 %v210, 4294901760
    %v212 = vsub.f32 %v210, %v211
    %v213 = vand.u32 %v212, 4294901760
    %214 = vmatpush1.msra.mxu0 %v213
    %215 = vmatprep.subr.mxu0 0.0
    %v216 = vand.u32 %v73, 4294901760
    %v217 = vsub.f32 %v73, %v216
    %v218 = vand.u32 %v217, 4294901760
    %v219 = vsub.f32 %v217, %v218
    %v220 = vand.u32 %v219, 4294901760
    %221 = vmatpush1.msra.mxu0 %v220
    %222 = vmatprep.subr.mxu0 0.0
    %223 = vmatpush2.msra.mxu0 0.0
    %224 = vmatprep.subr.mxu0 0.0
    %225 = vmatpush2.msra.mxu0 0.0
    %226 = vmatprep.subr.mxu0 0.0
    %227 = vmatpush2.msra.mxu0 0.0
    %228 = vmatprep.subr.mxu0 0.0
    %229 = vmatpush2.msra.mxu0 0.0
    %230 = vmatprep.subr.mxu0 0.0
    %231 = vmatpush2.msra.mxu0 0.0
    %232 = vmatprep.subr.mxu0 0.0
    %233 = vmatpush2.msra.mxu0 0.0
    %234 = vmatprep.subr.mxu0 0.0
    %235 = vmatpush2.msra.mxu0 0.0
    %236 = vmatprep.subr.mxu0 0.0
    %237 = vmatpush2.msra.mxu0 0.0
    %238 = vmatprep.subr.mxu0 0.0
    %239 = vmatpush2.msra.mxu0 0.0
    %240 = vmatprep.subr.mxu0 0.0
    %241 = vmatpush2.msra.mxu0 0.0
    %242 = vmatprep.subr.mxu0 0.0
    %243 = vmatpush2.msra.mxu0 0.0
    %244 = vmatprep.subr.mxu0 0.0
    %245 = vmatpush2.msra.mxu0 0.0
    %246 = vmatprep.subr.mxu0 0.0
    %247 = vmatpush2.msra.mxu0 0.0
    %248 = vmatprep.subr.mxu0 0.0
    %249 = vmatpush2.msra.mxu0 0.0
    %250 = vmatprep.subr.mxu0 0.0
    %251 = vmatpush2.msra.mxu0 0.0
    %252 = vmatprep.subr.mxu0 0.0
    %253 = vmatpush2.msra.mxu0 0.0
    %254 = vmatprep.mubr.f32.mxu0 0.0
    %v255 = vand.u32 %v89, 4294901760
    %256 = vmatmul.mubr.f32.gmra.mxu0 %v255
    %v257 = vpop.f32.mrf.mxu0
    %v258 = vadd.f32 %v167, %v257
    %v259 = vpop.f32.mrf.mxu0
    %260 = vdwg.mxu0
    %261 = vmatprep.subr.mxu0 0.0
    %262 = vmatpush1.msra.mxu0 0.0
    %263 = vmatprep.subr.mxu0 0.0
    %264 = vmatpush1.msra.mxu0 0.0
    %265 = vmatprep.subr.mxu0 0.0
    %266 = vmatpush1.msra.mxu0 0.0
    %267 = vmatprep.subr.mxu0 0.0
    %268 = vmatpush1.msra.mxu0 0.0
    %269 = vmatprep.subr.mxu0 0.0
    %270 = vmatpush1.msra.mxu0 0.0
    %271 = vmatprep.subr.mxu0 0.0
    %272 = vmatpush1.msra.mxu0 0.0
    %273 = vmatprep.subr.mxu0 0.0
    %274 = vmatpush1.msra.mxu0 0.0
    %275 = vmatprep.subr.mxu0 0.0
    %276 = vmatpush1.msra.mxu0 0.0
    %277 = vmatprep.subr.mxu0 0.0
    %278 = vmatpush1.msra.mxu0 0.0
    %279 = vmatprep.subr.mxu0 0.0
    %280 = vmatpush1.msra.mxu0 0.0
    %281 = vmatprep.subr.mxu0 0.0
    %282 = vmatpush1.msra.mxu0 0.0
    %283 = vmatprep.subr.mxu0 0.0
    %284 = vmatpush1.msra.mxu0 0.0
    %285 = vmatprep.subr.mxu0 0.0
    %v286 = vand.u32 %v76, 4294901760
    %v287 = vsub.f32 %v76, %v286
    %288 = vmatpush1.msra.mxu0 %v287
    %289 = vmatprep.subr.mxu0 0.0
    %v290 = vand.u32 %v75, 4294901760
    %v291 = vsub.f32 %v75, %v290
    %292 = vmatpush1.msra.mxu0 %v291
    %293 = vmatprep.subr.mxu0 0.0
    %v294 = vand.u32 %v74, 4294901760
    %v295 = vsub.f32 %v74, %v294
    %296 = vmatpush1.msra.mxu0 %v295
    %297 = vmatprep.subr.mxu0 0.0
    %v298 = vand.u32 %v73, 4294901760
    %v299 = vsub.f32 %v73, %v298
    %300 = vmatpush1.msra.mxu0 %v299
    %301 = vmatprep.subr.mxu0 0.0
    %302 = vmatpush2.msra.mxu0 0.0
    %303 = vmatprep.subr.mxu0 0.0
    %304 = vmatpush2.msra.mxu0 0.0
    %305 = vmatprep.subr.mxu0 0.0
    %306 = vmatpush2.msra.mxu0 0.0
    %307 = vmatprep.subr.mxu0 0.0
    %308 = vmatpush2.msra.mxu0 0.0
    %309 = vmatprep.subr.mxu0 0.0
    %310 = vmatpush2.msra.mxu0 0.0
    %311 = vmatprep.subr.mxu0 0.0
    %312 = vmatpush2.msra.mxu0 0.0
    %313 = vmatprep.subr.mxu0 0.0
    %314 = vmatpush2.msra.mxu0 0.0
    %315 = vmatprep.subr.mxu0 0.0
    %316 = vmatpush2.msra.mxu0 0.0
    %317 = vmatprep.subr.mxu0 0.0
    %318 = vmatpush2.msra.mxu0 0.0
    %319 = vmatprep.subr.mxu0 0.0
    %320 = vmatpush2.msra.mxu0 0.0
    %321 = vmatprep.subr.mxu0 0.0
    %322 = vmatpush2.msra.mxu0 0.0
    %323 = vmatprep.subr.mxu0 0.0
    %324 = vmatpush2.msra.mxu0 0.0
    %325 = vmatprep.subr.mxu0 0.0
    %326 = vmatpush2.msra.mxu0 0.0
    %327 = vmatprep.subr.mxu0 0.0
    %328 = vmatpush2.msra.mxu0 0.0
    %329 = vmatprep.subr.mxu0 0.0
    %330 = vmatpush2.msra.mxu0 0.0
    %331 = vmatprep.subr.mxu0 0.0
    %332 = vmatpush2.msra.mxu0 0.0
    %333 = vmatprep.mubr.f32.mxu0 0.0
    %v334 = vand.u32 %v89, 4294901760
    %v335 = vsub.f32 %v89, %v334
    %336 = vmatmul.mubr.f32.gmra.mxu0 %v335
    %v337 = vpop.f32.mrf.mxu0
    %v338 = vadd.f32 %v258, %v337
    %v339 = vpop.f32.mrf.mxu0
    %340 = vdwg.mxu0
    %341 = vmatprep.subr.mxu0 0.0
    %342 = vmatpush1.msra.mxu0 0.0
    %343 = vmatprep.subr.mxu0 0.0
    %344 = vmatpush1.msra.mxu0 0.0
    %345 = vmatprep.subr.mxu0 0.0
    %346 = vmatpush1.msra.mxu0 0.0
    %347 = vmatprep.subr.mxu0 0.0
    %348 = vmatpush1.msra.mxu0 0.0
    %349 = vmatprep.subr.mxu0 0.0
    %350 = vmatpush1.msra.mxu0 0.0
    %351 = vmatprep.subr.mxu0 0.0
    %352 = vmatpush1.msra.mxu0 0.0
    %353 = vmatprep.subr.mxu0 0.0
    %354 = vmatpush1.msra.mxu0 0.0
    %355 = vmatprep.subr.mxu0 0.0
    %356 = vmatpush1.msra.mxu0 0.0
    %357 = vmatprep.subr.mxu0 0.0
    %358 = vmatpush1.msra.mxu0 0.0
    %359 = vmatprep.subr.mxu0 0.0
    %360 = vmatpush1.msra.mxu0 0.0
    %361 = vmatprep.subr.mxu0 0.0
    %362 = vmatpush1.msra.mxu0 0.0
    %363 = vmatprep.subr.mxu0 0.0
    %364 = vmatpush1.msra.mxu0 0.0
    %365 = vmatprep.subr.mxu0 0.0
    %v366 = vand.u32 %v76, 4294901760
    %367 = vmatpush1.msra.mxu0 %v366
    %368 = vmatprep.subr.mxu0 0.0
    %v369 = vand.u32 %v75, 4294901760
    %370 = vmatpush1.msra.mxu0 %v369
    %371 = vmatprep.subr.mxu0 0.0
    %v372 = vand.u32 %v74, 4294901760
    %373 = vmatpush1.msra.mxu0 %v372
    %374 = vmatprep.subr.mxu0 0.0
    %v375 = vand.u32 %v73, 4294901760
    %376 = vmatpush1.msra.mxu0 %v375
    %377 = vmatprep.subr.mxu0 0.0
    %378 = vmatpush2.msra.mxu0 0.0
    %379 = vmatprep.subr.mxu0 0.0
    %380 = vmatpush2.msra.mxu0 0.0
    %381 = vmatprep.subr.mxu0 0.0
    %382 = vmatpush2.msra.mxu0 0.0
    %383 = vmatprep.subr.mxu0 0.0
    %384 = vmatpush2.msra.mxu0 0.0
    %385 = vmatprep.subr.mxu0 0.0
    %386 = vmatpush2.msra.mxu0 0.0
    %387 = vmatprep.subr.mxu0 0.0
    %388 = vmatpush2.msra.mxu0 0.0
    %389 = vmatprep.subr.mxu0 0.0
    %390 = vmatpush2.msra.mxu0 0.0
    %391 = vmatprep.subr.mxu0 0.0
    %392 = vmatpush2.msra.mxu0 0.0
    %393 = vmatprep.subr.mxu0 0.0
    %394 = vmatpush2.msra.mxu0 0.0
    %395 = vmatprep.subr.mxu0 0.0
    %396 = vmatpush2.msra.mxu0 0.0
    %397 = vmatprep.subr.mxu0 0.0
    %398 = vmatpush2.msra.mxu0 0.0
    %399 = vmatprep.subr.mxu0 0.0
    %400 = vmatpush2.msra.mxu0 0.0
    %401 = vmatprep.subr.mxu0 0.0
    %402 = vmatpush2.msra.mxu0 0.0
    %403 = vmatprep.subr.mxu0 0.0
    %404 = vmatpush2.msra.mxu0 0.0
    %405 = vmatprep.subr.mxu0 0.0
    %406 = vmatpush2.msra.mxu0 0.0
    %407 = vmatprep.subr.mxu0 0.0
    %408 = vmatpush2.msra.mxu0 0.0
    %409 = vmatprep.mubr.f32.mxu0 0.0
    %v410 = vand.u32 %v89, 4294901760
    %v411 = vsub.f32 %v89, %v410
    %v412 = vand.u32 %v411, 4294901760
    %413 = vmatmul.mubr.f32.gmra.mxu0 %v412
    %v414 = vpop.f32.mrf.mxu0
    %v415 = vadd.f32 %v338, %v414
    %v416 = vpop.f32.mrf.mxu0
    %417 = vdwg.mxu0
    %418 = vmatprep.subr.mxu0 0.0
    %419 = vmatpush1.msra.mxu0 0.0
    %420 = vmatprep.subr.mxu0 0.0
    %421 = vmatpush1.msra.mxu0 0.0
    %422 = vmatprep.subr.mxu0 0.0
    %423 = vmatpush1.msra.mxu0 0.0
    %424 = vmatprep.subr.mxu0 0.0
    %425 = vmatpush1.msra.mxu0 0.0
    %426 = vmatprep.subr.mxu0 0.0
    %427 = vmatpush1.msra.mxu0 0.0
    %428 = vmatprep.subr.mxu0 0.0
    %429 = vmatpush1.msra.mxu0 0.0
    %430 = vmatprep.subr.mxu0 0.0
    %431 = vmatpush1.msra.mxu0 0.0
    %432 = vmatprep.subr.mxu0 0.0
    %433 = vmatpush1.msra.mxu0 0.0
    %434 = vmatprep.subr.mxu0 0.0
    %435 = vmatpush1.msra.mxu0 0.0
    %436 = vmatprep.subr.mxu0 0.0
    %437 = vmatpush1.msra.mxu0 0.0
    %438 = vmatprep.subr.mxu0 0.0
    %439 = vmatpush1.msra.mxu0 0.0
    %440 = vmatprep.subr.mxu0 0.0
    %441 = vmatpush1.msra.mxu0 0.0
    %442 = vmatprep.subr.mxu0 0.0
    %v443 = vand.u32 %v76, 4294901760
    %v444 = vsub.f32 %v76, %v443
    %v445 = vand.u32 %v444, 4294901760
    %446 = vmatpush1.msra.mxu0 %v445
    %447 = vmatprep.subr.mxu0 0.0
    %v448 = vand.u32 %v75, 4294901760
    %v449 = vsub.f32 %v75, %v448
    %v450 = vand.u32 %v449, 4294901760
    %451 = vmatpush1.msra.mxu0 %v450
    %452 = vmatprep.subr.mxu0 0.0
    %v453 = vand.u32 %v74, 4294901760
    %v454 = vsub.f32 %v74, %v453
    %v455 = vand.u32 %v454, 4294901760
    %456 = vmatpush1.msra.mxu0 %v455
    %457 = vmatprep.subr.mxu0 0.0
    %v458 = vand.u32 %v73, 4294901760
    %v459 = vsub.f32 %v73, %v458
    %v460 = vand.u32 %v459, 4294901760
    %461 = vmatpush1.msra.mxu0 %v460
    %462 = vmatprep.subr.mxu0 0.0
    %463 = vmatpush2.msra.mxu0 0.0
    %464 = vmatprep.subr.mxu0 0.0
    %465 = vmatpush2.msra.mxu0 0.0
    %466 = vmatprep.subr.mxu0 0.0
    %467 = vmatpush2.msra.mxu0 0.0
    %468 = vmatprep.subr.mxu0 0.0
    %469 = vmatpush2.msra.mxu0 0.0
    %470 = vmatprep.subr.mxu0 0.0
    %471 = vmatpush2.msra.mxu0 0.0
    %472 = vmatprep.subr.mxu0 0.0
    %473 = vmatpush2.msra.mxu0 0.0
    %474 = vmatprep.subr.mxu0 0.0
    %475 = vmatpush2.msra.mxu0 0.0
    %476 = vmatprep.subr.mxu0 0.0
    %477 = vmatpush2.msra.mxu0 0.0
    %478 = vmatprep.subr.mxu0 0.0
    %479 = vmatpush2.msra.mxu0 0.0
    %480 = vmatprep.subr.mxu0 0.0
    %481 = vmatpush2.msra.mxu0 0.0
    %482 = vmatprep.subr.mxu0 0.0
    %483 = vmatpush2.msra.mxu0 0.0
    %484 = vmatprep.subr.mxu0 0.0
    %485 = vmatpush2.msra.mxu0 0.0
    %486 = vmatprep.subr.mxu0 0.0
    %487 = vmatpush2.msra.mxu0 0.0
    %488 = vmatprep.subr.mxu0 0.0
    %489 = vmatpush2.msra.mxu0 0.0
    %490 = vmatprep.subr.mxu0 0.0
    %491 = vmatpush2.msra.mxu0 0.0
    %492 = vmatprep.subr.mxu0 0.0
    %493 = vmatpush2.msra.mxu0 0.0
    %494 = vmatprep.mubr.f32.mxu0 0.0
    %v495 = vand.u32 %v89, 4294901760
    %496 = vmatmul.mubr.f32.gmra.mxu0 %v495
    %v497 = vpop.f32.mrf.mxu0
    %v498 = vadd.f32 %v415, %v497
    %v499 = vpop.f32.mrf.mxu0
    %500 = vdwg.mxu0
    %501 = vmatprep.subr.mxu0 0.0
    %502 = vmatpush1.msra.mxu0 0.0
    %503 = vmatprep.subr.mxu0 0.0
    %504 = vmatpush1.msra.mxu0 0.0
    %505 = vmatprep.subr.mxu0 0.0
    %506 = vmatpush1.msra.mxu0 0.0
    %507 = vmatprep.subr.mxu0 0.0
    %508 = vmatpush1.msra.mxu0 0.0
    %509 = vmatprep.subr.mxu0 0.0
    %510 = vmatpush1.msra.mxu0 0.0
    %511 = vmatprep.subr.mxu0 0.0
    %512 = vmatpush1.msra.mxu0 0.0
    %513 = vmatprep.subr.mxu0 0.0
    %514 = vmatpush1.msra.mxu0 0.0
    %515 = vmatprep.subr.mxu0 0.0
    %516 = vmatpush1.msra.mxu0 0.0
    %517 = vmatprep.subr.mxu0 0.0
    %518 = vmatpush1.msra.mxu0 0.0
    %519 = vmatprep.subr.mxu0 0.0
    %520 = vmatpush1.msra.mxu0 0.0
    %521 = vmatprep.subr.mxu0 0.0
    %522 = vmatpush1.msra.mxu0 0.0
    %523 = vmatprep.subr.mxu0 0.0
    %524 = vmatpush1.msra.mxu0 0.0
    %525 = vmatprep.subr.mxu0 0.0
    %v526 = vand.u32 %v76, 4294901760
    %527 = vmatpush1.msra.mxu0 %v526
    %528 = vmatprep.subr.mxu0 0.0
    %v529 = vand.u32 %v75, 4294901760
    %530 = vmatpush1.msra.mxu0 %v529
    %531 = vmatprep.subr.mxu0 0.0
    %v532 = vand.u32 %v74, 4294901760
    %533 = vmatpush1.msra.mxu0 %v532
    %534 = vmatprep.subr.mxu0 0.0
    %v535 = vand.u32 %v73, 4294901760
    %536 = vmatpush1.msra.mxu0 %v535
    %537 = vmatprep.subr.mxu0 0.0
    %538 = vmatpush2.msra.mxu0 0.0
    %539 = vmatprep.subr.mxu0 0.0
    %540 = vmatpush2.msra.mxu0 0.0
    %541 = vmatprep.subr.mxu0 0.0
    %542 = vmatpush2.msra.mxu0 0.0
    %543 = vmatprep.subr.mxu0 0.0
    %544 = vmatpush2.msra.mxu0 0.0
    %545 = vmatprep.subr.mxu0 0.0
    %546 = vmatpush2.msra.mxu0 0.0
    %547 = vmatprep.subr.mxu0 0.0
    %548 = vmatpush2.msra.mxu0 0.0
    %549 = vmatprep.subr.mxu0 0.0
    %550 = vmatpush2.msra.mxu0 0.0
    %551 = vmatprep.subr.mxu0 0.0
    %552 = vmatpush2.msra.mxu0 0.0
    %553 = vmatprep.subr.mxu0 0.0
    %554 = vmatpush2.msra.mxu0 0.0
    %555 = vmatprep.subr.mxu0 0.0
    %556 = vmatpush2.msra.mxu0 0.0
    %557 = vmatprep.subr.mxu0 0.0
    %558 = vmatpush2.msra.mxu0 0.0
    %559 = vmatprep.subr.mxu0 0.0
    %560 = vmatpush2.msra.mxu0 0.0
    %561 = vmatprep.subr.mxu0 0.0
    %562 = vmatpush2.msra.mxu0 0.0
    %563 = vmatprep.subr.mxu0 0.0
    %564 = vmatpush2.msra.mxu0 0.0
    %565 = vmatprep.subr.mxu0 0.0
    %566 = vmatpush2.msra.mxu0 0.0
    %567 = vmatprep.subr.mxu0 0.0
    %568 = vmatpush2.msra.mxu0 0.0
    %569 = vmatprep.mubr.f32.mxu0 0.0
    %v570 = vand.u32 %v89, 4294901760
    %571 = vmatmul.mubr.f32.gmra.mxu0 %v570
    %v572 = vpop.f32.mrf.mxu0
    %v573 = vadd.f32 %v498, %v572
    %v574 = vpop.f32.mrf.mxu0
    %575 = vdwg.mxu0
    %s576 = scalar_lea.vmem [#allocation2], 8
    %v577 = vld [vmem:[%s576] sm:$0xff]
    %v579 = vsel %vm87, %v577, 0
    %581 = vmatprep.subr.mxu0 0.0
    %582 = vmatpush1.msra.mxu0 0.0
    %583 = vmatprep.subr.mxu0 0.0
    %584 = vmatpush1.msra.mxu0 0.0
    %585 = vmatprep.subr.mxu0 0.0
    %586 = vmatpush1.msra.mxu0 0.0
    %587 = vmatprep.subr.mxu0 0.0
    %588 = vmatpush1.msra.mxu0 0.0
    %589 = vmatprep.subr.mxu0 0.0
    %590 = vmatpush1.msra.mxu0 0.0
    %591 = vmatprep.subr.mxu0 0.0
    %592 = vmatpush1.msra.mxu0 0.0
    %593 = vmatprep.subr.mxu0 0.0
    %594 = vmatpush1.msra.mxu0 0.0
    %595 = vmatprep.subr.mxu0 0.0
    %596 = vmatpush1.msra.mxu0 0.0
    %597 = vmatprep.subr.mxu0 0.0
    %598 = vmatpush1.msra.mxu0 0.0
    %599 = vmatprep.subr.mxu0 0.0
    %600 = vmatpush1.msra.mxu0 0.0
    %601 = vmatprep.subr.mxu0 0.0
    %602 = vmatpush1.msra.mxu0 0.0
    %603 = vmatprep.subr.mxu0 0.0
    %604 = vmatpush1.msra.mxu0 0.0
    %605 = vmatprep.subr.mxu0 0.0
    %v606 = vand.u32 %v76, 4294901760
    %607 = vmatpush1.msra.mxu0 %v606
    %608 = vmatprep.subr.mxu0 0.0
    %v609 = vand.u32 %v75, 4294901760
    %610 = vmatpush1.msra.mxu0 %v609
    %611 = vmatprep.subr.mxu0 0.0
    %v612 = vand.u32 %v74, 4294901760
    %613 = vmatpush1.msra.mxu0 %v612
    %614 = vmatprep.subr.mxu0 0.0
    %v615 = vand.u32 %v73, 4294901760
    %616 = vmatpush1.msra.mxu0 %v615
    %617 = vmatprep.subr.mxu0 0.0
    %618 = vmatpush2.msra.mxu0 0.0
    %619 = vmatprep.subr.mxu0 0.0
    %620 = vmatpush2.msra.mxu0 0.0
    %621 = vmatprep.subr.mxu0 0.0
    %622 = vmatpush2.msra.mxu0 0.0
    %623 = vmatprep.subr.mxu0 0.0
    %624 = vmatpush2.msra.mxu0 0.0
    %625 = vmatprep.subr.mxu0 0.0
    %626 = vmatpush2.msra.mxu0 0.0
    %627 = vmatprep.subr.mxu0 0.0
    %628 = vmatpush2.msra.mxu0 0.0
    %629 = vmatprep.subr.mxu0 0.0
    %630 = vmatpush2.msra.mxu0 0.0
    %631 = vmatprep.subr.mxu0 0.0
    %632 = vmatpush2.msra.mxu0 0.0
    %633 = vmatprep.subr.mxu0 0.0
    %634 = vmatpush2.msra.mxu0 0.0
    %635 = vmatprep.subr.mxu0 0.0
    %636 = vmatpush2.msra.mxu0 0.0
    %637 = vmatprep.subr.mxu0 0.0
    %638 = vmatpush2.msra.mxu0 0.0
    %639 = vmatprep.subr.mxu0 0.0
    %640 = vmatpush2.msra.mxu0 0.0
    %641 = vmatprep.subr.mxu0 0.0
    %642 = vmatpush2.msra.mxu0 0.0
    %643 = vmatprep.subr.mxu0 0.0
    %644 = vmatpush2.msra.mxu0 0.0
    %645 = vmatprep.subr.mxu0 0.0
    %646 = vmatpush2.msra.mxu0 0.0
    %647 = vmatprep.subr.mxu0 0.0
    %648 = vmatpush2.msra.mxu0 0.0
    %649 = vmatprep.mubr.f32.mxu0 0.0
    %v650 = vand.u32 %v579, 4294901760
    %v651 = vsub.f32 %v579, %v650
    %v652 = vand.u32 %v651, 4294901760
    %v653 = vsub.f32 %v651, %v652
    %v654 = vand.u32 %v653, 4294901760
    %655 = vmatmul.mubr.f32.gmra.mxu0 %v654
    %v656 = vpop.f32.mrf.mxu0
    %v657 = vadd.f32 %v85, %v656
    %v658 = vpop.f32.mrf.mxu0
    %659 = vdwg.mxu0
    %660 = vmatprep.subr.mxu0 0.0
    %661 = vmatpush1.msra.mxu0 0.0
    %662 = vmatprep.subr.mxu0 0.0
    %663 = vmatpush1.msra.mxu0 0.0
    %664 = vmatprep.subr.mxu0 0.0
    %665 = vmatpush1.msra.mxu0 0.0
    %666 = vmatprep.subr.mxu0 0.0
    %667 = vmatpush1.msra.mxu0 0.0
    %668 = vmatprep.subr.mxu0 0.0
    %669 = vmatpush1.msra.mxu0 0.0
    %670 = vmatprep.subr.mxu0 0.0
    %671 = vmatpush1.msra.mxu0 0.0
    %672 = vmatprep.subr.mxu0 0.0
    %673 = vmatpush1.msra.mxu0 0.0
    %674 = vmatprep.subr.mxu0 0.0
    %675 = vmatpush1.msra.mxu0 0.0
    %676 = vmatprep.subr.mxu0 0.0
    %677 = vmatpush1.msra.mxu0 0.0
    %678 = vmatprep.subr.mxu0 0.0
    %679 = vmatpush1.msra.mxu0 0.0
    %680 = vmatprep.subr.mxu0 0.0
    %681 = vmatpush1.msra.mxu0 0.0
    %682 = vmatprep.subr.mxu0 0.0
    %683 = vmatpush1.msra.mxu0 0.0
    %684 = vmatprep.subr.mxu0 0.0
    %v685 = vand.u32 %v76, 4294901760
    %v686 = vsub.f32 %v76, %v685
    %v687 = vand.u32 %v686, 4294901760
    %v688 = vsub.f32 %v686, %v687
    %v689 = vand.u32 %v688, 4294901760
    %690 = vmatpush1.msra.mxu0 %v689
    %691 = vmatprep.subr.mxu0 0.0
    %v692 = vand.u32 %v75, 4294901760
    %v693 = vsub.f32 %v75, %v692
    %v694 = vand.u32 %v693, 4294901760
    %v695 = vsub.f32 %v693, %v694
    %v696 = vand.u32 %v695, 4294901760
    %697 = vmatpush1.msra.mxu0 %v696
    %698 = vmatprep.subr.mxu0 0.0
    %v699 = vand.u32 %v74, 4294901760
    %v700 = vsub.f32 %v74, %v699
    %v701 = vand.u32 %v700, 4294901760
    %v702 = vsub.f32 %v700, %v701
    %v703 = vand.u32 %v702, 4294901760
    %704 = vmatpush1.msra.mxu0 %v703
    %705 = vmatprep.subr.mxu0 0.0
    %v706 = vand.u32 %v73, 4294901760
    %v707 = vsub.f32 %v73, %v706
    %v708 = vand.u32 %v707, 4294901760
    %v709 = vsub.f32 %v707, %v708
    %v710 = vand.u32 %v709, 4294901760
    %711 = vmatpush1.msra.mxu0 %v710
    %712 = vmatprep.subr.mxu0 0.0
    %713 = vmatpush2.msra.mxu0 0.0
    %714 = vmatprep.subr.mxu0 0.0
    %715 = vmatpush2.msra.mxu0 0.0
    %716 = vmatprep.subr.mxu0 0.0
    %717 = vmatpush2.msra.mxu0 0.0
    %718 = vmatprep.subr.mxu0 0.0
    %719 = vmatpush2.msra.mxu0 0.0
    %720 = vmatprep.subr.mxu0 0.0
    %721 = vmatpush2.msra.mxu0 0.0
    %722 = vmatprep.subr.mxu0 0.0
    %723 = vmatpush2.msra.mxu0 0.0
    %724 = vmatprep.subr.mxu0 0.0
    %725 = vmatpush2.msra.mxu0 0.0
    %726 = vmatprep.subr.mxu0 0.0
    %727 = vmatpush2.msra.mxu0 0.0
    %728 = vmatprep.subr.mxu0 0.0
    %729 = vmatpush2.msra.mxu0 0.0
    %730 = vmatprep.subr.mxu0 0.0
    %731 = vmatpush2.msra.mxu0 0.0
    %732 = vmatprep.subr.mxu0 0.0
    %733 = vmatpush2.msra.mxu0 0.0
    %734 = vmatprep.subr.mxu0 0.0
    %735 = vmatpush2.msra.mxu0 0.0
    %736 = vmatprep.subr.mxu0 0.0
    %737 = vmatpush2.msra.mxu0 0.0
    %738 = vmatprep.subr.mxu0 0.0
    %739 = vmatpush2.msra.mxu0 0.0
    %740 = vmatprep.subr.mxu0 0.0
    %741 = vmatpush2.msra.mxu0 0.0
    %742 = vmatprep.subr.mxu0 0.0
    %743 = vmatpush2.msra.mxu0 0.0
    %744 = vmatprep.mubr.f32.mxu0 0.0
    %v745 = vand.u32 %v579, 4294901760
    %746 = vmatmul.mubr.f32.gmra.mxu0 %v745
    %v747 = vpop.f32.mrf.mxu0
    %v748 = vadd.f32 %v657, %v747
    %v749 = vpop.f32.mrf.mxu0
    %750 = vdwg.mxu0
    %751 = vmatprep.subr.mxu0 0.0
    %752 = vmatpush1.msra.mxu0 0.0
    %753 = vmatprep.subr.mxu0 0.0
    %754 = vmatpush1.msra.mxu0 0.0
    %755 = vmatprep.subr.mxu0 0.0
    %756 = vmatpush1.msra.mxu0 0.0
    %757 = vmatprep.subr.mxu0 0.0
    %758 = vmatpush1.msra.mxu0 0.0
    %759 = vmatprep.subr.mxu0 0.0
    %760 = vmatpush1.msra.mxu0 0.0
    %761 = vmatprep.subr.mxu0 0.0
    %762 = vmatpush1.msra.mxu0 0.0
    %763 = vmatprep.subr.mxu0 0.0
    %764 = vmatpush1.msra.mxu0 0.0
    %765 = vmatprep.subr.mxu0 0.0
    %766 = vmatpush1.msra.mxu0 0.0
    %767 = vmatprep.subr.mxu0 0.0
    %768 = vmatpush1.msra.mxu0 0.0
    %769 = vmatprep.subr.mxu0 0.0
    %770 = vmatpush1.msra.mxu0 0.0
    %771 = vmatprep.subr.mxu0 0.0
    %772 = vmatpush1.msra.mxu0 0.0
    %773 = vmatprep.subr.mxu0 0.0
    %774 = vmatpush1.msra.mxu0 0.0
    %775 = vmatprep.subr.mxu0 0.0
    %v776 = vand.u32 %v76, 4294901760
    %v777 = vsub.f32 %v76, %v776
    %778 = vmatpush1.msra.mxu0 %v777
    %779 = vmatprep.subr.mxu0 0.0
    %v780 = vand.u32 %v75, 4294901760
    %v781 = vsub.f32 %v75, %v780
    %782 = vmatpush1.msra.mxu0 %v781
    %783 = vmatprep.subr.mxu0 0.0
    %v784 = vand.u32 %v74, 4294901760
    %v785 = vsub.f32 %v74, %v784
    %786 = vmatpush1.msra.mxu0 %v785
    %787 = vmatprep.subr.mxu0 0.0
    %v788 = vand.u32 %v73, 4294901760
    %v789 = vsub.f32 %v73, %v788
    %790 = vmatpush1.msra.mxu0 %v789
    %791 = vmatprep.subr.mxu0 0.0
    %792 = vmatpush2.msra.mxu0 0.0
    %793 = vmatprep.subr.mxu0 0.0
    %794 = vmatpush2.msra.mxu0 0.0
    %795 = vmatprep.subr.mxu0 0.0
    %796 = vmatpush2.msra.mxu0 0.0
    %797 = vmatprep.subr.mxu0 0.0
    %798 = vmatpush2.msra.mxu0 0.0
    %799 = vmatprep.subr.mxu0 0.0
    %800 = vmatpush2.msra.mxu0 0.0
    %801 = vmatprep.subr.mxu0 0.0
    %802 = vmatpush2.msra.mxu0 0.0
    %803 = vmatprep.subr.mxu0 0.0
    %804 = vmatpush2.msra.mxu0 0.0
    %805 = vmatprep.subr.mxu0 0.0
    %806 = vmatpush2.msra.mxu0 0.0
    %807 = vmatprep.subr.mxu0 0.0
    %808 = vmatpush2.msra.mxu0 0.0
    %809 = vmatprep.subr.mxu0 0.0
    %810 = vmatpush2.msra.mxu0 0.0
    %811 = vmatprep.subr.mxu0 0.0
    %812 = vmatpush2.msra.mxu0 0.0
    %813 = vmatprep.subr.mxu0 0.0
    %814 = vmatpush2.msra.mxu0 0.0
    %815 = vmatprep.subr.mxu0 0.0
    %816 = vmatpush2.msra.mxu0 0.0
    %817 = vmatprep.subr.mxu0 0.0
    %818 = vmatpush2.msra.mxu0 0.0
    %819 = vmatprep.subr.mxu0 0.0
    %820 = vmatpush2.msra.mxu0 0.0
    %821 = vmatprep.subr.mxu0 0.0
    %822 = vmatpush2.msra.mxu0 0.0
    %823 = vmatprep.mubr.f32.mxu0 0.0
    %v824 = vand.u32 %v579, 4294901760
    %v825 = vsub.f32 %v579, %v824
    %826 = vmatmul.mubr.f32.gmra.mxu0 %v825
    %v827 = vpop.f32.mrf.mxu0
    %v828 = vadd.f32 %v748, %v827
    %v829 = vpop.f32.mrf.mxu0
    %830 = vdwg.mxu0
    %831 = vmatprep.subr.mxu0 0.0
    %832 = vmatpush1.msra.mxu0 0.0
    %833 = vmatprep.subr.mxu0 0.0
    %834 = vmatpush1.msra.mxu0 0.0
    %835 = vmatprep.subr.mxu0 0.0
    %836 = vmatpush1.msra.mxu0 0.0
    %837 = vmatprep.subr.mxu0 0.0
    %838 = vmatpush1.msra.mxu0 0.0
    %839 = vmatprep.subr.mxu0 0.0
    %840 = vmatpush1.msra.mxu0 0.0
    %841 = vmatprep.subr.mxu0 0.0
    %842 = vmatpush1.msra.mxu0 0.0
    %843 = vmatprep.subr.mxu0 0.0
    %844 = vmatpush1.msra.mxu0 0.0
    %845 = vmatprep.subr.mxu0 0.0
    %846 = vmatpush1.msra.mxu0 0.0
    %847 = vmatprep.subr.mxu0 0.0
    %848 = vmatpush1.msra.mxu0 0.0
    %849 = vmatprep.subr.mxu0 0.0
    %850 = vmatpush1.msra.mxu0 0.0
    %851 = vmatprep.subr.mxu0 0.0
    %852 = vmatpush1.msra.mxu0 0.0
    %853 = vmatprep.subr.mxu0 0.0
    %854 = vmatpush1.msra.mxu0 0.0
    %855 = vmatprep.subr.mxu0 0.0
    %v856 = vand.u32 %v76, 4294901760
    %857 = vmatpush1.msra.mxu0 %v856
    %858 = vmatprep.subr.mxu0 0.0
    %v859 = vand.u32 %v75, 4294901760
    %860 = vmatpush1.msra.mxu0 %v859
    %861 = vmatprep.subr.mxu0 0.0
    %v862 = vand.u32 %v74, 4294901760
    %863 = vmatpush1.msra.mxu0 %v862
    %864 = vmatprep.subr.mxu0 0.0
    %v865 = vand.u32 %v73, 4294901760
    %866 = vmatpush1.msra.mxu0 %v865
    %867 = vmatprep.subr.mxu0 0.0
    %868 = vmatpush2.msra.mxu0 0.0
    %869 = vmatprep.subr.mxu0 0.0
    %870 = vmatpush2.msra.mxu0 0.0
    %871 = vmatprep.subr.mxu0 0.0
    %872 = vmatpush2.msra.mxu0 0.0
    %873 = vmatprep.subr.mxu0 0.0
    %874 = vmatpush2.msra.mxu0 0.0
    %875 = vmatprep.subr.mxu0 0.0
    %876 = vmatpush2.msra.mxu0 0.0
    %877 = vmatprep.subr.mxu0 0.0
    %878 = vmatpush2.msra.mxu0 0.0
    %879 = vmatprep.subr.mxu0 0.0
    %880 = vmatpush2.msra.mxu0 0.0
    %881 = vmatprep.subr.mxu0 0.0
    %882 = vmatpush2.msra.mxu0 0.0
    %883 = vmatprep.subr.mxu0 0.0
    %884 = vmatpush2.msra.mxu0 0.0
    %885 = vmatprep.subr.mxu0 0.0
    %886 = vmatpush2.msra.mxu0 0.0
    %887 = vmatprep.subr.mxu0 0.0
    %888 = vmatpush2.msra.mxu0 0.0
    %889 = vmatprep.subr.mxu0 0.0
    %890 = vmatpush2.msra.mxu0 0.0
    %891 = vmatprep.subr.mxu0 0.0
    %892 = vmatpush2.msra.mxu0 0.0
    %893 = vmatprep.subr.mxu0 0.0
    %894 = vmatpush2.msra.mxu0 0.0
    %895 = vmatprep.subr.mxu0 0.0
    %896 = vmatpush2.msra.mxu0 0.0
    %897 = vmatprep.subr.mxu0 0.0
    %898 = vmatpush2.msra.mxu0 0.0
    %899 = vmatprep.mubr.f32.mxu0 0.0
    %v900 = vand.u32 %v579, 4294901760
    %v901 = vsub.f32 %v579, %v900
    %v902 = vand.u32 %v901, 4294901760
    %903 = vmatmul.mubr.f32.gmra.mxu0 %v902
    %v904 = vpop.f32.mrf.mxu0
    %v905 = vadd.f32 %v828, %v904
    %v906 = vpop.f32.mrf.mxu0
    %907 = vdwg.mxu0
    %908 = vmatprep.subr.mxu0 0.0
    %909 = vmatpush1.msra.mxu0 0.0
    %910 = vmatprep.subr.mxu0 0.0
    %911 = vmatpush1.msra.mxu0 0.0
    %912 = vmatprep.subr.mxu0 0.0
    %913 = vmatpush1.msra.mxu0 0.0
    %914 = vmatprep.subr.mxu0 0.0
    %915 = vmatpush1.msra.mxu0 0.0
    %916 = vmatprep.subr.mxu0 0.0
    %917 = vmatpush1.msra.mxu0 0.0
    %918 = vmatprep.subr.mxu0 0.0
    %919 = vmatpush1.msra.mxu0 0.0
    %920 = vmatprep.subr.mxu0 0.0
    %921 = vmatpush1.msra.mxu0 0.0
    %922 = vmatprep.subr.mxu0 0.0
    %923 = vmatpush1.msra.mxu0 0.0
    %924 = vmatprep.subr.mxu0 0.0
    %925 = vmatpush1.msra.mxu0 0.0
    %926 = vmatprep.subr.mxu0 0.0
    %927 = vmatpush1.msra.mxu0 0.0
    %928 = vmatprep.subr.mxu0 0.0
    %929 = vmatpush1.msra.mxu0 0.0
    %930 = vmatprep.subr.mxu0 0.0
    %931 = vmatpush1.msra.mxu0 0.0
    %932 = vmatprep.subr.mxu0 0.0
    %v933 = vand.u32 %v76, 4294901760
    %v934 = vsub.f32 %v76, %v933
    %v935 = vand.u32 %v934, 4294901760
    %936 = vmatpush1.msra.mxu0 %v935
    %937 = vmatprep.subr.mxu0 0.0
    %v938 = vand.u32 %v75, 4294901760
    %v939 = vsub.f32 %v75, %v938
    %v940 = vand.u32 %v939, 4294901760
    %941 = vmatpush1.msra.mxu0 %v940
    %942 = vmatprep.subr.mxu0 0.0
    %v943 = vand.u32 %v74, 4294901760
    %v944 = vsub.f32 %v74, %v943
    %v945 = vand.u32 %v944, 4294901760
    %946 = vmatpush1.msra.mxu0 %v945
    %947 = vmatprep.subr.mxu0 0.0
    %v948 = vand.u32 %v73, 4294901760
    %v949 = vsub.f32 %v73, %v948
    %v950 = vand.u32 %v949, 4294901760
    %951 = vmatpush1.msra.mxu0 %v950
    %952 = vmatprep.subr.mxu0 0.0
    %953 = vmatpush2.msra.mxu0 0.0
    %954 = vmatprep.subr.mxu0 0.0
    %955 = vmatpush2.msra.mxu0 0.0
    %956 = vmatprep.subr.mxu0 0.0
    %957 = vmatpush2.msra.mxu0 0.0
    %958 = vmatprep.subr.mxu0 0.0
    %959 = vmatpush2.msra.mxu0 0.0
    %960 = vmatprep.subr.mxu0 0.0
    %961 = vmatpush2.msra.mxu0 0.0
    %962 = vmatprep.subr.mxu0 0.0
    %963 = vmatpush2.msra.mxu0 0.0
    %964 = vmatprep.subr.mxu0 0.0
    %965 = vmatpush2.msra.mxu0 0.0
    %966 = vmatprep.subr.mxu0 0.0
    %967 = vmatpush2.msra.mxu0 0.0
    %968 = vmatprep.subr.mxu0 0.0
    %969 = vmatpush2.msra.mxu0 0.0
    %970 = vmatprep.subr.mxu0 0.0
    %971 = vmatpush2.msra.mxu0 0.0
    %972 = vmatprep.subr.mxu0 0.0
    %973 = vmatpush2.msra.mxu0 0.0
    %974 = vmatprep.subr.mxu0 0.0
    %975 = vmatpush2.msra.mxu0 0.0
    %976 = vmatprep.subr.mxu0 0.0
    %977 = vmatpush2.msra.mxu0 0.0
    %978 = vmatprep.subr.mxu0 0.0
    %979 = vmatpush2.msra.mxu0 0.0
    %980 = vmatprep.subr.mxu0 0.0
    %981 = vmatpush2.msra.mxu0 0.0
    %982 = vmatprep.subr.mxu0 0.0
    %983 = vmatpush2.msra.mxu0 0.0
    %984 = vmatprep.mubr.f32.mxu0 0.0
    %v985 = vand.u32 %v579, 4294901760
    %986 = vmatmul.mubr.f32.gmra.mxu0 %v985
    %v987 = vpop.f32.mrf.mxu0
    %v988 = vadd.f32 %v905, %v987
    %v989 = vpop.f32.mrf.mxu0
    %990 = vdwg.mxu0
    %991 = vmatprep.subr.mxu0 0.0
    %992 = vmatpush1.msra.mxu0 0.0
    %993 = vmatprep.subr.mxu0 0.0
    %994 = vmatpush1.msra.mxu0 0.0
    %995 = vmatprep.subr.mxu0 0.0
    %996 = vmatpush1.msra.mxu0 0.0
    %997 = vmatprep.subr.mxu0 0.0
    %998 = vmatpush1.msra.mxu0 0.0
    %999 = vmatprep.subr.mxu0 0.0
    %1000 = vmatpush1.msra.mxu0 0.0
    %1001 = vmatprep.subr.mxu0 0.0
    %1002 = vmatpush1.msra.mxu0 0.0
    %1003 = vmatprep.subr.mxu0 0.0
    %1004 = vmatpush1.msra.mxu0 0.0
    %1005 = vmatprep.subr.mxu0 0.0
    %1006 = vmatpush1.msra.mxu0 0.0
    %1007 = vmatprep.subr.mxu0 0.0
    %1008 = vmatpush1.msra.mxu0 0.0
    %1009 = vmatprep.subr.mxu0 0.0
    %1010 = vmatpush1.msra.mxu0 0.0
    %1011 = vmatprep.subr.mxu0 0.0
    %1012 = vmatpush1.msra.mxu0 0.0
    %1013 = vmatprep.subr.mxu0 0.0
    %1014 = vmatpush1.msra.mxu0 0.0
    %1015 = vmatprep.subr.mxu0 0.0
    %v1016 = vand.u32 %v76, 4294901760
    %1017 = vmatpush1.msra.mxu0 %v1016
    %1018 = vmatprep.subr.mxu0 0.0
    %v1019 = vand.u32 %v75, 4294901760
    %1020 = vmatpush1.msra.mxu0 %v1019
    %1021 = vmatprep.subr.mxu0 0.0
    %v1022 = vand.u32 %v74, 4294901760
    %1023 = vmatpush1.msra.mxu0 %v1022
    %1024 = vmatprep.subr.mxu0 0.0
    %v1025 = vand.u32 %v73, 4294901760
    %1026 = vmatpush1.msra.mxu0 %v1025
    %1027 = vmatprep.subr.mxu0 0.0
    %1028 = vmatpush2.msra.mxu0 0.0
    %1029 = vmatprep.subr.mxu0 0.0
    %1030 = vmatpush2.msra.mxu0 0.0
    %1031 = vmatprep.subr.mxu0 0.0
    %1032 = vmatpush2.msra.mxu0 0.0
    %1033 = vmatprep.subr.mxu0 0.0
    %1034 = vmatpush2.msra.mxu0 0.0
    %1035 = vmatprep.subr.mxu0 0.0
    %1036 = vmatpush2.msra.mxu0 0.0
    %1037 = vmatprep.subr.mxu0 0.0
    %1038 = vmatpush2.msra.mxu0 0.0
    %1039 = vmatprep.subr.mxu0 0.0
    %1040 = vmatpush2.msra.mxu0 0.0
    %1041 = vmatprep.subr.mxu0 0.0
    %1042 = vmatpush2.msra.mxu0 0.0
    %1043 = vmatprep.subr.mxu0 0.0
    %1044 = vmatpush2.msra.mxu0 0.0
    %1045 = vmatprep.subr.mxu0 0.0
    %1046 = vmatpush2.msra.mxu0 0.0
    %1047 = vmatprep.subr.mxu0 0.0
    %1048 = vmatpush2.msra.mxu0 0.0
    %1049 = vmatprep.subr.mxu0 0.0
    %1050 = vmatpush2.msra.mxu0 0.0
    %1051 = vmatprep.subr.mxu0 0.0
    %1052 = vmatpush2.msra.mxu0 0.0
    %1053 = vmatprep.subr.mxu0 0.0
    %1054 = vmatpush2.msra.mxu0 0.0
    %1055 = vmatprep.subr.mxu0 0.0
    %1056 = vmatpush2.msra.mxu0 0.0
    %1057 = vmatprep.subr.mxu0 0.0
    %1058 = vmatpush2.msra.mxu0 0.0
    %1059 = vmatprep.mubr.f32.mxu0 0.0
    %v1060 = vand.u32 %v579, 4294901760
    %1061 = vmatmul.mubr.f32.gmra.mxu0 %v1060
    %v1062 = vpop.f32.mrf.mxu0
    %v1063 = vadd.f32 %v988, %v1062
    %v1064 = vpop.f32.mrf.mxu0
    %1065 = vdwg.mxu0
    %v1067 = vrot.slane %v1063, 7
    %vm1069 = vcmask 1040384
    %v1070 = vsel %vm1069, %v573, %v1067
    %v1072 = vrot.slane %v573, 1
    %v1074 = vsel %vm1069, %v1072, %v1063
    %v1075 = vrot.slane %v573, 2
    %v1077 = vrot.slane %v1063, 1
    %v1079 = vsel %vm1069, %v1075, %v1077
    %v1080 = vrot.slane %v573, 3
    %v1082 = vrot.slane %v1063, 2
    %v1084 = vsel %vm1069, %v1080, %v1082
    %v1085 = vrot.slane %v573, 4
    %v1087 = vrot.slane %v1063, 3
    %v1089 = vsel %vm1069, %v1085, %v1087
    %v1090 = vrot.slane %v573, 5
    %v1092 = vrot.slane %v1063, 4
    %v1094 = vsel %vm1069, %v1090, %v1092
    %v1095 = vrot.slane %v573, 6
    %v1097 = vrot.slane %v1063, 5
    %v1099 = vsel %vm1069, %v1095, %v1097
    %v1100 = vrot.slane %v573, 7
    %v1102 = vrot.slane %v1063, 6
    %v1104 = vsel %vm1069, %v1100, %v1102
    %v1105 = vxor.u32 %v1070, 2147483648
    %v1106 = vmul.f32 %v1105, 1.442695
    %v1107 = vpow.pop %v1106
    %v1108 = vadd.f32 %v1107, 1.0
    %v1109 = vrcp.pop %v1108
    %v1110 = vmul.f32 1.0, %v1109
    %v1111 = vtanh.pop %v1070
    %v1112 = vmul.f32 %v1110, 0.0
    %1114 = vrot.lane.b32.xlu0 %v1111, 96
    %v1115 = vpop.permute.xlu0 %1114
    %v1117 = vmul.f32 %v1110, %v1115
    %1119 = vrot.lane.b32.xlu0 %v1117, 16
    %v1120 = vpop.permute.xlu0 %1119
    %v1122 = vadd.f32 %v1112, %v1120
    %v1123 = vtanh.pop %v1122
    %1125 = vrot.lane.b32.xlu0 %v1123, 32
    %v1126 = vpop.permute.xlu0 %1125
    %v1128 = vmul.f32 %v1110, %v1126
    %v1129 = vlaneseq
    %v1130 = vand.u32 %v1129, 127
    %vm1131 = vcmp.lt.s32.totalorder %v1130, 8
    %1133 = vrot.lane.b32.xlu0 %v1128, 80
    %v1134 = vpop.permute.xlu0 %1133
    %v1136 = vsel %vm1131, %v1134, 0.0
    %1138 = vrot.lane.b32.xlu0 %v1122, 112
    %v1139 = vpop.permute.xlu0 %1138
    %v1141 = vsel %vm1131, %v1139, 0.0
    %vm1142 = vcmask 130048
    %v1144 = vsel %vm1142, %v1136, 0
    %1146 = vmatprep.subr.mxu0 0.0
    %1147 = vmatpush1.msra.mxu0 0.0
    %1148 = vmatprep.subr.mxu0 0.0
    %1149 = vmatpush1.msra.mxu0 0.0
    %1150 = vmatprep.subr.mxu0 0.0
    %1151 = vmatpush1.msra.mxu0 0.0
    %1152 = vmatprep.subr.mxu0 0.0
    %1153 = vmatpush1.msra.mxu0 0.0
    %1154 = vmatprep.subr.mxu0 0.0
    %1155 = vmatpush1.msra.mxu0 0.0
    %1156 = vmatprep.subr.mxu0 0.0
    %1157 = vmatpush1.msra.mxu0 0.0
    %1158 = vmatprep.subr.mxu0 0.0
    %1159 = vmatpush1.msra.mxu0 0.0
    %1160 = vmatprep.subr.mxu0 0.0
    %1161 = vmatpush1.msra.mxu0 0.0
    %1162 = vmatprep.subr.mxu0 0.0
    %1163 = vmatpush1.msra.mxu0 0.0
    %1164 = vmatprep.subr.mxu0 0.0
    %1165 = vmatpush1.msra.mxu0 0.0
    %1166 = vmatprep.subr.mxu0 0.0
    %1167 = vmatpush1.msra.mxu0 0.0
    %1168 = vmatprep.subr.mxu0 0.0
    %1169 = vmatpush1.msra.mxu0 0.0
    %1170 = vmatprep.subr.mxu0 0.0
    %1171 = vmatpush1.msra.mxu0 0.0
    %1172 = vmatprep.subr.mxu0 0.0
    %1173 = vmatpush1.msra.mxu0 0.0
    %1174 = vmatprep.subr.mxu0 0.0
    %v1175 = vand.u32 %v79, 4294901760
    %1176 = vmatpush1.msra.mxu0 %v1175
    %1177 = vmatprep.subr.mxu0 0.0
    %v1178 = vand.u32 %v78, 4294901760
    %1179 = vmatpush1.msra.mxu0 %v1178
    %1180 = vmatprep.subr.mxu0 0.0
    %1181 = vmatpush2.msra.mxu0 0.0
    %1182 = vmatprep.subr.mxu0 0.0
    %1183 = vmatpush2.msra.mxu0 0.0
    %1184 = vmatprep.subr.mxu0 0.0
    %1185 = vmatpush2.msra.mxu0 0.0
    %1186 = vmatprep.subr.mxu0 0.0
    %1187 = vmatpush2.msra.mxu0 0.0
    %1188 = vmatprep.subr.mxu0 0.0
    %1189 = vmatpush2.msra.mxu0 0.0
    %1190 = vmatprep.subr.mxu0 0.0
    %1191 = vmatpush2.msra.mxu0 0.0
    %1192 = vmatprep.subr.mxu0 0.0
    %1193 = vmatpush2.msra.mxu0 0.0
    %1194 = vmatprep.subr.mxu0 0.0
    %1195 = vmatpush2.msra.mxu0 0.0
    %1196 = vmatprep.subr.mxu0 0.0
    %1197 = vmatpush2.msra.mxu0 0.0
    %1198 = vmatprep.subr.mxu0 0.0
    %1199 = vmatpush2.msra.mxu0 0.0
    %1200 = vmatprep.subr.mxu0 0.0
    %1201 = vmatpush2.msra.mxu0 0.0
    %1202 = vmatprep.subr.mxu0 0.0
    %1203 = vmatpush2.msra.mxu0 0.0
    %1204 = vmatprep.subr.mxu0 0.0
    %1205 = vmatpush2.msra.mxu0 0.0
    %1206 = vmatprep.subr.mxu0 0.0
    %1207 = vmatpush2.msra.mxu0 0.0
    %1208 = vmatprep.subr.mxu0 0.0
    %1209 = vmatpush2.msra.mxu0 0.0
    %1210 = vmatprep.subr.mxu0 0.0
    %1211 = vmatpush2.msra.mxu0 0.0
    %1212 = vmatprep.mubr.f32.mxu0 0.0
    %v1213 = vand.u32 %v1144, 4294901760
    %v1214 = vsub.f32 %v1144, %v1213
    %v1215 = vand.u32 %v1214, 4294901760
    %v1216 = vsub.f32 %v1214, %v1215
    %v1217 = vand.u32 %v1216, 4294901760
    %1218 = vmatmul.mubr.f32.gmra.mxu0 %v1217
    %v1219 = vpop.f32.mrf.mxu0
    %v1220 = vadd.f32 0.0, %v1219
    %v1221 = vpop.f32.mrf.mxu0
    %1222 = vdwg.mxu0
    %1223 = vmatprep.subr.mxu0 0.0
    %1224 = vmatpush1.msra.mxu0 0.0
    %1225 = vmatprep.subr.mxu0 0.0
    %1226 = vmatpush1.msra.mxu0 0.0
    %1227 = vmatprep.subr.mxu0 0.0
    %1228 = vmatpush1.msra.mxu0 0.0
    %1229 = vmatprep.subr.mxu0 0.0
    %1230 = vmatpush1.msra.mxu0 0.0
    %1231 = vmatprep.subr.mxu0 0.0
    %1232 = vmatpush1.msra.mxu0 0.0
    %1233 = vmatprep.subr.mxu0 0.0
    %1234 = vmatpush1.msra.mxu0 0.0
    %1235 = vmatprep.subr.mxu0 0.0
    %1236 = vmatpush1.msra.mxu0 0.0
    %1237 = vmatprep.subr.mxu0 0.0
    %1238 = vmatpush1.msra.mxu0 0.0
    %1239 = vmatprep.subr.mxu0 0.0
    %1240 = vmatpush1.msra.mxu0 0.0
    %1241 = vmatprep.subr.mxu0 0.0
    %1242 = vmatpush1.msra.mxu0 0.0
    %1243 = vmatprep.subr.mxu0 0.0
    %1244 = vmatpush1.msra.mxu0 0.0
    %1245 = vmatprep.subr.mxu0 0.0
    %1246 = vmatpush1.msra.mxu0 0.0
    %1247 = vmatprep.subr.mxu0 0.0
    %1248 = vmatpush1.msra.mxu0 0.0
    %1249 = vmatprep.subr.mxu0 0.0
    %1250 = vmatpush1.msra.mxu0 0.0
    %1251 = vmatprep.subr.mxu0 0.0
    %v1252 = vand.u32 %v79, 4294901760
    %v1253 = vsub.f32 %v79, %v1252
    %v1254 = vand.u32 %v1253, 4294901760
    %v1255 = vsub.f32 %v1253, %v1254
    %v1256 = vand.u32 %v1255, 4294901760
    %1257 = vmatpush1.msra.mxu0 %v1256
    %1258 = vmatprep.subr.mxu0 0.0
    %v1259 = vand.u32 %v78, 4294901760
    %v1260 = vsub.f32 %v78, %v1259
    %v1261 = vand.u32 %v1260, 4294901760
    %v1262 = vsub.f32 %v1260, %v1261
    %v1263 = vand.u32 %v1262, 4294901760
    %1264 = vmatpush1.msra.mxu0 %v1263
    %1265 = vmatprep.subr.mxu0 0.0
    %1266 = vmatpush2.msra.mxu0 0.0
    %1267 = vmatprep.subr.mxu0 0.0
    %1268 = vmatpush2.msra.mxu0 0.0
    %1269 = vmatprep.subr.mxu0 0.0
    %1270 = vmatpush2.msra.mxu0 0.0
    %1271 = vmatprep.subr.mxu0 0.0
    %1272 = vmatpush2.msra.mxu0 0.0
    %1273 = vmatprep.subr.mxu0 0.0
    %1274 = vmatpush2.msra.mxu0 0.0
    %1275 = vmatprep.subr.mxu0 0.0
    %1276 = vmatpush2.msra.mxu0 0.0
    %1277 = vmatprep.subr.mxu0 0.0
    %1278 = vmatpush2.msra.mxu0 0.0
    %1279 = vmatprep.subr.mxu0 0.0
    %1280 = vmatpush2.msra.mxu0 0.0
    %1281 = vmatprep.subr.mxu0 0.0
    %1282 = vmatpush2.msra.mxu0 0.0
    %1283 = vmatprep.subr.mxu0 0.0
    %1284 = vmatpush2.msra.mxu0 0.0
    %1285 = vmatprep.subr.mxu0 0.0
    %1286 = vmatpush2.msra.mxu0 0.0
    %1287 = vmatprep.subr.mxu0 0.0
    %1288 = vmatpush2.msra.mxu0 0.0
    %1289 = vmatprep.subr.mxu0 0.0
    %1290 = vmatpush2.msra.mxu0 0.0
    %1291 = vmatprep.subr.mxu0 0.0
    %1292 = vmatpush2.msra.mxu0 0.0
    %1293 = vmatprep.subr.mxu0 0.0
    %1294 = vmatpush2.msra.mxu0 0.0
    %1295 = vmatprep.subr.mxu0 0.0
    %1296 = vmatpush2.msra.mxu0 0.0
    %1297 = vmatprep.mubr.f32.mxu0 0.0
    %v1298 = vand.u32 %v1144, 4294901760
    %1299 = vmatmul.mubr.f32.gmra.mxu0 %v1298
    %v1300 = vpop.f32.mrf.mxu0
    %v1301 = vadd.f32 %v1220, %v1300
    %v1302 = vpop.f32.mrf.mxu0
    %1303 = vdwg.mxu0
    %1304 = vmatprep.subr.mxu0 0.0
    %1305 = vmatpush1.msra.mxu0 0.0
    %1306 = vmatprep.subr.mxu0 0.0
    %1307 = vmatpush1.msra.mxu0 0.0
    %1308 = vmatprep.subr.mxu0 0.0
    %1309 = vmatpush1.msra.mxu0 0.0
    %1310 = vmatprep.subr.mxu0 0.0
    %1311 = vmatpush1.msra.mxu0 0.0
    %1312 = vmatprep.subr.mxu0 0.0
    %1313 = vmatpush1.msra.mxu0 0.0
    %1314 = vmatprep.subr.mxu0 0.0
    %1315 = vmatpush1.msra.mxu0 0.0
    %1316 = vmatprep.subr.mxu0 0.0
    %1317 = vmatpush1.msra.mxu0 0.0
    %1318 = vmatprep.subr.mxu0 0.0
    %1319 = vmatpush1.msra.mxu0 0.0
    %1320 = vmatprep.subr.mxu0 0.0
    %1321 = vmatpush1.msra.mxu0 0.0
    %1322 = vmatprep.subr.mxu0 0.0
    %1323 = vmatpush1.msra.mxu0 0.0
    %1324 = vmatprep.subr.mxu0 0.0
    %1325 = vmatpush1.msra.mxu0 0.0
    %1326 = vmatprep.subr.mxu0 0.0
    %1327 = vmatpush1.msra.mxu0 0.0
    %1328 = vmatprep.subr.mxu0 0.0
    %1329 = vmatpush1.msra.mxu0 0.0
    %1330 = vmatprep.subr.mxu0 0.0
    %1331 = vmatpush1.msra.mxu0 0.0
    %1332 = vmatprep.subr.mxu0 0.0
    %v1333 = vand.u32 %v79, 4294901760
    %v1334 = vsub.f32 %v79, %v1333
    %1335 = vmatpush1.msra.mxu0 %v1334
    %1336 = vmatprep.subr.mxu0 0.0
    %v1337 = vand.u32 %v78, 4294901760
    %v1338 = vsub.f32 %v78, %v1337
    %1339 = vmatpush1.msra.mxu0 %v1338
    %1340 = vmatprep.subr.mxu0 0.0
    %1341 = vmatpush2.msra.mxu0 0.0
    %1342 = vmatprep.subr.mxu0 0.0
    %1343 = vmatpush2.msra.mxu0 0.0
    %1344 = vmatprep.subr.mxu0 0.0
    %1345 = vmatpush2.msra.mxu0 0.0
    %1346 = vmatprep.subr.mxu0 0.0
    %1347 = vmatpush2.msra.mxu0 0.0
    %1348 = vmatprep.subr.mxu0 0.0
    %1349 = vmatpush2.msra.mxu0 0.0
    %1350 = vmatprep.subr.mxu0 0.0
    %1351 = vmatpush2.msra.mxu0 0.0
    %1352 = vmatprep.subr.mxu0 0.0
    %1353 = vmatpush2.msra.mxu0 0.0
    %1354 = vmatprep.subr.mxu0 0.0
    %1355 = vmatpush2.msra.mxu0 0.0
    %1356 = vmatprep.subr.mxu0 0.0
    %1357 = vmatpush2.msra.mxu0 0.0
    %1358 = vmatprep.subr.mxu0 0.0
    %1359 = vmatpush2.msra.mxu0 0.0
    %1360 = vmatprep.subr.mxu0 0.0
    %1361 = vmatpush2.msra.mxu0 0.0
    %1362 = vmatprep.subr.mxu0 0.0
    %1363 = vmatpush2.msra.mxu0 0.0
    %1364 = vmatprep.subr.mxu0 0.0
    %1365 = vmatpush2.msra.mxu0 0.0
    %1366 = vmatprep.subr.mxu0 0.0
    %1367 = vmatpush2.msra.mxu0 0.0
    %1368 = vmatprep.subr.mxu0 0.0
    %1369 = vmatpush2.msra.mxu0 0.0
    %1370 = vmatprep.subr.mxu0 0.0
    %1371 = vmatpush2.msra.mxu0 0.0
    %1372 = vmatprep.mubr.f32.mxu0 0.0
    %v1373 = vand.u32 %v1144, 4294901760
    %v1374 = vsub.f32 %v1144, %v1373
    %1375 = vmatmul.mubr.f32.gmra.mxu0 %v1374
    %v1376 = vpop.f32.mrf.mxu0
    %v1377 = vadd.f32 %v1301, %v1376
    %v1378 = vpop.f32.mrf.mxu0
    %1379 = vdwg.mxu0
    %1380 = vmatprep.subr.mxu0 0.0
    %1381 = vmatpush1.msra.mxu0 0.0
    %1382 = vmatprep.subr.mxu0 0.0
    %1383 = vmatpush1.msra.mxu0 0.0
    %1384 = vmatprep.subr.mxu0 0.0
    %1385 = vmatpush1.msra.mxu0 0.0
    %1386 = vmatprep.subr.mxu0 0.0
    %1387 = vmatpush1.msra.mxu0 0.0
    %1388 = vmatprep.subr.mxu0 0.0
    %1389 = vmatpush1.msra.mxu0 0.0
    %1390 = vmatprep.subr.mxu0 0.0
    %1391 = vmatpush1.msra.mxu0 0.0
    %1392 = vmatprep.subr.mxu0 0.0
    %1393 = vmatpush1.msra.mxu0 0.0
    %1394 = vmatprep.subr.mxu0 0.0
    %1395 = vmatpush1.msra.mxu0 0.0
    %1396 = vmatprep.subr.mxu0 0.0
    %1397 = vmatpush1.msra.mxu0 0.0
    %1398 = vmatprep.subr.mxu0 0.0
    %1399 = vmatpush1.msra.mxu0 0.0
    %1400 = vmatprep.subr.mxu0 0.0
    %1401 = vmatpush1.msra.mxu0 0.0
    %1402 = vmatprep.subr.mxu0 0.0
    %1403 = vmatpush1.msra.mxu0 0.0
    %1404 = vmatprep.subr.mxu0 0.0
    %1405 = vmatpush1.msra.mxu0 0.0
    %1406 = vmatprep.subr.mxu0 0.0
    %1407 = vmatpush1.msra.mxu0 0.0
    %1408 = vmatprep.subr.mxu0 0.0
    %v1409 = vand.u32 %v79, 4294901760
    %1410 = vmatpush1.msra.mxu0 %v1409
    %1411 = vmatprep.subr.mxu0 0.0
    %v1412 = vand.u32 %v78, 4294901760
    %1413 = vmatpush1.msra.mxu0 %v1412
    %1414 = vmatprep.subr.mxu0 0.0
    %1415 = vmatpush2.msra.mxu0 0.0
    %1416 = vmatprep.subr.mxu0 0.0
    %1417 = vmatpush2.msra.mxu0 0.0
    %1418 = vmatprep.subr.mxu0 0.0
    %1419 = vmatpush2.msra.mxu0 0.0
    %1420 = vmatprep.subr.mxu0 0.0
    %1421 = vmatpush2.msra.mxu0 0.0
    %1422 = vmatprep.subr.mxu0 0.0
    %1423 = vmatpush2.msra.mxu0 0.0
    %1424 = vmatprep.subr.mxu0 0.0
    %1425 = vmatpush2.msra.mxu0 0.0
    %1426 = vmatprep.subr.mxu0 0.0
    %1427 = vmatpush2.msra.mxu0 0.0
    %1428 = vmatprep.subr.mxu0 0.0
    %1429 = vmatpush2.msra.mxu0 0.0
    %1430 = vmatprep.subr.mxu0 0.0
    %1431 = vmatpush2.msra.mxu0 0.0
    %1432 = vmatprep.subr.mxu0 0.0
    %1433 = vmatpush2.msra.mxu0 0.0
    %1434 = vmatprep.subr.mxu0 0.0
    %1435 = vmatpush2.msra.mxu0 0.0
    %1436 = vmatprep.subr.mxu0 0.0
    %1437 = vmatpush2.msra.mxu0 0.0
    %1438 = vmatprep.subr.mxu0 0.0
    %1439 = vmatpush2.msra.mxu0 0.0
    %1440 = vmatprep.subr.mxu0 0.0
    %1441 = vmatpush2.msra.mxu0 0.0
    %1442 = vmatprep.subr.mxu0 0.0
    %1443 = vmatpush2.msra.mxu0 0.0
    %1444 = vmatprep.subr.mxu0 0.0
    %1445 = vmatpush2.msra.mxu0 0.0
    %1446 = vmatprep.mubr.f32.mxu0 0.0
    %v1447 = vand.u32 %v1144, 4294901760
    %v1448 = vsub.f32 %v1144, %v1447
    %v1449 = vand.u32 %v1448, 4294901760
    %1450 = vmatmul.mubr.f32.gmra.mxu0 %v1449
    %v1451 = vpop.f32.mrf.mxu0
    %v1452 = vadd.f32 %v1377, %v1451
    %v1453 = vpop.f32.mrf.mxu0
    %1454 = vdwg.mxu0
    %1455 = vmatprep.subr.mxu0 0.0
    %1456 = vmatpush1.msra.mxu0 0.0
    %1457 = vmatprep.subr.mxu0 0.0
    %1458 = vmatpush1.msra.mxu0 0.0
    %1459 = vmatprep.subr.mxu0 0.0
    %1460 = vmatpush1.msra.mxu0 0.0
    %1461 = vmatprep.subr.mxu0 0.0
    %1462 = vmatpush1.msra.mxu0 0.0
    %1463 = vmatprep.subr.mxu0 0.0
    %1464 = vmatpush1.msra.mxu0 0.0
    %1465 = vmatprep.subr.mxu0 0.0
    %1466 = vmatpush1.msra.mxu0 0.0
    %1467 = vmatprep.subr.mxu0 0.0
    %1468 = vmatpush1.msra.mxu0 0.0
    %1469 = vmatprep.subr.mxu0 0.0
    %1470 = vmatpush1.msra.mxu0 0.0
    %1471 = vmatprep.subr.mxu0 0.0
    %1472 = vmatpush1.msra.mxu0 0.0
    %1473 = vmatprep.subr.mxu0 0.0
    %1474 = vmatpush1.msra.mxu0 0.0
    %1475 = vmatprep.subr.mxu0 0.0
    %1476 = vmatpush1.msra.mxu0 0.0
    %1477 = vmatprep.subr.mxu0 0.0
    %1478 = vmatpush1.msra.mxu0 0.0
    %1479 = vmatprep.subr.mxu0 0.0
    %1480 = vmatpush1.msra.mxu0 0.0
    %1481 = vmatprep.subr.mxu0 0.0
    %1482 = vmatpush1.msra.mxu0 0.0
    %1483 = vmatprep.subr.mxu0 0.0
    %v1484 = vand.u32 %v79, 4294901760
    %v1485 = vsub.f32 %v79, %v1484
    %v1486 = vand.u32 %v1485, 4294901760
    %1487 = vmatpush1.msra.mxu0 %v1486
    %1488 = vmatprep.subr.mxu0 0.0
    %v1489 = vand.u32 %v78, 4294901760
    %v1490 = vsub.f32 %v78, %v1489
    %v1491 = vand.u32 %v1490, 4294901760
    %1492 = vmatpush1.msra.mxu0 %v1491
    %1493 = vmatprep.subr.mxu0 0.0
    %1494 = vmatpush2.msra.mxu0 0.0
    %1495 = vmatprep.subr.mxu0 0.0
    %1496 = vmatpush2.msra.mxu0 0.0
    %1497 = vmatprep.subr.mxu0 0.0
    %1498 = vmatpush2.msra.mxu0 0.0
    %1499 = vmatprep.subr.mxu0 0.0
    %1500 = vmatpush2.msra.mxu0 0.0
    %1501 = vmatprep.subr.mxu0 0.0
    %1502 = vmatpush2.msra.mxu0 0.0
    %1503 = vmatprep.subr.mxu0 0.0
    %1504 = vmatpush2.msra.mxu0 0.0
    %1505 = vmatprep.subr.mxu0 0.0
    %1506 = vmatpush2.msra.mxu0 0.0
    %1507 = vmatprep.subr.mxu0 0.0
    %1508 = vmatpush2.msra.mxu0 0.0
    %1509 = vmatprep.subr.mxu0 0.0
    %1510 = vmatpush2.msra.mxu0 0.0
    %1511 = vmatprep.subr.mxu0 0.0
    %1512 = vmatpush2.msra.mxu0 0.0
    %1513 = vmatprep.subr.mxu0 0.0
    %1514 = vmatpush2.msra.mxu0 0.0
    %1515 = vmatprep.subr.mxu0 0.0
    %1516 = vmatpush2.msra.mxu0 0.0
    %1517 = vmatprep.subr.mxu0 0.0
    %1518 = vmatpush2.msra.mxu0 0.0
    %1519 = vmatprep.subr.mxu0 0.0
    %1520 = vmatpush2.msra.mxu0 0.0
    %1521 = vmatprep.subr.mxu0 0.0
    %1522 = vmatpush2.msra.mxu0 0.0
    %1523 = vmatprep.subr.mxu0 0.0
    %1524 = vmatpush2.msra.mxu0 0.0
    %1525 = vmatprep.mubr.f32.mxu0 0.0
    %v1526 = vand.u32 %v1144, 4294901760
    %1527 = vmatmul.mubr.f32.gmra.mxu0 %v1526
    %v1528 = vpop.f32.mrf.mxu0
    %v1529 = vadd.f32 %v1452, %v1528
    %v1530 = vpop.f32.mrf.mxu0
    %1531 = vdwg.mxu0
    %1532 = vmatprep.subr.mxu0 0.0
    %1533 = vmatpush1.msra.mxu0 0.0
    %1534 = vmatprep.subr.mxu0 0.0
    %1535 = vmatpush1.msra.mxu0 0.0
    %1536 = vmatprep.subr.mxu0 0.0
    %1537 = vmatpush1.msra.mxu0 0.0
    %1538 = vmatprep.subr.mxu0 0.0
    %1539 = vmatpush1.msra.mxu0 0.0
    %1540 = vmatprep.subr.mxu0 0.0
    %1541 = vmatpush1.msra.mxu0 0.0
    %1542 = vmatprep.subr.mxu0 0.0
    %1543 = vmatpush1.msra.mxu0 0.0
    %1544 = vmatprep.subr.mxu0 0.0
    %1545 = vmatpush1.msra.mxu0 0.0
    %1546 = vmatprep.subr.mxu0 0.0
    %1547 = vmatpush1.msra.mxu0 0.0
    %1548 = vmatprep.subr.mxu0 0.0
    %1549 = vmatpush1.msra.mxu0 0.0
    %1550 = vmatprep.subr.mxu0 0.0
    %1551 = vmatpush1.msra.mxu0 0.0
    %1552 = vmatprep.subr.mxu0 0.0
    %1553 = vmatpush1.msra.mxu0 0.0
    %1554 = vmatprep.subr.mxu0 0.0
    %1555 = vmatpush1.msra.mxu0 0.0
    %1556 = vmatprep.subr.mxu0 0.0
    %1557 = vmatpush1.msra.mxu0 0.0
    %1558 = vmatprep.subr.mxu0 0.0
    %1559 = vmatpush1.msra.mxu0 0.0
    %1560 = vmatprep.subr.mxu0 0.0
    %v1561 = vand.u32 %v79, 4294901760
    %1562 = vmatpush1.msra.mxu0 %v1561
    %1563 = vmatprep.subr.mxu0 0.0
    %v1564 = vand.u32 %v78, 4294901760
    %1565 = vmatpush1.msra.mxu0 %v1564
    %1566 = vmatprep.subr.mxu0 0.0
    %1567 = vmatpush2.msra.mxu0 0.0
    %1568 = vmatprep.subr.mxu0 0.0
    %1569 = vmatpush2.msra.mxu0 0.0
    %1570 = vmatprep.subr.mxu0 0.0
    %1571 = vmatpush2.msra.mxu0 0.0
    %1572 = vmatprep.subr.mxu0 0.0
    %1573 = vmatpush2.msra.mxu0 0.0
    %1574 = vmatprep.subr.mxu0 0.0
    %1575 = vmatpush2.msra.mxu0 0.0
    %1576 = vmatprep.subr.mxu0 0.0
    %1577 = vmatpush2.msra.mxu0 0.0
    %1578 = vmatprep.subr.mxu0 0.0
    %1579 = vmatpush2.msra.mxu0 0.0
    %1580 = vmatprep.subr.mxu0 0.0
    %1581 = vmatpush2.msra.mxu0 0.0
    %1582 = vmatprep.subr.mxu0 0.0
    %1583 = vmatpush2.msra.mxu0 0.0
    %1584 = vmatprep.subr.mxu0 0.0
    %1585 = vmatpush2.msra.mxu0 0.0
    %1586 = vmatprep.subr.mxu0 0.0
    %1587 = vmatpush2.msra.mxu0 0.0
    %1588 = vmatprep.subr.mxu0 0.0
    %1589 = vmatpush2.msra.mxu0 0.0
    %1590 = vmatprep.subr.mxu0 0.0
    %1591 = vmatpush2.msra.mxu0 0.0
    %1592 = vmatprep.subr.mxu0 0.0
    %1593 = vmatpush2.msra.mxu0 0.0
    %1594 = vmatprep.subr.mxu0 0.0
    %1595 = vmatpush2.msra.mxu0 0.0
    %1596 = vmatprep.subr.mxu0 0.0
    %1597 = vmatpush2.msra.mxu0 0.0
    %1598 = vmatprep.mubr.f32.mxu0 0.0
    %v1599 = vand.u32 %v1144, 4294901760
    %1600 = vmatmul.mubr.f32.gmra.mxu0 %v1599
    %v1601 = vpop.f32.mrf.mxu0
    %v1602 = vadd.f32 %v1529, %v1601
    %v1603 = vpop.f32.mrf.mxu0
    %1604 = vdwg.mxu0
    %v1605 = vadd.f32 %v1602, %v1074
    %v1606 = vxor.u32 %v1605, 2147483648
    %v1607 = vmul.f32 %v1606, 1.442695
    %v1608 = vpow.pop %v1607
    %v1609 = vadd.f32 %v1608, 1.0
    %v1610 = vrcp.pop %v1609
    %v1611 = vmul.f32 1.0, %v1610
    %v1612 = vtanh.pop %v1605
    %1614 = vrot.lane.b32.xlu0 %v1141, 16
    %v1615 = vpop.permute.xlu0 %1614
    %v1617 = vmul.f32 %v1611, %v1615
    %1619 = vrot.lane.b32.xlu0 %v1612, 96
    %v1620 = vpop.permute.xlu0 %1619
    %v1622 = vmul.f32 %v1611, %v1620
    %1624 = vrot.lane.b32.xlu0 %v1622, 16
    %v1625 = vpop.permute.xlu0 %1624
    %v1627 = vadd.f32 %v1617, %v1625
    %v1628 = vtanh.pop %v1627
    %1630 = vrot.lane.b32.xlu0 %v1628, 32
    %v1631 = vpop.permute.xlu0 %1630
    %v1633 = vmul.f32 %v1611, %v1631
    %1635 = vrot.lane.b32.xlu0 %v1633, 80
    %v1636 = vpop.permute.xlu0 %1635
    %v1637 = vsel %vm1142, %v1636, 0
    %1639 = vmatprep.subr.mxu0 0.0
    %1640 = vmatpush1.msra.mxu0 0.0
    %1641 = vmatprep.subr.mxu0 0.0
    %1642 = vmatpush1.msra.mxu0 0.0
    %1643 = vmatprep.subr.mxu0 0.0
    %1644 = vmatpush1.msra.mxu0 0.0
    %1645 = vmatprep.subr.mxu0 0.0
    %1646 = vmatpush1.msra.mxu0 0.0
    %1647 = vmatprep.subr.mxu0 0.0
    %1648 = vmatpush1.msra.mxu0 0.0
    %1649 = vmatprep.subr.mxu0 0.0
    %1650 = vmatpush1.msra.mxu0 0.0
    %1651 = vmatprep.subr.mxu0 0.0
    %1652 = vmatpush1.msra.mxu0 0.0
    %1653 = vmatprep.subr.mxu0 0.0
    %1654 = vmatpush1.msra.mxu0 0.0
    %1655 = vmatprep.subr.mxu0 0.0
    %1656 = vmatpush1.msra.mxu0 0.0
    %1657 = vmatprep.subr.mxu0 0.0
    %1658 = vmatpush1.msra.mxu0 0.0
    %1659 = vmatprep.subr.mxu0 0.0
    %1660 = vmatpush1.msra.mxu0 0.0
    %1661 = vmatprep.subr.mxu0 0.0
    %1662 = vmatpush1.msra.mxu0 0.0
    %1663 = vmatprep.subr.mxu0 0.0
    %1664 = vmatpush1.msra.mxu0 0.0
    %1665 = vmatprep.subr.mxu0 0.0
    %1666 = vmatpush1.msra.mxu0 0.0
    %1667 = vmatprep.subr.mxu0 0.0
    %v1668 = vand.u32 %v79, 4294901760
    %1669 = vmatpush1.msra.mxu0 %v1668
    %1670 = vmatprep.subr.mxu0 0.0
    %v1671 = vand.u32 %v78, 4294901760
    %1672 = vmatpush1.msra.mxu0 %v1671
    %1673 = vmatprep.subr.mxu0 0.0
    %1674 = vmatpush2.msra.mxu0 0.0
    %1675 = vmatprep.subr.mxu0 0.0
    %1676 = vmatpush2.msra.mxu0 0.0
    %1677 = vmatprep.subr.mxu0 0.0
    %1678 = vmatpush2.msra.mxu0 0.0
    %1679 = vmatprep.subr.mxu0 0.0
    %1680 = vmatpush2.msra.mxu0 0.0
    %1681 = vmatprep.subr.mxu0 0.0
    %1682 = vmatpush2.msra.mxu0 0.0
    %1683 = vmatprep.subr.mxu0 0.0
    %1684 = vmatpush2.msra.mxu0 0.0
    %1685 = vmatprep.subr.mxu0 0.0
    %1686 = vmatpush2.msra.mxu0 0.0
    %1687 = vmatprep.subr.mxu0 0.0
    %1688 = vmatpush2.msra.mxu0 0.0
    %1689 = vmatprep.subr.mxu0 0.0
    %1690 = vmatpush2.msra.mxu0 0.0
    %1691 = vmatprep.subr.mxu0 0.0
    %1692 = vmatpush2.msra.mxu0 0.0
    %1693 = vmatprep.subr.mxu0 0.0
    %1694 = vmatpush2.msra.mxu0 0.0
    %1695 = vmatprep.subr.mxu0 0.0
    %1696 = vmatpush2.msra.mxu0 0.0
    %1697 = vmatprep.subr.mxu0 0.0
    %1698 = vmatpush2.msra.mxu0 0.0
    %1699 = vmatprep.subr.mxu0 0.0
    %1700 = vmatpush2.msra.mxu0 0.0
    %1701 = vmatprep.subr.mxu0 0.0
    %1702 = vmatpush2.msra.mxu0 0.0
    %1703 = vmatprep.subr.mxu0 0.0
    %1704 = vmatpush2.msra.mxu0 0.0
    %1705 = vmatprep.mubr.f32.mxu0 0.0
    %v1706 = vand.u32 %v1637, 4294901760
    %v1707 = vsub.f32 %v1637, %v1706
    %v1708 = vand.u32 %v1707, 4294901760
    %v1709 = vsub.f32 %v1707, %v1708
    %v1710 = vand.u32 %v1709, 4294901760
    %1711 = vmatmul.mubr.f32.gmra.mxu0 %v1710
    %v1712 = vpop.f32.mrf.mxu0
    %v1713 = vadd.f32 0.0, %v1712
    %v1714 = vpop.f32.mrf.mxu0
    %1715 = vdwg.mxu0
    %1716 = vmatprep.subr.mxu0 0.0
    %1717 = vmatpush1.msra.mxu0 0.0
    %1718 = vmatprep.subr.mxu0 0.0
    %1719 = vmatpush1.msra.mxu0 0.0
    %1720 = vmatprep.subr.mxu0 0.0
    %1721 = vmatpush1.msra.mxu0 0.0
    %1722 = vmatprep.subr.mxu0 0.0
    %1723 = vmatpush1.msra.mxu0 0.0
    %1724 = vmatprep.subr.mxu0 0.0
    %1725 = vmatpush1.msra.mxu0 0.0
    %1726 = vmatprep.subr.mxu0 0.0
    %1727 = vmatpush1.msra.mxu0 0.0
    %1728 = vmatprep.subr.mxu0 0.0
    %1729 = vmatpush1.msra.mxu0 0.0
    %1730 = vmatprep.subr.mxu0 0.0
    %1731 = vmatpush1.msra.mxu0 0.0
    %1732 = vmatprep.subr.mxu0 0.0
    %1733 = vmatpush1.msra.mxu0 0.0
    %1734 = vmatprep.subr.mxu0 0.0
    %1735 = vmatpush1.msra.mxu0 0.0
    %1736 = vmatprep.subr.mxu0 0.0
    %1737 = vmatpush1.msra.mxu0 0.0
    %1738 = vmatprep.subr.mxu0 0.0
    %1739 = vmatpush1.msra.mxu0 0.0
    %1740 = vmatprep.subr.mxu0 0.0
    %1741 = vmatpush1.msra.mxu0 0.0
    %1742 = vmatprep.subr.mxu0 0.0
    %1743 = vmatpush1.msra.mxu0 0.0
    %1744 = vmatprep.subr.mxu0 0.0
    %v1745 = vand.u32 %v79, 4294901760
    %v1746 = vsub.f32 %v79, %v1745
    %v1747 = vand.u32 %v1746, 4294901760
    %v1748 = vsub.f32 %v1746, %v1747
    %v1749 = vand.u32 %v1748, 4294901760
    %1750 = vmatpush1.msra.mxu0 %v1749
    %1751 = vmatprep.subr.mxu0 0.0
    %v1752 = vand.u32 %v78, 4294901760
    %v1753 = vsub.f32 %v78, %v1752
    %v1754 = vand.u32 %v1753, 4294901760
    %v1755 = vsub.f32 %v1753, %v1754
    %v1756 = vand.u32 %v1755, 4294901760
    %1757 = vmatpush1.msra.mxu0 %v1756
    %1758 = vmatprep.subr.mxu0 0.0
    %1759 = vmatpush2.msra.mxu0 0.0
    %1760 = vmatprep.subr.mxu0 0.0
    %1761 = vmatpush2.msra.mxu0 0.0
    %1762 = vmatprep.subr.mxu0 0.0
    %1763 = vmatpush2.msra.mxu0 0.0
    %1764 = vmatprep.subr.mxu0 0.0
    %1765 = vmatpush2.msra.mxu0 0.0
    %1766 = vmatprep.subr.mxu0 0.0
    %1767 = vmatpush2.msra.mxu0 0.0
    %1768 = vmatprep.subr.mxu0 0.0
    %1769 = vmatpush2.msra.mxu0 0.0
    %1770 = vmatprep.subr.mxu0 0.0
    %1771 = vmatpush2.msra.mxu0 0.0
    %1772 = vmatprep.subr.mxu0 0.0
    %1773 = vmatpush2.msra.mxu0 0.0
    %1774 = vmatprep.subr.mxu0 0.0
    %1775 = vmatpush2.msra.mxu0 0.0
    %1776 = vmatprep.subr.mxu0 0.0
    %1777 = vmatpush2.msra.mxu0 0.0
    %1778 = vmatprep.subr.mxu0 0.0
    %1779 = vmatpush2.msra.mxu0 0.0
    %1780 = vmatprep.subr.mxu0 0.0
    %1781 = vmatpush2.msra.mxu0 0.0
    %1782 = vmatprep.subr.mxu0 0.0
    %1783 = vmatpush2.msra.mxu0 0.0
    %1784 = vmatprep.subr.mxu0 0.0
    %1785 = vmatpush2.msra.mxu0 0.0
    %1786 = vmatprep.subr.mxu0 0.0
    %1787 = vmatpush2.msra.mxu0 0.0
    %1788 = vmatprep.subr.mxu0 0.0
    %1789 = vmatpush2.msra.mxu0 0.0
    %1790 = vmatprep.mubr.f32.mxu0 0.0
    %v1791 = vand.u32 %v1637, 4294901760
    %1792 = vmatmul.mubr.f32.gmra.mxu0 %v1791
    %v1793 = vpop.f32.mrf.mxu0
    %v1794 = vadd.f32 %v1713, %v1793
    %v1795 = vpop.f32.mrf.mxu0
    %1796 = vdwg.mxu0
    %1797 = vmatprep.subr.mxu0 0.0
    %1798 = vmatpush1.msra.mxu0 0.0
    %1799 = vmatprep.subr.mxu0 0.0
    %1800 = vmatpush1.msra.mxu0 0.0
    %1801 = vmatprep.subr.mxu0 0.0
    %1802 = vmatpush1.msra.mxu0 0.0
    %1803 = vmatprep.subr.mxu0 0.0
    %1804 = vmatpush1.msra.mxu0 0.0
    %1805 = vmatprep.subr.mxu0 0.0
    %1806 = vmatpush1.msra.mxu0 0.0
    %1807 = vmatprep.subr.mxu0 0.0
    %1808 = vmatpush1.msra.mxu0 0.0
    %1809 = vmatprep.subr.mxu0 0.0
    %1810 = vmatpush1.msra.mxu0 0.0
    %1811 = vmatprep.subr.mxu0 0.0
    %1812 = vmatpush1.msra.mxu0 0.0
    %1813 = vmatprep.subr.mxu0 0.0
    %1814 = vmatpush1.msra.mxu0 0.0
    %1815 = vmatprep.subr.mxu0 0.0
    %1816 = vmatpush1.msra.mxu0 0.0
    %1817 = vmatprep.subr.mxu0 0.0
    %1818 = vmatpush1.msra.mxu0 0.0
    %1819 = vmatprep.subr.mxu0 0.0
    %1820 = vmatpush1.msra.mxu0 0.0
    %1821 = vmatprep.subr.mxu0 0.0
    %1822 = vmatpush1.msra.mxu0 0.0
    %1823 = vmatprep.subr.mxu0 0.0
    %1824 = vmatpush1.msra.mxu0 0.0
    %1825 = vmatprep.subr.mxu0 0.0
    %v1826 = vand.u32 %v79, 4294901760
    %v1827 = vsub.f32 %v79, %v1826
    %1828 = vmatpush1.msra.mxu0 %v1827
    %1829 = vmatprep.subr.mxu0 0.0
    %v1830 = vand.u32 %v78, 4294901760
    %v1831 = vsub.f32 %v78, %v1830
    %1832 = vmatpush1.msra.mxu0 %v1831
    %1833 = vmatprep.subr.mxu0 0.0
    %1834 = vmatpush2.msra.mxu0 0.0
    %1835 = vmatprep.subr.mxu0 0.0
    %1836 = vmatpush2.msra.mxu0 0.0
    %1837 = vmatprep.subr.mxu0 0.0
    %1838 = vmatpush2.msra.mxu0 0.0
    %1839 = vmatprep.subr.mxu0 0.0
    %1840 = vmatpush2.msra.mxu0 0.0
    %1841 = vmatprep.subr.mxu0 0.0
    %1842 = vmatpush2.msra.mxu0 0.0
    %1843 = vmatprep.subr.mxu0 0.0
    %1844 = vmatpush2.msra.mxu0 0.0
    %1845 = vmatprep.subr.mxu0 0.0
    %1846 = vmatpush2.msra.mxu0 0.0
    %1847 = vmatprep.subr.mxu0 0.0
    %1848 = vmatpush2.msra.mxu0 0.0
    %1849 = vmatprep.subr.mxu0 0.0
    %1850 = vmatpush2.msra.mxu0 0.0
    %1851 = vmatprep.subr.mxu0 0.0
    %1852 = vmatpush2.msra.mxu0 0.0
    %1853 = vmatprep.subr.mxu0 0.0
    %1854 = vmatpush2.msra.mxu0 0.0
    %1855 = vmatprep.subr.mxu0 0.0
    %1856 = vmatpush2.msra.mxu0 0.0
    %1857 = vmatprep.subr.mxu0 0.0
    %1858 = vmatpush2.msra.mxu0 0.0
    %1859 = vmatprep.subr.mxu0 0.0
    %1860 = vmatpush2.msra.mxu0 0.0
    %1861 = vmatprep.subr.mxu0 0.0
    %1862 = vmatpush2.msra.mxu0 0.0
    %1863 = vmatprep.subr.mxu0 0.0
    %1864 = vmatpush2.msra.mxu0 0.0
    %1865 = vmatprep.mubr.f32.mxu0 0.0
    %v1866 = vand.u32 %v1637, 4294901760
    %v1867 = vsub.f32 %v1637, %v1866
    %1868 = vmatmul.mubr.f32.gmra.mxu0 %v1867
    %v1869 = vpop.f32.mrf.mxu0
    %v1870 = vadd.f32 %v1794, %v1869
    %v1871 = vpop.f32.mrf.mxu0
    %1872 = vdwg.mxu0
    %1873 = vmatprep.subr.mxu0 0.0
    %1874 = vmatpush1.msra.mxu0 0.0
    %1875 = vmatprep.subr.mxu0 0.0
    %1876 = vmatpush1.msra.mxu0 0.0
    %1877 = vmatprep.subr.mxu0 0.0
    %1878 = vmatpush1.msra.mxu0 0.0
    %1879 = vmatprep.subr.mxu0 0.0
    %1880 = vmatpush1.msra.mxu0 0.0
    %1881 = vmatprep.subr.mxu0 0.0
    %1882 = vmatpush1.msra.mxu0 0.0
    %1883 = vmatprep.subr.mxu0 0.0
    %1884 = vmatpush1.msra.mxu0 0.0
    %1885 = vmatprep.subr.mxu0 0.0
    %1886 = vmatpush1.msra.mxu0 0.0
    %1887 = vmatprep.subr.mxu0 0.0
    %1888 = vmatpush1.msra.mxu0 0.0
    %1889 = vmatprep.subr.mxu0 0.0
    %1890 = vmatpush1.msra.mxu0 0.0
    %1891 = vmatprep.subr.mxu0 0.0
    %1892 = vmatpush1.msra.mxu0 0.0
    %1893 = vmatprep.subr.mxu0 0.0
    %1894 = vmatpush1.msra.mxu0 0.0
    %1895 = vmatprep.subr.mxu0 0.0
    %1896 = vmatpush1.msra.mxu0 0.0
    %1897 = vmatprep.subr.mxu0 0.0
    %1898 = vmatpush1.msra.mxu0 0.0
    %1899 = vmatprep.subr.mxu0 0.0
    %1900 = vmatpush1.msra.mxu0 0.0
    %1901 = vmatprep.subr.mxu0 0.0
    %v1902 = vand.u32 %v79, 4294901760
    %1903 = vmatpush1.msra.mxu0 %v1902
    %1904 = vmatprep.subr.mxu0 0.0
    %v1905 = vand.u32 %v78, 4294901760
    %1906 = vmatpush1.msra.mxu0 %v1905
    %1907 = vmatprep.subr.mxu0 0.0
    %1908 = vmatpush2.msra.mxu0 0.0
    %1909 = vmatprep.subr.mxu0 0.0
    %1910 = vmatpush2.msra.mxu0 0.0
    %1911 = vmatprep.subr.mxu0 0.0
    %1912 = vmatpush2.msra.mxu0 0.0
    %1913 = vmatprep.subr.mxu0 0.0
    %1914 = vmatpush2.msra.mxu0 0.0
    %1915 = vmatprep.subr.mxu0 0.0
    %1916 = vmatpush2.msra.mxu0 0.0
    %1917 = vmatprep.subr.mxu0 0.0
    %1918 = vmatpush2.msra.mxu0 0.0
    %1919 = vmatprep.subr.mxu0 0.0
    %1920 = vmatpush2.msra.mxu0 0.0
    %1921 = vmatprep.subr.mxu0 0.0
    %1922 = vmatpush2.msra.mxu0 0.0
    %1923 = vmatprep.subr.mxu0 0.0
    %1924 = vmatpush2.msra.mxu0 0.0
    %1925 = vmatprep.subr.mxu0 0.0
    %1926 = vmatpush2.msra.mxu0 0.0
    %1927 = vmatprep.subr.mxu0 0.0
    %1928 = vmatpush2.msra.mxu0 0.0
    %1929 = vmatprep.subr.mxu0 0.0
    %1930 = vmatpush2.msra.mxu0 0.0
    %1931 = vmatprep.subr.mxu0 0.0
    %1932 = vmatpush2.msra.mxu0 0.0
    %1933 = vmatprep.subr.mxu0 0.0
    %1934 = vmatpush2.msra.mxu0 0.0
    %1935 = vmatprep.subr.mxu0 0.0
    %1936 = vmatpush2.msra.mxu0 0.0
    %1937 = vmatprep.subr.mxu0 0.0
    %1938 = vmatpush2.msra.mxu0 0.0
    %1939 = vmatprep.mubr.f32.mxu0 0.0
    %v1940 = vand.u32 %v1637, 4294901760
    %v1941 = vsub.f32 %v1637, %v1940
    %v1942 = vand.u32 %v1941, 4294901760
    %1943 = vmatmul.mubr.f32.gmra.mxu0 %v1942
    %v1944 = vpop.f32.mrf.mxu0
    %v1945 = vadd.f32 %v1870, %v1944
    %v1946 = vpop.f32.mrf.mxu0
    %1947 = vdwg.mxu0
    %1948 = vmatprep.subr.mxu0 0.0
    %1949 = vmatpush1.msra.mxu0 0.0
    %1950 = vmatprep.subr.mxu0 0.0
    %1951 = vmatpush1.msra.mxu0 0.0
    %1952 = vmatprep.subr.mxu0 0.0
    %1953 = vmatpush1.msra.mxu0 0.0
    %1954 = vmatprep.subr.mxu0 0.0
    %1955 = vmatpush1.msra.mxu0 0.0
    %1956 = vmatprep.subr.mxu0 0.0
    %1957 = vmatpush1.msra.mxu0 0.0
    %1958 = vmatprep.subr.mxu0 0.0
    %1959 = vmatpush1.msra.mxu0 0.0
    %1960 = vmatprep.subr.mxu0 0.0
    %1961 = vmatpush1.msra.mxu0 0.0
    %1962 = vmatprep.subr.mxu0 0.0
    %1963 = vmatpush1.msra.mxu0 0.0
    %1964 = vmatprep.subr.mxu0 0.0
    %1965 = vmatpush1.msra.mxu0 0.0
    %1966 = vmatprep.subr.mxu0 0.0
    %1967 = vmatpush1.msra.mxu0 0.0
    %1968 = vmatprep.subr.mxu0 0.0
    %1969 = vmatpush1.msra.mxu0 0.0
    %1970 = vmatprep.subr.mxu0 0.0
    %1971 = vmatpush1.msra.mxu0 0.0
    %1972 = vmatprep.subr.mxu0 0.0
    %1973 = vmatpush1.msra.mxu0 0.0
    %1974 = vmatprep.subr.mxu0 0.0
    %1975 = vmatpush1.msra.mxu0 0.0
    %1976 = vmatprep.subr.mxu0 0.0
    %v1977 = vand.u32 %v79, 4294901760
    %v1978 = vsub.f32 %v79, %v1977
    %v1979 = vand.u32 %v1978, 4294901760
    %1980 = vmatpush1.msra.mxu0 %v1979
    %1981 = vmatprep.subr.mxu0 0.0
    %v1982 = vand.u32 %v78, 4294901760
    %v1983 = vsub.f32 %v78, %v1982
    %v1984 = vand.u32 %v1983, 4294901760
    %1985 = vmatpush1.msra.mxu0 %v1984
    %1986 = vmatprep.subr.mxu0 0.0
    %1987 = vmatpush2.msra.mxu0 0.0
    %1988 = vmatprep.subr.mxu0 0.0
    %1989 = vmatpush2.msra.mxu0 0.0
    %1990 = vmatprep.subr.mxu0 0.0
    %1991 = vmatpush2.msra.mxu0 0.0
    %1992 = vmatprep.subr.mxu0 0.0
    %1993 = vmatpush2.msra.mxu0 0.0
    %1994 = vmatprep.subr.mxu0 0.0
    %1995 = vmatpush2.msra.mxu0 0.0
    %1996 = vmatprep.subr.mxu0 0.0
    %1997 = vmatpush2.msra.mxu0 0.0
    %1998 = vmatprep.subr.mxu0 0.0
    %1999 = vmatpush2.msra.mxu0 0.0
    %2000 = vmatprep.subr.mxu0 0.0
    %2001 = vmatpush2.msra.mxu0 0.0
    %2002 = vmatprep.subr.mxu0 0.0
    %2003 = vmatpush2.msra.mxu0 0.0
    %2004 = vmatprep.subr.mxu0 0.0
    %2005 = vmatpush2.msra.mxu0 0.0
    %2006 = vmatprep.subr.mxu0 0.0
    %2007 = vmatpush2.msra.mxu0 0.0
    %2008 = vmatprep.subr.mxu0 0.0
    %2009 = vmatpush2.msra.mxu0 0.0
    %2010 = vmatprep.subr.mxu0 0.0
    %2011 = vmatpush2.msra.mxu0 0.0
    %2012 = vmatprep.subr.mxu0 0.0
    %2013 = vmatpush2.msra.mxu0 0.0
    %2014 = vmatprep.subr.mxu0 0.0
    %2015 = vmatpush2.msra.mxu0 0.0
    %2016 = vmatprep.subr.mxu0 0.0
    %2017 = vmatpush2.msra.mxu0 0.0
    %2018 = vmatprep.mubr.f32.mxu0 0.0
    %v2019 = vand.u32 %v1637, 4294901760
    %2020 = vmatmul.mubr.f32.gmra.mxu0 %v2019
    %v2021 = vpop.f32.mrf.mxu0
    %v2022 = vadd.f32 %v1945, %v2021
    %v2023 = vpop.f32.mrf.mxu0
    %2024 = vdwg.mxu0
    %2025 = vmatprep.subr.mxu0 0.0
    %2026 = vmatpush1.msra.mxu0 0.0
    %2027 = vmatprep.subr.mxu0 0.0
    %2028 = vmatpush1.msra.mxu0 0.0
    %2029 = vmatprep.subr.mxu0 0.0
    %2030 = vmatpush1.msra.mxu0 0.0
    %2031 = vmatprep.subr.mxu0 0.0
    %2032 = vmatpush1.msra.mxu0 0.0
    %2033 = vmatprep.subr.mxu0 0.0
    %2034 = vmatpush1.msra.mxu0 0.0
    %2035 = vmatprep.subr.mxu0 0.0
    %2036 = vmatpush1.msra.mxu0 0.0
    %2037 = vmatprep.subr.mxu0 0.0
    %2038 = vmatpush1.msra.mxu0 0.0
    %2039 = vmatprep.subr.mxu0 0.0
    %2040 = vmatpush1.msra.mxu0 0.0
    %2041 = vmatprep.subr.mxu0 0.0
    %2042 = vmatpush1.msra.mxu0 0.0
    %2043 = vmatprep.subr.mxu0 0.0
    %2044 = vmatpush1.msra.mxu0 0.0
    %2045 = vmatprep.subr.mxu0 0.0
    %2046 = vmatpush1.msra.mxu0 0.0
    %2047 = vmatprep.subr.mxu0 0.0
    %2048 = vmatpush1.msra.mxu0 0.0
    %2049 = vmatprep.subr.mxu0 0.0
    %2050 = vmatpush1.msra.mxu0 0.0
    %2051 = vmatprep.subr.mxu0 0.0
    %2052 = vmatpush1.msra.mxu0 0.0
    %2053 = vmatprep.subr.mxu0 0.0
    %v2054 = vand.u32 %v79, 4294901760
    %2055 = vmatpush1.msra.mxu0 %v2054
    %2056 = vmatprep.subr.mxu0 0.0
    %v2057 = vand.u32 %v78, 4294901760
    %2058 = vmatpush1.msra.mxu0 %v2057
    %2059 = vmatprep.subr.mxu0 0.0
    %2060 = vmatpush2.msra.mxu0 0.0
    %2061 = vmatprep.subr.mxu0 0.0
    %2062 = vmatpush2.msra.mxu0 0.0
    %2063 = vmatprep.subr.mxu0 0.0
    %2064 = vmatpush2.msra.mxu0 0.0
    %2065 = vmatprep.subr.mxu0 0.0
    %2066 = vmatpush2.msra.mxu0 0.0
    %2067 = vmatprep.subr.mxu0 0.0
    %2068 = vmatpush2.msra.mxu0 0.0
    %2069 = vmatprep.subr.mxu0 0.0
    %2070 = vmatpush2.msra.mxu0 0.0
    %2071 = vmatprep.subr.mxu0 0.0
    %2072 = vmatpush2.msra.mxu0 0.0
    %2073 = vmatprep.subr.mxu0 0.0
    %2074 = vmatpush2.msra.mxu0 0.0
    %2075 = vmatprep.subr.mxu0 0.0
    %2076 = vmatpush2.msra.mxu0 0.0
    %2077 = vmatprep.subr.mxu0 0.0
    %2078 = vmatpush2.msra.mxu0 0.0
    %2079 = vmatprep.subr.mxu0 0.0
    %2080 = vmatpush2.msra.mxu0 0.0
    %2081 = vmatprep.subr.mxu0 0.0
    %2082 = vmatpush2.msra.mxu0 0.0
    %2083 = vmatprep.subr.mxu0 0.0
    %2084 = vmatpush2.msra.mxu0 0.0
    %2085 = vmatprep.subr.mxu0 0.0
    %2086 = vmatpush2.msra.mxu0 0.0
    %2087 = vmatprep.subr.mxu0 0.0
    %2088 = vmatpush2.msra.mxu0 0.0
    %2089 = vmatprep.subr.mxu0 0.0
    %2090 = vmatpush2.msra.mxu0 0.0
    %2091 = vmatprep.mubr.f32.mxu0 0.0
    %v2092 = vand.u32 %v1637, 4294901760
    %2093 = vmatmul.mubr.f32.gmra.mxu0 %v2092
    %v2094 = vpop.f32.mrf.mxu0
    %v2095 = vadd.f32 %v2022, %v2094
    %v2096 = vpop.f32.mrf.mxu0
    %2097 = vdwg.mxu0
    %v2098 = vadd.f32 %v2095, %v1079
    %v2099 = vxor.u32 %v2098, 2147483648
    %v2100 = vmul.f32 %v2099, 1.442695
    %v2101 = vpow.pop %v2100
    %v2102 = vadd.f32 %v2101, 1.0
    %v2103 = vrcp.pop %v2102
    %v2104 = vmul.f32 1.0, %v2103
    %v2105 = vtanh.pop %v2098
    %v2106 = vmul.f32 %v2104, %v1627
    %2108 = vrot.lane.b32.xlu0 %v2105, 96
    %v2109 = vpop.permute.xlu0 %2108
    %v2111 = vmul.f32 %v2104, %v2109
    %2113 = vrot.lane.b32.xlu0 %v2111, 16
    %v2114 = vpop.permute.xlu0 %2113
    %v2116 = vadd.f32 %v2106, %v2114
    %v2117 = vtanh.pop %v2116
    %2119 = vrot.lane.b32.xlu0 %v2117, 32
    %v2120 = vpop.permute.xlu0 %2119
    %v2122 = vmul.f32 %v2104, %v2120
    %2124 = vrot.lane.b32.xlu0 %v2122, 80
    %v2125 = vpop.permute.xlu0 %2124
    %v2126 = vsel %vm1142, %v2125, 0
    %2128 = vmatprep.subr.mxu0 0.0
    %2129 = vmatpush1.msra.mxu0 0.0
    %2130 = vmatprep.subr.mxu0 0.0
    %2131 = vmatpush1.msra.mxu0 0.0
    %2132 = vmatprep.subr.mxu0 0.0
    %2133 = vmatpush1.msra.mxu0 0.0
    %2134 = vmatprep.subr.mxu0 0.0
    %2135 = vmatpush1.msra.mxu0 0.0
    %2136 = vmatprep.subr.mxu0 0.0
    %2137 = vmatpush1.msra.mxu0 0.0
    %2138 = vmatprep.subr.mxu0 0.0
    %2139 = vmatpush1.msra.mxu0 0.0
    %2140 = vmatprep.subr.mxu0 0.0
    %2141 = vmatpush1.msra.mxu0 0.0
    %2142 = vmatprep.subr.mxu0 0.0
    %2143 = vmatpush1.msra.mxu0 0.0
    %2144 = vmatprep.subr.mxu0 0.0
    %2145 = vmatpush1.msra.mxu0 0.0
    %2146 = vmatprep.subr.mxu0 0.0
    %2147 = vmatpush1.msra.mxu0 0.0
    %2148 = vmatprep.subr.mxu0 0.0
    %2149 = vmatpush1.msra.mxu0 0.0
    %2150 = vmatprep.subr.mxu0 0.0
    %2151 = vmatpush1.msra.mxu0 0.0
    %2152 = vmatprep.subr.mxu0 0.0
    %2153 = vmatpush1.msra.mxu0 0.0
    %2154 = vmatprep.subr.mxu0 0.0
    %2155 = vmatpush1.msra.mxu0 0.0
    %2156 = vmatprep.subr.mxu0 0.0
    %v2157 = vand.u32 %v79, 4294901760
    %2158 = vmatpush1.msra.mxu0 %v2157
    %2159 = vmatprep.subr.mxu0 0.0
    %v2160 = vand.u32 %v78, 4294901760
    %2161 = vmatpush1.msra.mxu0 %v2160
    %2162 = vmatprep.subr.mxu0 0.0
    %2163 = vmatpush2.msra.mxu0 0.0
    %2164 = vmatprep.subr.mxu0 0.0
    %2165 = vmatpush2.msra.mxu0 0.0
    %2166 = vmatprep.subr.mxu0 0.0
    %2167 = vmatpush2.msra.mxu0 0.0
    %2168 = vmatprep.subr.mxu0 0.0
    %2169 = vmatpush2.msra.mxu0 0.0
    %2170 = vmatprep.subr.mxu0 0.0
    %2171 = vmatpush2.msra.mxu0 0.0
    %2172 = vmatprep.subr.mxu0 0.0
    %2173 = vmatpush2.msra.mxu0 0.0
    %2174 = vmatprep.subr.mxu0 0.0
    %2175 = vmatpush2.msra.mxu0 0.0
    %2176 = vmatprep.subr.mxu0 0.0
    %2177 = vmatpush2.msra.mxu0 0.0
    %2178 = vmatprep.subr.mxu0 0.0
    %2179 = vmatpush2.msra.mxu0 0.0
    %2180 = vmatprep.subr.mxu0 0.0
    %2181 = vmatpush2.msra.mxu0 0.0
    %2182 = vmatprep.subr.mxu0 0.0
    %2183 = vmatpush2.msra.mxu0 0.0
    %2184 = vmatprep.subr.mxu0 0.0
    %2185 = vmatpush2.msra.mxu0 0.0
    %2186 = vmatprep.subr.mxu0 0.0
    %2187 = vmatpush2.msra.mxu0 0.0
    %2188 = vmatprep.subr.mxu0 0.0
    %2189 = vmatpush2.msra.mxu0 0.0
    %2190 = vmatprep.subr.mxu0 0.0
    %2191 = vmatpush2.msra.mxu0 0.0
    %2192 = vmatprep.subr.mxu0 0.0
    %2193 = vmatpush2.msra.mxu0 0.0
    %2194 = vmatprep.mubr.f32.mxu0 0.0
    %v2195 = vand.u32 %v2126, 4294901760
    %v2196 = vsub.f32 %v2126, %v2195
    %v2197 = vand.u32 %v2196, 4294901760
    %v2198 = vsub.f32 %v2196, %v2197
    %v2199 = vand.u32 %v2198, 4294901760
    %2200 = vmatmul.mubr.f32.gmra.mxu0 %v2199
    %v2201 = vpop.f32.mrf.mxu0
    %v2202 = vadd.f32 0.0, %v2201
    %v2203 = vpop.f32.mrf.mxu0
    %2204 = vdwg.mxu0
    %2205 = vmatprep.subr.mxu0 0.0
    %2206 = vmatpush1.msra.mxu0 0.0
    %2207 = vmatprep.subr.mxu0 0.0
    %2208 = vmatpush1.msra.mxu0 0.0
    %2209 = vmatprep.subr.mxu0 0.0
    %2210 = vmatpush1.msra.mxu0 0.0
    %2211 = vmatprep.subr.mxu0 0.0
    %2212 = vmatpush1.msra.mxu0 0.0
    %2213 = vmatprep.subr.mxu0 0.0
    %2214 = vmatpush1.msra.mxu0 0.0
    %2215 = vmatprep.subr.mxu0 0.0
    %2216 = vmatpush1.msra.mxu0 0.0
    %2217 = vmatprep.subr.mxu0 0.0
    %2218 = vmatpush1.msra.mxu0 0.0
    %2219 = vmatprep.subr.mxu0 0.0
    %2220 = vmatpush1.msra.mxu0 0.0
    %2221 = vmatprep.subr.mxu0 0.0
    %2222 = vmatpush1.msra.mxu0 0.0
    %2223 = vmatprep.subr.mxu0 0.0
    %2224 = vmatpush1.msra.mxu0 0.0
    %2225 = vmatprep.subr.mxu0 0.0
    %2226 = vmatpush1.msra.mxu0 0.0
    %2227 = vmatprep.subr.mxu0 0.0
    %2228 = vmatpush1.msra.mxu0 0.0
    %2229 = vmatprep.subr.mxu0 0.0
    %2230 = vmatpush1.msra.mxu0 0.0
    %2231 = vmatprep.subr.mxu0 0.0
    %2232 = vmatpush1.msra.mxu0 0.0
    %2233 = vmatprep.subr.mxu0 0.0
    %v2234 = vand.u32 %v79, 4294901760
    %v2235 = vsub.f32 %v79, %v2234
    %v2236 = vand.u32 %v2235, 4294901760
    %v2237 = vsub.f32 %v2235, %v2236
    %v2238 = vand.u32 %v2237, 4294901760
    %2239 = vmatpush1.msra.mxu0 %v2238
    %2240 = vmatprep.subr.mxu0 0.0
    %v2241 = vand.u32 %v78, 4294901760
    %v2242 = vsub.f32 %v78, %v2241
    %v2243 = vand.u32 %v2242, 4294901760
    %v2244 = vsub.f32 %v2242, %v2243
    %v2245 = vand.u32 %v2244, 4294901760
    %2246 = vmatpush1.msra.mxu0 %v2245
    %2247 = vmatprep.subr.mxu0 0.0
    %2248 = vmatpush2.msra.mxu0 0.0
    %2249 = vmatprep.subr.mxu0 0.0
    %2250 = vmatpush2.msra.mxu0 0.0
    %2251 = vmatprep.subr.mxu0 0.0
    %2252 = vmatpush2.msra.mxu0 0.0
    %2253 = vmatprep.subr.mxu0 0.0
    %2254 = vmatpush2.msra.mxu0 0.0
    %2255 = vmatprep.subr.mxu0 0.0
    %2256 = vmatpush2.msra.mxu0 0.0
    %2257 = vmatprep.subr.mxu0 0.0
    %2258 = vmatpush2.msra.mxu0 0.0
    %2259 = vmatprep.subr.mxu0 0.0
    %2260 = vmatpush2.msra.mxu0 0.0
    %2261 = vmatprep.subr.mxu0 0.0
    %2262 = vmatpush2.msra.mxu0 0.0
    %2263 = vmatprep.subr.mxu0 0.0
    %2264 = vmatpush2.msra.mxu0 0.0
    %2265 = vmatprep.subr.mxu0 0.0
    %2266 = vmatpush2.msra.mxu0 0.0
    %2267 = vmatprep.subr.mxu0 0.0
    %2268 = vmatpush2.msra.mxu0 0.0
    %2269 = vmatprep.subr.mxu0 0.0
    %2270 = vmatpush2.msra.mxu0 0.0
    %2271 = vmatprep.subr.mxu0 0.0
    %2272 = vmatpush2.msra.mxu0 0.0
    %2273 = vmatprep.subr.mxu0 0.0
    %2274 = vmatpush2.msra.mxu0 0.0
    %2275 = vmatprep.subr.mxu0 0.0
    %2276 = vmatpush2.msra.mxu0 0.0
    %2277 = vmatprep.subr.mxu0 0.0
    %2278 = vmatpush2.msra.mxu0 0.0
    %2279 = vmatprep.mubr.f32.mxu0 0.0
    %v2280 = vand.u32 %v2126, 4294901760
    %2281 = vmatmul.mubr.f32.gmra.mxu0 %v2280
    %v2282 = vpop.f32.mrf.mxu0
    %v2283 = vadd.f32 %v2202, %v2282
    %v2284 = vpop.f32.mrf.mxu0
    %2285 = vdwg.mxu0
    %2286 = vmatprep.subr.mxu0 0.0
    %2287 = vmatpush1.msra.mxu0 0.0
    %2288 = vmatprep.subr.mxu0 0.0
    %2289 = vmatpush1.msra.mxu0 0.0
    %2290 = vmatprep.subr.mxu0 0.0
    %2291 = vmatpush1.msra.mxu0 0.0
    %2292 = vmatprep.subr.mxu0 0.0
    %2293 = vmatpush1.msra.mxu0 0.0
    %2294 = vmatprep.subr.mxu0 0.0
    %2295 = vmatpush1.msra.mxu0 0.0
    %2296 = vmatprep.subr.mxu0 0.0
    %2297 = vmatpush1.msra.mxu0 0.0
    %2298 = vmatprep.subr.mxu0 0.0
    %2299 = vmatpush1.msra.mxu0 0.0
    %2300 = vmatprep.subr.mxu0 0.0
    %2301 = vmatpush1.msra.mxu0 0.0
    %2302 = vmatprep.subr.mxu0 0.0
    %2303 = vmatpush1.msra.mxu0 0.0
    %2304 = vmatprep.subr.mxu0 0.0
    %2305 = vmatpush1.msra.mxu0 0.0
    %2306 = vmatprep.subr.mxu0 0.0
    %2307 = vmatpush1.msra.mxu0 0.0
    %2308 = vmatprep.subr.mxu0 0.0
    %2309 = vmatpush1.msra.mxu0 0.0
    %2310 = vmatprep.subr.mxu0 0.0
    %2311 = vmatpush1.msra.mxu0 0.0
    %2312 = vmatprep.subr.mxu0 0.0
    %2313 = vmatpush1.msra.mxu0 0.0
    %2314 = vmatprep.subr.mxu0 0.0
    %v2315 = vand.u32 %v79, 4294901760
    %v2316 = vsub.f32 %v79, %v2315
    %2317 = vmatpush1.msra.mxu0 %v2316
    %2318 = vmatprep.subr.mxu0 0.0
    %v2319 = vand.u32 %v78, 4294901760
    %v2320 = vsub.f32 %v78, %v2319
    %2321 = vmatpush1.msra.mxu0 %v2320
    %2322 = vmatprep.subr.mxu0 0.0
    %2323 = vmatpush2.msra.mxu0 0.0
    %2324 = vmatprep.subr.mxu0 0.0
    %2325 = vmatpush2.msra.mxu0 0.0
    %2326 = vmatprep.subr.mxu0 0.0
    %2327 = vmatpush2.msra.mxu0 0.0
    %2328 = vmatprep.subr.mxu0 0.0
    %2329 = vmatpush2.msra.mxu0 0.0
    %2330 = vmatprep.subr.mxu0 0.0
    %2331 = vmatpush2.msra.mxu0 0.0
    %2332 = vmatprep.subr.mxu0 0.0
    %2333 = vmatpush2.msra.mxu0 0.0
    %2334 = vmatprep.subr.mxu0 0.0
    %2335 = vmatpush2.msra.mxu0 0.0
    %2336 = vmatprep.subr.mxu0 0.0
    %2337 = vmatpush2.msra.mxu0 0.0
    %2338 = vmatprep.subr.mxu0 0.0
    %2339 = vmatpush2.msra.mxu0 0.0
    %2340 = vmatprep.subr.mxu0 0.0
    %2341 = vmatpush2.msra.mxu0 0.0
    %2342 = vmatprep.subr.mxu0 0.0
    %2343 = vmatpush2.msra.mxu0 0.0
    %2344 = vmatprep.subr.mxu0 0.0
    %2345 = vmatpush2.msra.mxu0 0.0
    %2346 = vmatprep.subr.mxu0 0.0
    %2347 = vmatpush2.msra.mxu0 0.0
    %2348 = vmatprep.subr.mxu0 0.0
    %2349 = vmatpush2.msra.mxu0 0.0
    %2350 = vmatprep.subr.mxu0 0.0
    %2351 = vmatpush2.msra.mxu0 0.0
    %2352 = vmatprep.subr.mxu0 0.0
    %2353 = vmatpush2.msra.mxu0 0.0
    %2354 = vmatprep.mubr.f32.mxu0 0.0
    %v2355 = vand.u32 %v2126, 4294901760
    %v2356 = vsub.f32 %v2126, %v2355
    %2357 = vmatmul.mubr.f32.gmra.mxu0 %v2356
    %v2358 = vpop.f32.mrf.mxu0
    %v2359 = vadd.f32 %v2283, %v2358
    %v2360 = vpop.f32.mrf.mxu0
    %2361 = vdwg.mxu0
    %2362 = vmatprep.subr.mxu0 0.0
    %2363 = vmatpush1.msra.mxu0 0.0
    %2364 = vmatprep.subr.mxu0 0.0
    %2365 = vmatpush1.msra.mxu0 0.0
    %2366 = vmatprep.subr.mxu0 0.0
    %2367 = vmatpush1.msra.mxu0 0.0
    %2368 = vmatprep.subr.mxu0 0.0
    %2369 = vmatpush1.msra.mxu0 0.0
    %2370 = vmatprep.subr.mxu0 0.0
    %2371 = vmatpush1.msra.mxu0 0.0
    %2372 = vmatprep.subr.mxu0 0.0
    %2373 = vmatpush1.msra.mxu0 0.0
    %2374 = vmatprep.subr.mxu0 0.0
    %2375 = vmatpush1.msra.mxu0 0.0
    %2376 = vmatprep.subr.mxu0 0.0
    %2377 = vmatpush1.msra.mxu0 0.0
    %2378 = vmatprep.subr.mxu0 0.0
    %2379 = vmatpush1.msra.mxu0 0.0
    %2380 = vmatprep.subr.mxu0 0.0
    %2381 = vmatpush1.msra.mxu0 0.0
    %2382 = vmatprep.subr.mxu0 0.0
    %2383 = vmatpush1.msra.mxu0 0.0
    %2384 = vmatprep.subr.mxu0 0.0
    %2385 = vmatpush1.msra.mxu0 0.0
    %2386 = vmatprep.subr.mxu0 0.0
    %2387 = vmatpush1.msra.mxu0 0.0
    %2388 = vmatprep.subr.mxu0 0.0
    %2389 = vmatpush1.msra.mxu0 0.0
    %2390 = vmatprep.subr.mxu0 0.0
    %v2391 = vand.u32 %v79, 4294901760
    %2392 = vmatpush1.msra.mxu0 %v2391
    %2393 = vmatprep.subr.mxu0 0.0
    %v2394 = vand.u32 %v78, 4294901760
    %2395 = vmatpush1.msra.mxu0 %v2394
    %2396 = vmatprep.subr.mxu0 0.0
    %2397 = vmatpush2.msra.mxu0 0.0
    %2398 = vmatprep.subr.mxu0 0.0
    %2399 = vmatpush2.msra.mxu0 0.0
    %2400 = vmatprep.subr.mxu0 0.0
    %2401 = vmatpush2.msra.mxu0 0.0
    %2402 = vmatprep.subr.mxu0 0.0
    %2403 = vmatpush2.msra.mxu0 0.0
    %2404 = vmatprep.subr.mxu0 0.0
    %2405 = vmatpush2.msra.mxu0 0.0
    %2406 = vmatprep.subr.mxu0 0.0
    %2407 = vmatpush2.msra.mxu0 0.0
    %2408 = vmatprep.subr.mxu0 0.0
    %2409 = vmatpush2.msra.mxu0 0.0
    %2410 = vmatprep.subr.mxu0 0.0
    %2411 = vmatpush2.msra.mxu0 0.0
    %2412 = vmatprep.subr.mxu0 0.0
    %2413 = vmatpush2.msra.mxu0 0.0
    %2414 = vmatprep.subr.mxu0 0.0
    %2415 = vmatpush2.msra.mxu0 0.0
    %2416 = vmatprep.subr.mxu0 0.0
    %2417 = vmatpush2.msra.mxu0 0.0
    %2418 = vmatprep.subr.mxu0 0.0
    %2419 = vmatpush2.msra.mxu0 0.0
    %2420 = vmatprep.subr.mxu0 0.0
    %2421 = vmatpush2.msra.mxu0 0.0
    %2422 = vmatprep.subr.mxu0 0.0
    %2423 = vmatpush2.msra.mxu0 0.0
    %2424 = vmatprep.subr.mxu0 0.0
    %2425 = vmatpush2.msra.mxu0 0.0
    %2426 = vmatprep.subr.mxu0 0.0
    %2427 = vmatpush2.msra.mxu0 0.0
    %2428 = vmatprep.mubr.f32.mxu0 0.0
    %v2429 = vand.u32 %v2126, 4294901760
    %v2430 = vsub.f32 %v2126, %v2429
    %v2431 = vand.u32 %v2430, 4294901760
    %2432 = vmatmul.mubr.f32.gmra.mxu0 %v2431
    %v2433 = vpop.f32.mrf.mxu0
    %v2434 = vadd.f32 %v2359, %v2433
    %v2435 = vpop.f32.mrf.mxu0
    %2436 = vdwg.mxu0
    %2437 = vmatprep.subr.mxu0 0.0
    %2438 = vmatpush1.msra.mxu0 0.0
    %2439 = vmatprep.subr.mxu0 0.0
    %2440 = vmatpush1.msra.mxu0 0.0
    %2441 = vmatprep.subr.mxu0 0.0
    %2442 = vmatpush1.msra.mxu0 0.0
    %2443 = vmatprep.subr.mxu0 0.0
    %2444 = vmatpush1.msra.mxu0 0.0
    %2445 = vmatprep.subr.mxu0 0.0
    %2446 = vmatpush1.msra.mxu0 0.0
    %2447 = vmatprep.subr.mxu0 0.0
    %2448 = vmatpush1.msra.mxu0 0.0
    %2449 = vmatprep.subr.mxu0 0.0
    %2450 = vmatpush1.msra.mxu0 0.0
    %2451 = vmatprep.subr.mxu0 0.0
    %2452 = vmatpush1.msra.mxu0 0.0
    %2453 = vmatprep.subr.mxu0 0.0
    %2454 = vmatpush1.msra.mxu0 0.0
    %2455 = vmatprep.subr.mxu0 0.0
    %2456 = vmatpush1.msra.mxu0 0.0
    %2457 = vmatprep.subr.mxu0 0.0
    %2458 = vmatpush1.msra.mxu0 0.0
    %2459 = vmatprep.subr.mxu0 0.0
    %2460 = vmatpush1.msra.mxu0 0.0
    %2461 = vmatprep.subr.mxu0 0.0
    %2462 = vmatpush1.msra.mxu0 0.0
    %2463 = vmatprep.subr.mxu0 0.0
    %2464 = vmatpush1.msra.mxu0 0.0
    %2465 = vmatprep.subr.mxu0 0.0
    %v2466 = vand.u32 %v79, 4294901760
    %v2467 = vsub.f32 %v79, %v2466
    %v2468 = vand.u32 %v2467, 4294901760
    %2469 = vmatpush1.msra.mxu0 %v2468
    %2470 = vmatprep.subr.mxu0 0.0
    %v2471 = vand.u32 %v78, 4294901760
    %v2472 = vsub.f32 %v78, %v2471
    %v2473 = vand.u32 %v2472, 4294901760
    %2474 = vmatpush1.msra.mxu0 %v2473
    %2475 = vmatprep.subr.mxu0 0.0
    %2476 = vmatpush2.msra.mxu0 0.0
    %2477 = vmatprep.subr.mxu0 0.0
    %2478 = vmatpush2.msra.mxu0 0.0
    %2479 = vmatprep.subr.mxu0 0.0
    %2480 = vmatpush2.msra.mxu0 0.0
    %2481 = vmatprep.subr.mxu0 0.0
    %2482 = vmatpush2.msra.mxu0 0.0
    %2483 = vmatprep.subr.mxu0 0.0
    %2484 = vmatpush2.msra.mxu0 0.0
    %2485 = vmatprep.subr.mxu0 0.0
    %2486 = vmatpush2.msra.mxu0 0.0
    %2487 = vmatprep.subr.mxu0 0.0
    %2488 = vmatpush2.msra.mxu0 0.0
    %2489 = vmatprep.subr.mxu0 0.0
    %2490 = vmatpush2.msra.mxu0 0.0
    %2491 = vmatprep.subr.mxu0 0.0
    %2492 = vmatpush2.msra.mxu0 0.0
    %2493 = vmatprep.subr.mxu0 0.0
    %2494 = vmatpush2.msra.mxu0 0.0
    %2495 = vmatprep.subr.mxu0 0.0
    %2496 = vmatpush2.msra.mxu0 0.0
    %2497 = vmatprep.subr.mxu0 0.0
    %2498 = vmatpush2.msra.mxu0 0.0
    %2499 = vmatprep.subr.mxu0 0.0
    %2500 = vmatpush2.msra.mxu0 0.0
    %2501 = vmatprep.subr.mxu0 0.0
    %2502 = vmatpush2.msra.mxu0 0.0
    %2503 = vmatprep.subr.mxu0 0.0
    %2504 = vmatpush2.msra.mxu0 0.0
    %2505 = vmatprep.subr.mxu0 0.0
    %2506 = vmatpush2.msra.mxu0 0.0
    %2507 = vmatprep.mubr.f32.mxu0 0.0
    %v2508 = vand.u32 %v2126, 4294901760
    %2509 = vmatmul.mubr.f32.gmra.mxu0 %v2508
    %v2510 = vpop.f32.mrf.mxu0
    %v2511 = vadd.f32 %v2434, %v2510
    %v2512 = vpop.f32.mrf.mxu0
    %2513 = vdwg.mxu0
    %2514 = vmatprep.subr.mxu0 0.0
    %2515 = vmatpush1.msra.mxu0 0.0
    %2516 = vmatprep.subr.mxu0 0.0
    %2517 = vmatpush1.msra.mxu0 0.0
    %2518 = vmatprep.subr.mxu0 0.0
    %2519 = vmatpush1.msra.mxu0 0.0
    %2520 = vmatprep.subr.mxu0 0.0
    %2521 = vmatpush1.msra.mxu0 0.0
    %2522 = vmatprep.subr.mxu0 0.0
    %2523 = vmatpush1.msra.mxu0 0.0
    %2524 = vmatprep.subr.mxu0 0.0
    %2525 = vmatpush1.msra.mxu0 0.0
    %2526 = vmatprep.subr.mxu0 0.0
    %2527 = vmatpush1.msra.mxu0 0.0
    %2528 = vmatprep.subr.mxu0 0.0
    %2529 = vmatpush1.msra.mxu0 0.0
    %2530 = vmatprep.subr.mxu0 0.0
    %2531 = vmatpush1.msra.mxu0 0.0
    %2532 = vmatprep.subr.mxu0 0.0
    %2533 = vmatpush1.msra.mxu0 0.0
    %2534 = vmatprep.subr.mxu0 0.0
    %2535 = vmatpush1.msra.mxu0 0.0
    %2536 = vmatprep.subr.mxu0 0.0
    %2537 = vmatpush1.msra.mxu0 0.0
    %2538 = vmatprep.subr.mxu0 0.0
    %2539 = vmatpush1.msra.mxu0 0.0
    %2540 = vmatprep.subr.mxu0 0.0
    %2541 = vmatpush1.msra.mxu0 0.0
    %2542 = vmatprep.subr.mxu0 0.0
    %v2543 = vand.u32 %v79, 4294901760
    %2544 = vmatpush1.msra.mxu0 %v2543
    %2545 = vmatprep.subr.mxu0 0.0
    %v2546 = vand.u32 %v78, 4294901760
    %2547 = vmatpush1.msra.mxu0 %v2546
    %2548 = vmatprep.subr.mxu0 0.0
    %2549 = vmatpush2.msra.mxu0 0.0
    %2550 = vmatprep.subr.mxu0 0.0
    %2551 = vmatpush2.msra.mxu0 0.0
    %2552 = vmatprep.subr.mxu0 0.0
    %2553 = vmatpush2.msra.mxu0 0.0
    %2554 = vmatprep.subr.mxu0 0.0
    %2555 = vmatpush2.msra.mxu0 0.0
    %2556 = vmatprep.subr.mxu0 0.0
    %2557 = vmatpush2.msra.mxu0 0.0
    %2558 = vmatprep.subr.mxu0 0.0
    %2559 = vmatpush2.msra.mxu0 0.0
    %2560 = vmatprep.subr.mxu0 0.0
    %2561 = vmatpush2.msra.mxu0 0.0
    %2562 = vmatprep.subr.mxu0 0.0
    %2563 = vmatpush2.msra.mxu0 0.0
    %2564 = vmatprep.subr.mxu0 0.0
    %2565 = vmatpush2.msra.mxu0 0.0
    %2566 = vmatprep.subr.mxu0 0.0
    %2567 = vmatpush2.msra.mxu0 0.0
    %2568 = vmatprep.subr.mxu0 0.0
    %2569 = vmatpush2.msra.mxu0 0.0
    %2570 = vmatprep.subr.mxu0 0.0
    %2571 = vmatpush2.msra.mxu0 0.0
    %2572 = vmatprep.subr.mxu0 0.0
    %2573 = vmatpush2.msra.mxu0 0.0
    %2574 = vmatprep.subr.mxu0 0.0
    %2575 = vmatpush2.msra.mxu0 0.0
    %2576 = vmatprep.subr.mxu0 0.0
    %2577 = vmatpush2.msra.mxu0 0.0
    %2578 = vmatprep.subr.mxu0 0.0
    %2579 = vmatpush2.msra.mxu0 0.0
    %2580 = vmatprep.mubr.f32.mxu0 0.0
    %v2581 = vand.u32 %v2126, 4294901760
    %2582 = vmatmul.mubr.f32.gmra.mxu0 %v2581
    %v2583 = vpop.f32.mrf.mxu0
    %v2584 = vadd.f32 %v2511, %v2583
    %v2585 = vpop.f32.mrf.mxu0
    %2586 = vdwg.mxu0
    %v2587 = vadd.f32 %v2584, %v1084
    %v2588 = vxor.u32 %v2587, 2147483648
    %v2589 = vmul.f32 %v2588, 1.442695
    %v2590 = vpow.pop %v2589
    %v2591 = vadd.f32 %v2590, 1.0
    %v2592 = vrcp.pop %v2591
    %v2593 = vmul.f32 1.0, %v2592
    %v2594 = vtanh.pop %v2587
    %v2595 = vmul.f32 %v2593, %v2116
    %2597 = vrot.lane.b32.xlu0 %v2594, 96
    %v2598 = vpop.permute.xlu0 %2597
    %v2600 = vmul.f32 %v2593, %v2598
    %2602 = vrot.lane.b32.xlu0 %v2600, 16
    %v2603 = vpop.permute.xlu0 %2602
    %v2605 = vadd.f32 %v2595, %v2603
    %v2606 = vtanh.pop %v2605
    %2608 = vrot.lane.b32.xlu0 %v2606, 32
    %v2609 = vpop.permute.xlu0 %2608
    %v2611 = vmul.f32 %v2593, %v2609
    %2613 = vrot.lane.b32.xlu0 %v2611, 80
    %v2614 = vpop.permute.xlu0 %2613
    %v2615 = vsel %vm1142, %v2614, 0
    %2617 = vmatprep.subr.mxu0 0.0
    %2618 = vmatpush1.msra.mxu0 0.0
    %2619 = vmatprep.subr.mxu0 0.0
    %2620 = vmatpush1.msra.mxu0 0.0
    %2621 = vmatprep.subr.mxu0 0.0
    %2622 = vmatpush1.msra.mxu0 0.0
    %2623 = vmatprep.subr.mxu0 0.0
    %2624 = vmatpush1.msra.mxu0 0.0
    %2625 = vmatprep.subr.mxu0 0.0
    %2626 = vmatpush1.msra.mxu0 0.0
    %2627 = vmatprep.subr.mxu0 0.0
    %2628 = vmatpush1.msra.mxu0 0.0
    %2629 = vmatprep.subr.mxu0 0.0
    %2630 = vmatpush1.msra.mxu0 0.0
    %2631 = vmatprep.subr.mxu0 0.0
    %2632 = vmatpush1.msra.mxu0 0.0
    %2633 = vmatprep.subr.mxu0 0.0
    %2634 = vmatpush1.msra.mxu0 0.0
    %2635 = vmatprep.subr.mxu0 0.0
    %2636 = vmatpush1.msra.mxu0 0.0
    %2637 = vmatprep.subr.mxu0 0.0
    %2638 = vmatpush1.msra.mxu0 0.0
    %2639 = vmatprep.subr.mxu0 0.0
    %2640 = vmatpush1.msra.mxu0 0.0
    %2641 = vmatprep.subr.mxu0 0.0
    %2642 = vmatpush1.msra.mxu0 0.0
    %2643 = vmatprep.subr.mxu0 0.0
    %2644 = vmatpush1.msra.mxu0 0.0
    %2645 = vmatprep.subr.mxu0 0.0
    %v2646 = vand.u32 %v79, 4294901760
    %2647 = vmatpush1.msra.mxu0 %v2646
    %2648 = vmatprep.subr.mxu0 0.0
    %v2649 = vand.u32 %v78, 4294901760
    %2650 = vmatpush1.msra.mxu0 %v2649
    %2651 = vmatprep.subr.mxu0 0.0
    %2652 = vmatpush2.msra.mxu0 0.0
    %2653 = vmatprep.subr.mxu0 0.0
    %2654 = vmatpush2.msra.mxu0 0.0
    %2655 = vmatprep.subr.mxu0 0.0
    %2656 = vmatpush2.msra.mxu0 0.0
    %2657 = vmatprep.subr.mxu0 0.0
    %2658 = vmatpush2.msra.mxu0 0.0
    %2659 = vmatprep.subr.mxu0 0.0
    %2660 = vmatpush2.msra.mxu0 0.0
    %2661 = vmatprep.subr.mxu0 0.0
    %2662 = vmatpush2.msra.mxu0 0.0
    %2663 = vmatprep.subr.mxu0 0.0
    %2664 = vmatpush2.msra.mxu0 0.0
    %2665 = vmatprep.subr.mxu0 0.0
    %2666 = vmatpush2.msra.mxu0 0.0
    %2667 = vmatprep.subr.mxu0 0.0
    %2668 = vmatpush2.msra.mxu0 0.0
    %2669 = vmatprep.subr.mxu0 0.0
    %2670 = vmatpush2.msra.mxu0 0.0
    %2671 = vmatprep.subr.mxu0 0.0
    %2672 = vmatpush2.msra.mxu0 0.0
    %2673 = vmatprep.subr.mxu0 0.0
    %2674 = vmatpush2.msra.mxu0 0.0
    %2675 = vmatprep.subr.mxu0 0.0
    %2676 = vmatpush2.msra.mxu0 0.0
    %2677 = vmatprep.subr.mxu0 0.0
    %2678 = vmatpush2.msra.mxu0 0.0
    %2679 = vmatprep.subr.mxu0 0.0
    %2680 = vmatpush2.msra.mxu0 0.0
    %2681 = vmatprep.subr.mxu0 0.0
    %2682 = vmatpush2.msra.mxu0 0.0
    %2683 = vmatprep.mubr.f32.mxu0 0.0
    %v2684 = vand.u32 %v2615, 4294901760
    %v2685 = vsub.f32 %v2615, %v2684
    %v2686 = vand.u32 %v2685, 4294901760
    %v2687 = vsub.f32 %v2685, %v2686
    %v2688 = vand.u32 %v2687, 4294901760
    %2689 = vmatmul.mubr.f32.gmra.mxu0 %v2688
    %v2690 = vpop.f32.mrf.mxu0
    %v2691 = vadd.f32 0.0, %v2690
    %v2692 = vpop.f32.mrf.mxu0
    %2693 = vdwg.mxu0
    %2694 = vmatprep.subr.mxu0 0.0
    %2695 = vmatpush1.msra.mxu0 0.0
    %2696 = vmatprep.subr.mxu0 0.0
    %2697 = vmatpush1.msra.mxu0 0.0
    %2698 = vmatprep.subr.mxu0 0.0
    %2699 = vmatpush1.msra.mxu0 0.0
    %2700 = vmatprep.subr.mxu0 0.0
    %2701 = vmatpush1.msra.mxu0 0.0
    %2702 = vmatprep.subr.mxu0 0.0
    %2703 = vmatpush1.msra.mxu0 0.0
    %2704 = vmatprep.subr.mxu0 0.0
    %2705 = vmatpush1.msra.mxu0 0.0
    %2706 = vmatprep.subr.mxu0 0.0
    %2707 = vmatpush1.msra.mxu0 0.0
    %2708 = vmatprep.subr.mxu0 0.0
    %2709 = vmatpush1.msra.mxu0 0.0
    %2710 = vmatprep.subr.mxu0 0.0
    %2711 = vmatpush1.msra.mxu0 0.0
    %2712 = vmatprep.subr.mxu0 0.0
    %2713 = vmatpush1.msra.mxu0 0.0
    %2714 = vmatprep.subr.mxu0 0.0
    %2715 = vmatpush1.msra.mxu0 0.0
    %2716 = vmatprep.subr.mxu0 0.0
    %2717 = vmatpush1.msra.mxu0 0.0
    %2718 = vmatprep.subr.mxu0 0.0
    %2719 = vmatpush1.msra.mxu0 0.0
    %2720 = vmatprep.subr.mxu0 0.0
    %2721 = vmatpush1.msra.mxu0 0.0
    %2722 = vmatprep.subr.mxu0 0.0
    %v2723 = vand.u32 %v79, 4294901760
    %v2724 = vsub.f32 %v79, %v2723
    %v2725 = vand.u32 %v2724, 4294901760
    %v2726 = vsub.f32 %v2724, %v2725
    %v2727 = vand.u32 %v2726, 4294901760
    %2728 = vmatpush1.msra.mxu0 %v2727
    %2729 = vmatprep.subr.mxu0 0.0
    %v2730 = vand.u32 %v78, 4294901760
    %v2731 = vsub.f32 %v78, %v2730
    %v2732 = vand.u32 %v2731, 4294901760
    %v2733 = vsub.f32 %v2731, %v2732
    %v2734 = vand.u32 %v2733, 4294901760
    %2735 = vmatpush1.msra.mxu0 %v2734
    %2736 = vmatprep.subr.mxu0 0.0
    %2737 = vmatpush2.msra.mxu0 0.0
    %2738 = vmatprep.subr.mxu0 0.0
    %2739 = vmatpush2.msra.mxu0 0.0
    %2740 = vmatprep.subr.mxu0 0.0
    %2741 = vmatpush2.msra.mxu0 0.0
    %2742 = vmatprep.subr.mxu0 0.0
    %2743 = vmatpush2.msra.mxu0 0.0
    %2744 = vmatprep.subr.mxu0 0.0
    %2745 = vmatpush2.msra.mxu0 0.0
    %2746 = vmatprep.subr.mxu0 0.0
    %2747 = vmatpush2.msra.mxu0 0.0
    %2748 = vmatprep.subr.mxu0 0.0
    %2749 = vmatpush2.msra.mxu0 0.0
    %2750 = vmatprep.subr.mxu0 0.0
    %2751 = vmatpush2.msra.mxu0 0.0
    %2752 = vmatprep.subr.mxu0 0.0
    %2753 = vmatpush2.msra.mxu0 0.0
    %2754 = vmatprep.subr.mxu0 0.0
    %2755 = vmatpush2.msra.mxu0 0.0
    %2756 = vmatprep.subr.mxu0 0.0
    %2757 = vmatpush2.msra.mxu0 0.0
    %2758 = vmatprep.subr.mxu0 0.0
    %2759 = vmatpush2.msra.mxu0 0.0
    %2760 = vmatprep.subr.mxu0 0.0
    %2761 = vmatpush2.msra.mxu0 0.0
    %2762 = vmatprep.subr.mxu0 0.0
    %2763 = vmatpush2.msra.mxu0 0.0
    %2764 = vmatprep.subr.mxu0 0.0
    %2765 = vmatpush2.msra.mxu0 0.0
    %2766 = vmatprep.subr.mxu0 0.0
    %2767 = vmatpush2.msra.mxu0 0.0
    %2768 = vmatprep.mubr.f32.mxu0 0.0
    %v2769 = vand.u32 %v2615, 4294901760
    %2770 = vmatmul.mubr.f32.gmra.mxu0 %v2769
    %v2771 = vpop.f32.mrf.mxu0
    %v2772 = vadd.f32 %v2691, %v2771
    %v2773 = vpop.f32.mrf.mxu0
    %2774 = vdwg.mxu0
    %2775 = vmatprep.subr.mxu0 0.0
    %2776 = vmatpush1.msra.mxu0 0.0
    %2777 = vmatprep.subr.mxu0 0.0
    %2778 = vmatpush1.msra.mxu0 0.0
    %2779 = vmatprep.subr.mxu0 0.0
    %2780 = vmatpush1.msra.mxu0 0.0
    %2781 = vmatprep.subr.mxu0 0.0
    %2782 = vmatpush1.msra.mxu0 0.0
    %2783 = vmatprep.subr.mxu0 0.0
    %2784 = vmatpush1.msra.mxu0 0.0
    %2785 = vmatprep.subr.mxu0 0.0
    %2786 = vmatpush1.msra.mxu0 0.0
    %2787 = vmatprep.subr.mxu0 0.0
    %2788 = vmatpush1.msra.mxu0 0.0
    %2789 = vmatprep.subr.mxu0 0.0
    %2790 = vmatpush1.msra.mxu0 0.0
    %2791 = vmatprep.subr.mxu0 0.0
    %2792 = vmatpush1.msra.mxu0 0.0
    %2793 = vmatprep.subr.mxu0 0.0
    %2794 = vmatpush1.msra.mxu0 0.0
    %2795 = vmatprep.subr.mxu0 0.0
    %2796 = vmatpush1.msra.mxu0 0.0
    %2797 = vmatprep.subr.mxu0 0.0
    %2798 = vmatpush1.msra.mxu0 0.0
    %2799 = vmatprep.subr.mxu0 0.0
    %2800 = vmatpush1.msra.mxu0 0.0
    %2801 = vmatprep.subr.mxu0 0.0
    %2802 = vmatpush1.msra.mxu0 0.0
    %2803 = vmatprep.subr.mxu0 0.0
    %v2804 = vand.u32 %v79, 4294901760
    %v2805 = vsub.f32 %v79, %v2804
    %2806 = vmatpush1.msra.mxu0 %v2805
    %2807 = vmatprep.subr.mxu0 0.0
    %v2808 = vand.u32 %v78, 4294901760
    %v2809 = vsub.f32 %v78, %v2808
    %2810 = vmatpush1.msra.mxu0 %v2809
    %2811 = vmatprep.subr.mxu0 0.0
    %2812 = vmatpush2.msra.mxu0 0.0
    %2813 = vmatprep.subr.mxu0 0.0
    %2814 = vmatpush2.msra.mxu0 0.0
    %2815 = vmatprep.subr.mxu0 0.0
    %2816 = vmatpush2.msra.mxu0 0.0
    %2817 = vmatprep.subr.mxu0 0.0
    %2818 = vmatpush2.msra.mxu0 0.0
    %2819 = vmatprep.subr.mxu0 0.0
    %2820 = vmatpush2.msra.mxu0 0.0
    %2821 = vmatprep.subr.mxu0 0.0
    %2822 = vmatpush2.msra.mxu0 0.0
    %2823 = vmatprep.subr.mxu0 0.0
    %2824 = vmatpush2.msra.mxu0 0.0
    %2825 = vmatprep.subr.mxu0 0.0
    %2826 = vmatpush2.msra.mxu0 0.0
    %2827 = vmatprep.subr.mxu0 0.0
    %2828 = vmatpush2.msra.mxu0 0.0
    %2829 = vmatprep.subr.mxu0 0.0
    %2830 = vmatpush2.msra.mxu0 0.0
    %2831 = vmatprep.subr.mxu0 0.0
    %2832 = vmatpush2.msra.mxu0 0.0
    %2833 = vmatprep.subr.mxu0 0.0
    %2834 = vmatpush2.msra.mxu0 0.0
    %2835 = vmatprep.subr.mxu0 0.0
    %2836 = vmatpush2.msra.mxu0 0.0
    %2837 = vmatprep.subr.mxu0 0.0
    %2838 = vmatpush2.msra.mxu0 0.0
    %2839 = vmatprep.subr.mxu0 0.0
    %2840 = vmatpush2.msra.mxu0 0.0
    %2841 = vmatprep.subr.mxu0 0.0
    %2842 = vmatpush2.msra.mxu0 0.0
    %2843 = vmatprep.mubr.f32.mxu0 0.0
    %v2844 = vand.u32 %v2615, 4294901760
    %v2845 = vsub.f32 %v2615, %v2844
    %2846 = vmatmul.mubr.f32.gmra.mxu0 %v2845
    %v2847 = vpop.f32.mrf.mxu0
    %v2848 = vadd.f32 %v2772, %v2847
    %v2849 = vpop.f32.mrf.mxu0
    %2850 = vdwg.mxu0
    %2851 = vmatprep.subr.mxu0 0.0
    %2852 = vmatpush1.msra.mxu0 0.0
    %2853 = vmatprep.subr.mxu0 0.0
    %2854 = vmatpush1.msra.mxu0 0.0
    %2855 = vmatprep.subr.mxu0 0.0
    %2856 = vmatpush1.msra.mxu0 0.0
    %2857 = vmatprep.subr.mxu0 0.0
    %2858 = vmatpush1.msra.mxu0 0.0
    %2859 = vmatprep.subr.mxu0 0.0
    %2860 = vmatpush1.msra.mxu0 0.0
    %2861 = vmatprep.subr.mxu0 0.0
    %2862 = vmatpush1.msra.mxu0 0.0
    %2863 = vmatprep.subr.mxu0 0.0
    %2864 = vmatpush1.msra.mxu0 0.0
    %2865 = vmatprep.subr.mxu0 0.0
    %2866 = vmatpush1.msra.mxu0 0.0
    %2867 = vmatprep.subr.mxu0 0.0
    %2868 = vmatpush1.msra.mxu0 0.0
    %2869 = vmatprep.subr.mxu0 0.0
    %2870 = vmatpush1.msra.mxu0 0.0
    %2871 = vmatprep.subr.mxu0 0.0
    %2872 = vmatpush1.msra.mxu0 0.0
    %2873 = vmatprep.subr.mxu0 0.0
    %2874 = vmatpush1.msra.mxu0 0.0
    %2875 = vmatprep.subr.mxu0 0.0
    %2876 = vmatpush1.msra.mxu0 0.0
    %2877 = vmatprep.subr.mxu0 0.0
    %2878 = vmatpush1.msra.mxu0 0.0
    %2879 = vmatprep.subr.mxu0 0.0
    %v2880 = vand.u32 %v79, 4294901760
    %2881 = vmatpush1.msra.mxu0 %v2880
    %2882 = vmatprep.subr.mxu0 0.0
    %v2883 = vand.u32 %v78, 4294901760
    %2884 = vmatpush1.msra.mxu0 %v2883
    %2885 = vmatprep.subr.mxu0 0.0
    %2886 = vmatpush2.msra.mxu0 0.0
    %2887 = vmatprep.subr.mxu0 0.0
    %2888 = vmatpush2.msra.mxu0 0.0
    %2889 = vmatprep.subr.mxu0 0.0
    %2890 = vmatpush2.msra.mxu0 0.0
    %2891 = vmatprep.subr.mxu0 0.0
    %2892 = vmatpush2.msra.mxu0 0.0
    %2893 = vmatprep.subr.mxu0 0.0
    %2894 = vmatpush2.msra.mxu0 0.0
    %2895 = vmatprep.subr.mxu0 0.0
    %2896 = vmatpush2.msra.mxu0 0.0
    %2897 = vmatprep.subr.mxu0 0.0
    %2898 = vmatpush2.msra.mxu0 0.0
    %2899 = vmatprep.subr.mxu0 0.0
    %2900 = vmatpush2.msra.mxu0 0.0
    %2901 = vmatprep.subr.mxu0 0.0
    %2902 = vmatpush2.msra.mxu0 0.0
    %2903 = vmatprep.subr.mxu0 0.0
    %2904 = vmatpush2.msra.mxu0 0.0
    %2905 = vmatprep.subr.mxu0 0.0
    %2906 = vmatpush2.msra.mxu0 0.0
    %2907 = vmatprep.subr.mxu0 0.0
    %2908 = vmatpush2.msra.mxu0 0.0
    %2909 = vmatprep.subr.mxu0 0.0
    %2910 = vmatpush2.msra.mxu0 0.0
    %2911 = vmatprep.subr.mxu0 0.0
    %2912 = vmatpush2.msra.mxu0 0.0
    %2913 = vmatprep.subr.mxu0 0.0
    %2914 = vmatpush2.msra.mxu0 0.0
    %2915 = vmatprep.subr.mxu0 0.0
    %2916 = vmatpush2.msra.mxu0 0.0
    %2917 = vmatprep.mubr.f32.mxu0 0.0
    %v2918 = vand.u32 %v2615, 4294901760
    %v2919 = vsub.f32 %v2615, %v2918
    %v2920 = vand.u32 %v2919, 4294901760
    %2921 = vmatmul.mubr.f32.gmra.mxu0 %v2920
    %v2922 = vpop.f32.mrf.mxu0
    %v2923 = vadd.f32 %v2848, %v2922
    %v2924 = vpop.f32.mrf.mxu0
    %2925 = vdwg.mxu0
    %2926 = vmatprep.subr.mxu0 0.0
    %2927 = vmatpush1.msra.mxu0 0.0
    %2928 = vmatprep.subr.mxu0 0.0
    %2929 = vmatpush1.msra.mxu0 0.0
    %2930 = vmatprep.subr.mxu0 0.0
    %2931 = vmatpush1.msra.mxu0 0.0
    %2932 = vmatprep.subr.mxu0 0.0
    %2933 = vmatpush1.msra.mxu0 0.0
    %2934 = vmatprep.subr.mxu0 0.0
    %2935 = vmatpush1.msra.mxu0 0.0
    %2936 = vmatprep.subr.mxu0 0.0
    %2937 = vmatpush1.msra.mxu0 0.0
    %2938 = vmatprep.subr.mxu0 0.0
    %2939 = vmatpush1.msra.mxu0 0.0
    %2940 = vmatprep.subr.mxu0 0.0
    %2941 = vmatpush1.msra.mxu0 0.0
    %2942 = vmatprep.subr.mxu0 0.0
    %2943 = vmatpush1.msra.mxu0 0.0
    %2944 = vmatprep.subr.mxu0 0.0
    %2945 = vmatpush1.msra.mxu0 0.0
    %2946 = vmatprep.subr.mxu0 0.0
    %2947 = vmatpush1.msra.mxu0 0.0
    %2948 = vmatprep.subr.mxu0 0.0
    %2949 = vmatpush1.msra.mxu0 0.0
    %2950 = vmatprep.subr.mxu0 0.0
    %2951 = vmatpush1.msra.mxu0 0.0
    %2952 = vmatprep.subr.mxu0 0.0
    %2953 = vmatpush1.msra.mxu0 0.0
    %2954 = vmatprep.subr.mxu0 0.0
    %v2955 = vand.u32 %v79, 4294901760
    %v2956 = vsub.f32 %v79, %v2955
    %v2957 = vand.u32 %v2956, 4294901760
    %2958 = vmatpush1.msra.mxu0 %v2957
    %2959 = vmatprep.subr.mxu0 0.0
    %v2960 = vand.u32 %v78, 4294901760
    %v2961 = vsub.f32 %v78, %v2960
    %v2962 = vand.u32 %v2961, 4294901760
    %2963 = vmatpush1.msra.mxu0 %v2962
    %2964 = vmatprep.subr.mxu0 0.0
    %2965 = vmatpush2.msra.mxu0 0.0
    %2966 = vmatprep.subr.mxu0 0.0
    %2967 = vmatpush2.msra.mxu0 0.0
    %2968 = vmatprep.subr.mxu0 0.0
    %2969 = vmatpush2.msra.mxu0 0.0
    %2970 = vmatprep.subr.mxu0 0.0
    %2971 = vmatpush2.msra.mxu0 0.0
    %2972 = vmatprep.subr.mxu0 0.0
    %2973 = vmatpush2.msra.mxu0 0.0
    %2974 = vmatprep.subr.mxu0 0.0
    %2975 = vmatpush2.msra.mxu0 0.0
    %2976 = vmatprep.subr.mxu0 0.0
    %2977 = vmatpush2.msra.mxu0 0.0
    %2978 = vmatprep.subr.mxu0 0.0
    %2979 = vmatpush2.msra.mxu0 0.0
    %2980 = vmatprep.subr.mxu0 0.0
    %2981 = vmatpush2.msra.mxu0 0.0
    %2982 = vmatprep.subr.mxu0 0.0
    %2983 = vmatpush2.msra.mxu0 0.0
    %2984 = vmatprep.subr.mxu0 0.0
    %2985 = vmatpush2.msra.mxu0 0.0
    %2986 = vmatprep.subr.mxu0 0.0
    %2987 = vmatpush2.msra.mxu0 0.0
    %2988 = vmatprep.subr.mxu0 0.0
    %2989 = vmatpush2.msra.mxu0 0.0
    %2990 = vmatprep.subr.mxu0 0.0
    %2991 = vmatpush2.msra.mxu0 0.0
    %2992 = vmatprep.subr.mxu0 0.0
    %2993 = vmatpush2.msra.mxu0 0.0
    %2994 = vmatprep.subr.mxu0 0.0
    %2995 = vmatpush2.msra.mxu0 0.0
    %2996 = vmatprep.mubr.f32.mxu0 0.0
    %v2997 = vand.u32 %v2615, 4294901760
    %2998 = vmatmul.mubr.f32.gmra.mxu0 %v2997
    %v2999 = vpop.f32.mrf.mxu0
    %v3000 = vadd.f32 %v2923, %v2999
    %v3001 = vpop.f32.mrf.mxu0
    %3002 = vdwg.mxu0
    %3003 = vmatprep.subr.mxu0 0.0
    %3004 = vmatpush1.msra.mxu0 0.0
    %3005 = vmatprep.subr.mxu0 0.0
    %3006 = vmatpush1.msra.mxu0 0.0
    %3007 = vmatprep.subr.mxu0 0.0
    %3008 = vmatpush1.msra.mxu0 0.0
    %3009 = vmatprep.subr.mxu0 0.0
    %3010 = vmatpush1.msra.mxu0 0.0
    %3011 = vmatprep.subr.mxu0 0.0
    %3012 = vmatpush1.msra.mxu0 0.0
    %3013 = vmatprep.subr.mxu0 0.0
    %3014 = vmatpush1.msra.mxu0 0.0
    %3015 = vmatprep.subr.mxu0 0.0
    %3016 = vmatpush1.msra.mxu0 0.0
    %3017 = vmatprep.subr.mxu0 0.0
    %3018 = vmatpush1.msra.mxu0 0.0
    %3019 = vmatprep.subr.mxu0 0.0
    %3020 = vmatpush1.msra.mxu0 0.0
    %3021 = vmatprep.subr.mxu0 0.0
    %3022 = vmatpush1.msra.mxu0 0.0
    %3023 = vmatprep.subr.mxu0 0.0
    %3024 = vmatpush1.msra.mxu0 0.0
    %3025 = vmatprep.subr.mxu0 0.0
    %3026 = vmatpush1.msra.mxu0 0.0
    %3027 = vmatprep.subr.mxu0 0.0
    %3028 = vmatpush1.msra.mxu0 0.0
    %3029 = vmatprep.subr.mxu0 0.0
    %3030 = vmatpush1.msra.mxu0 0.0
    %3031 = vmatprep.subr.mxu0 0.0
    %v3032 = vand.u32 %v79, 4294901760
    %3033 = vmatpush1.msra.mxu0 %v3032
    %3034 = vmatprep.subr.mxu0 0.0
    %v3035 = vand.u32 %v78, 4294901760
    %3036 = vmatpush1.msra.mxu0 %v3035
    %3037 = vmatprep.subr.mxu0 0.0
    %3038 = vmatpush2.msra.mxu0 0.0
    %3039 = vmatprep.subr.mxu0 0.0
    %3040 = vmatpush2.msra.mxu0 0.0
    %3041 = vmatprep.subr.mxu0 0.0
    %3042 = vmatpush2.msra.mxu0 0.0
    %3043 = vmatprep.subr.mxu0 0.0
    %3044 = vmatpush2.msra.mxu0 0.0
    %3045 = vmatprep.subr.mxu0 0.0
    %3046 = vmatpush2.msra.mxu0 0.0
    %3047 = vmatprep.subr.mxu0 0.0
    %3048 = vmatpush2.msra.mxu0 0.0
    %3049 = vmatprep.subr.mxu0 0.0
    %3050 = vmatpush2.msra.mxu0 0.0
    %3051 = vmatprep.subr.mxu0 0.0
    %3052 = vmatpush2.msra.mxu0 0.0
    %3053 = vmatprep.subr.mxu0 0.0
    %3054 = vmatpush2.msra.mxu0 0.0
    %3055 = vmatprep.subr.mxu0 0.0
    %3056 = vmatpush2.msra.mxu0 0.0
    %3057 = vmatprep.subr.mxu0 0.0
    %3058 = vmatpush2.msra.mxu0 0.0
    %3059 = vmatprep.subr.mxu0 0.0
    %3060 = vmatpush2.msra.mxu0 0.0
    %3061 = vmatprep.subr.mxu0 0.0
    %3062 = vmatpush2.msra.mxu0 0.0
    %3063 = vmatprep.subr.mxu0 0.0
    %3064 = vmatpush2.msra.mxu0 0.0
    %3065 = vmatprep.subr.mxu0 0.0
    %3066 = vmatpush2.msra.mxu0 0.0
    %3067 = vmatprep.subr.mxu0 0.0
    %3068 = vmatpush2.msra.mxu0 0.0
    %3069 = vmatprep.mubr.f32.mxu0 0.0
    %v3070 = vand.u32 %v2615, 4294901760
    %3071 = vmatmul.mubr.f32.gmra.mxu0 %v3070
    %v3072 = vpop.f32.mrf.mxu0
    %v3073 = vadd.f32 %v3000, %v3072
    %v3074 = vpop.f32.mrf.mxu0
    %3075 = vdwg.mxu0
    %v3076 = vadd.f32 %v3073, %v1089
    %v3077 = vxor.u32 %v3076, 2147483648
    %v3078 = vmul.f32 %v3077, 1.442695
    %v3079 = vpow.pop %v3078
    %v3080 = vadd.f32 %v3079, 1.0
    %v3081 = vrcp.pop %v3080
    %v3082 = vmul.f32 1.0, %v3081
    %v3083 = vtanh.pop %v3076
    %v3084 = vmul.f32 %v3082, %v2605
    %3086 = vrot.lane.b32.xlu0 %v3083, 96
    %v3087 = vpop.permute.xlu0 %3086
    %v3089 = vmul.f32 %v3082, %v3087
    %3091 = vrot.lane.b32.xlu0 %v3089, 16
    %v3092 = vpop.permute.xlu0 %3091
    %v3094 = vadd.f32 %v3084, %v3092
    %v3095 = vtanh.pop %v3094
    %3097 = vrot.lane.b32.xlu0 %v3095, 32
    %v3098 = vpop.permute.xlu0 %3097
    %v3100 = vmul.f32 %v3082, %v3098
    %3102 = vrot.lane.b32.xlu0 %v3100, 80
    %v3103 = vpop.permute.xlu0 %3102
    %v3104 = vsel %vm1142, %v3103, 0
    %3106 = vmatprep.subr.mxu0 0.0
    %3107 = vmatpush1.msra.mxu0 0.0
    %3108 = vmatprep.subr.mxu0 0.0
    %3109 = vmatpush1.msra.mxu0 0.0
    %3110 = vmatprep.subr.mxu0 0.0
    %3111 = vmatpush1.msra.mxu0 0.0
    %3112 = vmatprep.subr.mxu0 0.0
    %3113 = vmatpush1.msra.mxu0 0.0
    %3114 = vmatprep.subr.mxu0 0.0
    %3115 = vmatpush1.msra.mxu0 0.0
    %3116 = vmatprep.subr.mxu0 0.0
    %3117 = vmatpush1.msra.mxu0 0.0
    %3118 = vmatprep.subr.mxu0 0.0
    %3119 = vmatpush1.msra.mxu0 0.0
    %3120 = vmatprep.subr.mxu0 0.0
    %3121 = vmatpush1.msra.mxu0 0.0
    %3122 = vmatprep.subr.mxu0 0.0
    %3123 = vmatpush1.msra.mxu0 0.0
    %3124 = vmatprep.subr.mxu0 0.0
    %3125 = vmatpush1.msra.mxu0 0.0
    %3126 = vmatprep.subr.mxu0 0.0
    %3127 = vmatpush1.msra.mxu0 0.0
    %3128 = vmatprep.subr.mxu0 0.0
    %3129 = vmatpush1.msra.mxu0 0.0
    %3130 = vmatprep.subr.mxu0 0.0
    %3131 = vmatpush1.msra.mxu0 0.0
    %3132 = vmatprep.subr.mxu0 0.0
    %3133 = vmatpush1.msra.mxu0 0.0
    %3134 = vmatprep.subr.mxu0 0.0
    %v3135 = vand.u32 %v79, 4294901760
    %3136 = vmatpush1.msra.mxu0 %v3135
    %3137 = vmatprep.subr.mxu0 0.0
    %v3138 = vand.u32 %v78, 4294901760
    %3139 = vmatpush1.msra.mxu0 %v3138
    %3140 = vmatprep.subr.mxu0 0.0
    %3141 = vmatpush2.msra.mxu0 0.0
    %3142 = vmatprep.subr.mxu0 0.0
    %3143 = vmatpush2.msra.mxu0 0.0
    %3144 = vmatprep.subr.mxu0 0.0
    %3145 = vmatpush2.msra.mxu0 0.0
    %3146 = vmatprep.subr.mxu0 0.0
    %3147 = vmatpush2.msra.mxu0 0.0
    %3148 = vmatprep.subr.mxu0 0.0
    %3149 = vmatpush2.msra.mxu0 0.0
    %3150 = vmatprep.subr.mxu0 0.0
    %3151 = vmatpush2.msra.mxu0 0.0
    %3152 = vmatprep.subr.mxu0 0.0
    %3153 = vmatpush2.msra.mxu0 0.0
    %3154 = vmatprep.subr.mxu0 0.0
    %3155 = vmatpush2.msra.mxu0 0.0
    %3156 = vmatprep.subr.mxu0 0.0
    %3157 = vmatpush2.msra.mxu0 0.0
    %3158 = vmatprep.subr.mxu0 0.0
    %3159 = vmatpush2.msra.mxu0 0.0
    %3160 = vmatprep.subr.mxu0 0.0
    %3161 = vmatpush2.msra.mxu0 0.0
    %3162 = vmatprep.subr.mxu0 0.0
    %3163 = vmatpush2.msra.mxu0 0.0
    %3164 = vmatprep.subr.mxu0 0.0
    %3165 = vmatpush2.msra.mxu0 0.0
    %3166 = vmatprep.subr.mxu0 0.0
    %3167 = vmatpush2.msra.mxu0 0.0
    %3168 = vmatprep.subr.mxu0 0.0
    %3169 = vmatpush2.msra.mxu0 0.0
    %3170 = vmatprep.subr.mxu0 0.0
    %3171 = vmatpush2.msra.mxu0 0.0
    %3172 = vmatprep.mubr.f32.mxu0 0.0
    %v3173 = vand.u32 %v3104, 4294901760
    %v3174 = vsub.f32 %v3104, %v3173
    %v3175 = vand.u32 %v3174, 4294901760
    %v3176 = vsub.f32 %v3174, %v3175
    %v3177 = vand.u32 %v3176, 4294901760
    %3178 = vmatmul.mubr.f32.gmra.mxu0 %v3177
    %v3179 = vpop.f32.mrf.mxu0
    %v3180 = vadd.f32 0.0, %v3179
    %v3181 = vpop.f32.mrf.mxu0
    %3182 = vdwg.mxu0
    %3183 = vmatprep.subr.mxu0 0.0
    %3184 = vmatpush1.msra.mxu0 0.0
    %3185 = vmatprep.subr.mxu0 0.0
    %3186 = vmatpush1.msra.mxu0 0.0
    %3187 = vmatprep.subr.mxu0 0.0
    %3188 = vmatpush1.msra.mxu0 0.0
    %3189 = vmatprep.subr.mxu0 0.0
    %3190 = vmatpush1.msra.mxu0 0.0
    %3191 = vmatprep.subr.mxu0 0.0
    %3192 = vmatpush1.msra.mxu0 0.0
    %3193 = vmatprep.subr.mxu0 0.0
    %3194 = vmatpush1.msra.mxu0 0.0
    %3195 = vmatprep.subr.mxu0 0.0
    %3196 = vmatpush1.msra.mxu0 0.0
    %3197 = vmatprep.subr.mxu0 0.0
    %3198 = vmatpush1.msra.mxu0 0.0
    %3199 = vmatprep.subr.mxu0 0.0
    %3200 = vmatpush1.msra.mxu0 0.0
    %3201 = vmatprep.subr.mxu0 0.0
    %3202 = vmatpush1.msra.mxu0 0.0
    %3203 = vmatprep.subr.mxu0 0.0
    %3204 = vmatpush1.msra.mxu0 0.0
    %3205 = vmatprep.subr.mxu0 0.0
    %3206 = vmatpush1.msra.mxu0 0.0
    %3207 = vmatprep.subr.mxu0 0.0
    %3208 = vmatpush1.msra.mxu0 0.0
    %3209 = vmatprep.subr.mxu0 0.0
    %3210 = vmatpush1.msra.mxu0 0.0
    %3211 = vmatprep.subr.mxu0 0.0
    %v3212 = vand.u32 %v79, 4294901760
    %v3213 = vsub.f32 %v79, %v3212
    %v3214 = vand.u32 %v3213, 4294901760
    %v3215 = vsub.f32 %v3213, %v3214
    %v3216 = vand.u32 %v3215, 4294901760
    %3217 = vmatpush1.msra.mxu0 %v3216
    %3218 = vmatprep.subr.mxu0 0.0
    %v3219 = vand.u32 %v78, 4294901760
    %v3220 = vsub.f32 %v78, %v3219
    %v3221 = vand.u32 %v3220, 4294901760
    %v3222 = vsub.f32 %v3220, %v3221
    %v3223 = vand.u32 %v3222, 4294901760
    %3224 = vmatpush1.msra.mxu0 %v3223
    %3225 = vmatprep.subr.mxu0 0.0
    %3226 = vmatpush2.msra.mxu0 0.0
    %3227 = vmatprep.subr.mxu0 0.0
    %3228 = vmatpush2.msra.mxu0 0.0
    %3229 = vmatprep.subr.mxu0 0.0
    %3230 = vmatpush2.msra.mxu0 0.0
    %3231 = vmatprep.subr.mxu0 0.0
    %3232 = vmatpush2.msra.mxu0 0.0
    %3233 = vmatprep.subr.mxu0 0.0
    %3234 = vmatpush2.msra.mxu0 0.0
    %3235 = vmatprep.subr.mxu0 0.0
    %3236 = vmatpush2.msra.mxu0 0.0
    %3237 = vmatprep.subr.mxu0 0.0
    %3238 = vmatpush2.msra.mxu0 0.0
    %3239 = vmatprep.subr.mxu0 0.0
    %3240 = vmatpush2.msra.mxu0 0.0
    %3241 = vmatprep.subr.mxu0 0.0
    %3242 = vmatpush2.msra.mxu0 0.0
    %3243 = vmatprep.subr.mxu0 0.0
    %3244 = vmatpush2.msra.mxu0 0.0
    %3245 = vmatprep.subr.mxu0 0.0
    %3246 = vmatpush2.msra.mxu0 0.0
    %3247 = vmatprep.subr.mxu0 0.0
    %3248 = vmatpush2.msra.mxu0 0.0
    %3249 = vmatprep.subr.mxu0 0.0
    %3250 = vmatpush2.msra.mxu0 0.0
    %3251 = vmatprep.subr.mxu0 0.0
    %3252 = vmatpush2.msra.mxu0 0.0
    %3253 = vmatprep.subr.mxu0 0.0
    %3254 = vmatpush2.msra.mxu0 0.0
    %3255 = vmatprep.subr.mxu0 0.0
    %3256 = vmatpush2.msra.mxu0 0.0
    %3257 = vmatprep.mubr.f32.mxu0 0.0
    %v3258 = vand.u32 %v3104, 4294901760
    %3259 = vmatmul.mubr.f32.gmra.mxu0 %v3258
    %v3260 = vpop.f32.mrf.mxu0
    %v3261 = vadd.f32 %v3180, %v3260
    %v3262 = vpop.f32.mrf.mxu0
    %3263 = vdwg.mxu0
    %3264 = vmatprep.subr.mxu0 0.0
    %3265 = vmatpush1.msra.mxu0 0.0
    %3266 = vmatprep.subr.mxu0 0.0
    %3267 = vmatpush1.msra.mxu0 0.0
    %3268 = vmatprep.subr.mxu0 0.0
    %3269 = vmatpush1.msra.mxu0 0.0
    %3270 = vmatprep.subr.mxu0 0.0
    %3271 = vmatpush1.msra.mxu0 0.0
    %3272 = vmatprep.subr.mxu0 0.0
    %3273 = vmatpush1.msra.mxu0 0.0
    %3274 = vmatprep.subr.mxu0 0.0
    %3275 = vmatpush1.msra.mxu0 0.0
    %3276 = vmatprep.subr.mxu0 0.0
    %3277 = vmatpush1.msra.mxu0 0.0
    %3278 = vmatprep.subr.mxu0 0.0
    %3279 = vmatpush1.msra.mxu0 0.0
    %3280 = vmatprep.subr.mxu0 0.0
    %3281 = vmatpush1.msra.mxu0 0.0
    %3282 = vmatprep.subr.mxu0 0.0
    %3283 = vmatpush1.msra.mxu0 0.0
    %3284 = vmatprep.subr.mxu0 0.0
    %3285 = vmatpush1.msra.mxu0 0.0
    %3286 = vmatprep.subr.mxu0 0.0
    %3287 = vmatpush1.msra.mxu0 0.0
    %3288 = vmatprep.subr.mxu0 0.0
    %3289 = vmatpush1.msra.mxu0 0.0
    %3290 = vmatprep.subr.mxu0 0.0
    %3291 = vmatpush1.msra.mxu0 0.0
    %3292 = vmatprep.subr.mxu0 0.0
    %v3293 = vand.u32 %v79, 4294901760
    %v3294 = vsub.f32 %v79, %v3293
    %3295 = vmatpush1.msra.mxu0 %v3294
    %3296 = vmatprep.subr.mxu0 0.0
    %v3297 = vand.u32 %v78, 4294901760
    %v3298 = vsub.f32 %v78, %v3297
    %3299 = vmatpush1.msra.mxu0 %v3298
    %3300 = vmatprep.subr.mxu0 0.0
    %3301 = vmatpush2.msra.mxu0 0.0
    %3302 = vmatprep.subr.mxu0 0.0
    %3303 = vmatpush2.msra.mxu0 0.0
    %3304 = vmatprep.subr.mxu0 0.0
    %3305 = vmatpush2.msra.mxu0 0.0
    %3306 = vmatprep.subr.mxu0 0.0
    %3307 = vmatpush2.msra.mxu0 0.0
    %3308 = vmatprep.subr.mxu0 0.0
    %3309 = vmatpush2.msra.mxu0 0.0
    %3310 = vmatprep.subr.mxu0 0.0
    %3311 = vmatpush2.msra.mxu0 0.0
    %3312 = vmatprep.subr.mxu0 0.0
    %3313 = vmatpush2.msra.mxu0 0.0
    %3314 = vmatprep.subr.mxu0 0.0
    %3315 = vmatpush2.msra.mxu0 0.0
    %3316 = vmatprep.subr.mxu0 0.0
    %3317 = vmatpush2.msra.mxu0 0.0
    %3318 = vmatprep.subr.mxu0 0.0
    %3319 = vmatpush2.msra.mxu0 0.0
    %3320 = vmatprep.subr.mxu0 0.0
    %3321 = vmatpush2.msra.mxu0 0.0
    %3322 = vmatprep.subr.mxu0 0.0
    %3323 = vmatpush2.msra.mxu0 0.0
    %3324 = vmatprep.subr.mxu0 0.0
    %3325 = vmatpush2.msra.mxu0 0.0
    %3326 = vmatprep.subr.mxu0 0.0
    %3327 = vmatpush2.msra.mxu0 0.0
    %3328 = vmatprep.subr.mxu0 0.0
    %3329 = vmatpush2.msra.mxu0 0.0
    %3330 = vmatprep.subr.mxu0 0.0
    %3331 = vmatpush2.msra.mxu0 0.0
    %3332 = vmatprep.mubr.f32.mxu0 0.0
    %v3333 = vand.u32 %v3104, 4294901760
    %v3334 = vsub.f32 %v3104, %v3333
    %3335 = vmatmul.mubr.f32.gmra.mxu0 %v3334
    %v3336 = vpop.f32.mrf.mxu0
    %v3337 = vadd.f32 %v3261, %v3336
    %v3338 = vpop.f32.mrf.mxu0
    %3339 = vdwg.mxu0
    %3340 = vmatprep.subr.mxu0 0.0
    %3341 = vmatpush1.msra.mxu0 0.0
    %3342 = vmatprep.subr.mxu0 0.0
    %3343 = vmatpush1.msra.mxu0 0.0
    %3344 = vmatprep.subr.mxu0 0.0
    %3345 = vmatpush1.msra.mxu0 0.0
    %3346 = vmatprep.subr.mxu0 0.0
    %3347 = vmatpush1.msra.mxu0 0.0
    %3348 = vmatprep.subr.mxu0 0.0
    %3349 = vmatpush1.msra.mxu0 0.0
    %3350 = vmatprep.subr.mxu0 0.0
    %3351 = vmatpush1.msra.mxu0 0.0
    %3352 = vmatprep.subr.mxu0 0.0
    %3353 = vmatpush1.msra.mxu0 0.0
    %3354 = vmatprep.subr.mxu0 0.0
    %3355 = vmatpush1.msra.mxu0 0.0
    %3356 = vmatprep.subr.mxu0 0.0
    %3357 = vmatpush1.msra.mxu0 0.0
    %3358 = vmatprep.subr.mxu0 0.0
    %3359 = vmatpush1.msra.mxu0 0.0
    %3360 = vmatprep.subr.mxu0 0.0
    %3361 = vmatpush1.msra.mxu0 0.0
    %3362 = vmatprep.subr.mxu0 0.0
    %3363 = vmatpush1.msra.mxu0 0.0
    %3364 = vmatprep.subr.mxu0 0.0
    %3365 = vmatpush1.msra.mxu0 0.0
    %3366 = vmatprep.subr.mxu0 0.0
    %3367 = vmatpush1.msra.mxu0 0.0
    %3368 = vmatprep.subr.mxu0 0.0
    %v3369 = vand.u32 %v79, 4294901760
    %3370 = vmatpush1.msra.mxu0 %v3369
    %3371 = vmatprep.subr.mxu0 0.0
    %v3372 = vand.u32 %v78, 4294901760
    %3373 = vmatpush1.msra.mxu0 %v3372
    %3374 = vmatprep.subr.mxu0 0.0
    %3375 = vmatpush2.msra.mxu0 0.0
    %3376 = vmatprep.subr.mxu0 0.0
    %3377 = vmatpush2.msra.mxu0 0.0
    %3378 = vmatprep.subr.mxu0 0.0
    %3379 = vmatpush2.msra.mxu0 0.0
    %3380 = vmatprep.subr.mxu0 0.0
    %3381 = vmatpush2.msra.mxu0 0.0
    %3382 = vmatprep.subr.mxu0 0.0
    %3383 = vmatpush2.msra.mxu0 0.0
    %3384 = vmatprep.subr.mxu0 0.0
    %3385 = vmatpush2.msra.mxu0 0.0
    %3386 = vmatprep.subr.mxu0 0.0
    %3387 = vmatpush2.msra.mxu0 0.0
    %3388 = vmatprep.subr.mxu0 0.0
    %3389 = vmatpush2.msra.mxu0 0.0
    %3390 = vmatprep.subr.mxu0 0.0
    %3391 = vmatpush2.msra.mxu0 0.0
    %3392 = vmatprep.subr.mxu0 0.0
    %3393 = vmatpush2.msra.mxu0 0.0
    %3394 = vmatprep.subr.mxu0 0.0
    %3395 = vmatpush2.msra.mxu0 0.0
    %3396 = vmatprep.subr.mxu0 0.0
    %3397 = vmatpush2.msra.mxu0 0.0
    %3398 = vmatprep.subr.mxu0 0.0
    %3399 = vmatpush2.msra.mxu0 0.0
    %3400 = vmatprep.subr.mxu0 0.0
    %3401 = vmatpush2.msra.mxu0 0.0
    %3402 = vmatprep.subr.mxu0 0.0
    %3403 = vmatpush2.msra.mxu0 0.0
    %3404 = vmatprep.subr.mxu0 0.0
    %3405 = vmatpush2.msra.mxu0 0.0
    %3406 = vmatprep.mubr.f32.mxu0 0.0
    %v3407 = vand.u32 %v3104, 4294901760
    %v3408 = vsub.f32 %v3104, %v3407
    %v3409 = vand.u32 %v3408, 4294901760
    %3410 = vmatmul.mubr.f32.gmra.mxu0 %v3409
    %v3411 = vpop.f32.mrf.mxu0
    %v3412 = vadd.f32 %v3337, %v3411
    %v3413 = vpop.f32.mrf.mxu0
    %3414 = vdwg.mxu0
    %3415 = vmatprep.subr.mxu0 0.0
    %3416 = vmatpush1.msra.mxu0 0.0
    %3417 = vmatprep.subr.mxu0 0.0
    %3418 = vmatpush1.msra.mxu0 0.0
    %3419 = vmatprep.subr.mxu0 0.0
    %3420 = vmatpush1.msra.mxu0 0.0
    %3421 = vmatprep.subr.mxu0 0.0
    %3422 = vmatpush1.msra.mxu0 0.0
    %3423 = vmatprep.subr.mxu0 0.0
    %3424 = vmatpush1.msra.mxu0 0.0
    %3425 = vmatprep.subr.mxu0 0.0
    %3426 = vmatpush1.msra.mxu0 0.0
    %3427 = vmatprep.subr.mxu0 0.0
    %3428 = vmatpush1.msra.mxu0 0.0
    %3429 = vmatprep.subr.mxu0 0.0
    %3430 = vmatpush1.msra.mxu0 0.0
    %3431 = vmatprep.subr.mxu0 0.0
    %3432 = vmatpush1.msra.mxu0 0.0
    %3433 = vmatprep.subr.mxu0 0.0
    %3434 = vmatpush1.msra.mxu0 0.0
    %3435 = vmatprep.subr.mxu0 0.0
    %3436 = vmatpush1.msra.mxu0 0.0
    %3437 = vmatprep.subr.mxu0 0.0
    %3438 = vmatpush1.msra.mxu0 0.0
    %3439 = vmatprep.subr.mxu0 0.0
    %3440 = vmatpush1.msra.mxu0 0.0
    %3441 = vmatprep.subr.mxu0 0.0
    %3442 = vmatpush1.msra.mxu0 0.0
    %3443 = vmatprep.subr.mxu0 0.0
    %v3444 = vand.u32 %v79, 4294901760
    %v3445 = vsub.f32 %v79, %v3444
    %v3446 = vand.u32 %v3445, 4294901760
    %3447 = vmatpush1.msra.mxu0 %v3446
    %3448 = vmatprep.subr.mxu0 0.0
    %v3449 = vand.u32 %v78, 4294901760
    %v3450 = vsub.f32 %v78, %v3449
    %v3451 = vand.u32 %v3450, 4294901760
    %3452 = vmatpush1.msra.mxu0 %v3451
    %3453 = vmatprep.subr.mxu0 0.0
    %3454 = vmatpush2.msra.mxu0 0.0
    %3455 = vmatprep.subr.mxu0 0.0
    %3456 = vmatpush2.msra.mxu0 0.0
    %3457 = vmatprep.subr.mxu0 0.0
    %3458 = vmatpush2.msra.mxu0 0.0
    %3459 = vmatprep.subr.mxu0 0.0
    %3460 = vmatpush2.msra.mxu0 0.0
    %3461 = vmatprep.subr.mxu0 0.0
    %3462 = vmatpush2.msra.mxu0 0.0
    %3463 = vmatprep.subr.mxu0 0.0
    %3464 = vmatpush2.msra.mxu0 0.0
    %3465 = vmatprep.subr.mxu0 0.0
    %3466 = vmatpush2.msra.mxu0 0.0
    %3467 = vmatprep.subr.mxu0 0.0
    %3468 = vmatpush2.msra.mxu0 0.0
    %3469 = vmatprep.subr.mxu0 0.0
    %3470 = vmatpush2.msra.mxu0 0.0
    %3471 = vmatprep.subr.mxu0 0.0
    %3472 = vmatpush2.msra.mxu0 0.0
    %3473 = vmatprep.subr.mxu0 0.0
    %3474 = vmatpush2.msra.mxu0 0.0
    %3475 = vmatprep.subr.mxu0 0.0
    %3476 = vmatpush2.msra.mxu0 0.0
    %3477 = vmatprep.subr.mxu0 0.0
    %3478 = vmatpush2.msra.mxu0 0.0
    %3479 = vmatprep.subr.mxu0 0.0
    %3480 = vmatpush2.msra.mxu0 0.0
    %3481 = vmatprep.subr.mxu0 0.0
    %3482 = vmatpush2.msra.mxu0 0.0
    %3483 = vmatprep.subr.mxu0 0.0
    %3484 = vmatpush2.msra.mxu0 0.0
    %3485 = vmatprep.mubr.f32.mxu0 0.0
    %v3486 = vand.u32 %v3104, 4294901760
    %3487 = vmatmul.mubr.f32.gmra.mxu0 %v3486
    %v3488 = vpop.f32.mrf.mxu0
    %v3489 = vadd.f32 %v3412, %v3488
    %v3490 = vpop.f32.mrf.mxu0
    %3491 = vdwg.mxu0
    %3492 = vmatprep.subr.mxu0 0.0
    %3493 = vmatpush1.msra.mxu0 0.0
    %3494 = vmatprep.subr.mxu0 0.0
    %3495 = vmatpush1.msra.mxu0 0.0
    %3496 = vmatprep.subr.mxu0 0.0
    %3497 = vmatpush1.msra.mxu0 0.0
    %3498 = vmatprep.subr.mxu0 0.0
    %3499 = vmatpush1.msra.mxu0 0.0
    %3500 = vmatprep.subr.mxu0 0.0
    %3501 = vmatpush1.msra.mxu0 0.0
    %3502 = vmatprep.subr.mxu0 0.0
    %3503 = vmatpush1.msra.mxu0 0.0
    %3504 = vmatprep.subr.mxu0 0.0
    %3505 = vmatpush1.msra.mxu0 0.0
    %3506 = vmatprep.subr.mxu0 0.0
    %3507 = vmatpush1.msra.mxu0 0.0
    %3508 = vmatprep.subr.mxu0 0.0
    %3509 = vmatpush1.msra.mxu0 0.0
    %3510 = vmatprep.subr.mxu0 0.0
    %3511 = vmatpush1.msra.mxu0 0.0
    %3512 = vmatprep.subr.mxu0 0.0
    %3513 = vmatpush1.msra.mxu0 0.0
    %3514 = vmatprep.subr.mxu0 0.0
    %3515 = vmatpush1.msra.mxu0 0.0
    %3516 = vmatprep.subr.mxu0 0.0
    %3517 = vmatpush1.msra.mxu0 0.0
    %3518 = vmatprep.subr.mxu0 0.0
    %3519 = vmatpush1.msra.mxu0 0.0
    %3520 = vmatprep.subr.mxu0 0.0
    %v3521 = vand.u32 %v79, 4294901760
    %3522 = vmatpush1.msra.mxu0 %v3521
    %3523 = vmatprep.subr.mxu0 0.0
    %v3524 = vand.u32 %v78, 4294901760
    %3525 = vmatpush1.msra.mxu0 %v3524
    %3526 = vmatprep.subr.mxu0 0.0
    %3527 = vmatpush2.msra.mxu0 0.0
    %3528 = vmatprep.subr.mxu0 0.0
    %3529 = vmatpush2.msra.mxu0 0.0
    %3530 = vmatprep.subr.mxu0 0.0
    %3531 = vmatpush2.msra.mxu0 0.0
    %3532 = vmatprep.subr.mxu0 0.0
    %3533 = vmatpush2.msra.mxu0 0.0
    %3534 = vmatprep.subr.mxu0 0.0
    %3535 = vmatpush2.msra.mxu0 0.0
    %3536 = vmatprep.subr.mxu0 0.0
    %3537 = vmatpush2.msra.mxu0 0.0
    %3538 = vmatprep.subr.mxu0 0.0
    %3539 = vmatpush2.msra.mxu0 0.0
    %3540 = vmatprep.subr.mxu0 0.0
    %3541 = vmatpush2.msra.mxu0 0.0
    %3542 = vmatprep.subr.mxu0 0.0
    %3543 = vmatpush2.msra.mxu0 0.0
    %3544 = vmatprep.subr.mxu0 0.0
    %3545 = vmatpush2.msra.mxu0 0.0
    %3546 = vmatprep.subr.mxu0 0.0
    %3547 = vmatpush2.msra.mxu0 0.0
    %3548 = vmatprep.subr.mxu0 0.0
    %3549 = vmatpush2.msra.mxu0 0.0
    %3550 = vmatprep.subr.mxu0 0.0
    %3551 = vmatpush2.msra.mxu0 0.0
    %3552 = vmatprep.subr.mxu0 0.0
    %3553 = vmatpush2.msra.mxu0 0.0
    %3554 = vmatprep.subr.mxu0 0.0
    %3555 = vmatpush2.msra.mxu0 0.0
    %3556 = vmatprep.subr.mxu0 0.0
    %3557 = vmatpush2.msra.mxu0 0.0
    %3558 = vmatprep.mubr.f32.mxu0 0.0
    %v3559 = vand.u32 %v3104, 4294901760
    %3560 = vmatmul.mubr.f32.gmra.mxu0 %v3559
    %v3561 = vpop.f32.mrf.mxu0
    %v3562 = vadd.f32 %v3489, %v3561
    %v3563 = vpop.f32.mrf.mxu0
    %3564 = vdwg.mxu0
    %v3565 = vadd.f32 %v3562, %v1094
    %v3566 = vxor.u32 %v3565, 2147483648
    %v3567 = vmul.f32 %v3566, 1.442695
    %v3568 = vpow.pop %v3567
    %v3569 = vadd.f32 %v3568, 1.0
    %v3570 = vrcp.pop %v3569
    %v3571 = vmul.f32 1.0, %v3570
    %v3572 = vtanh.pop %v3565
    %v3573 = vmul.f32 %v3571, %v3094
    %3575 = vrot.lane.b32.xlu0 %v3572, 96
    %v3576 = vpop.permute.xlu0 %3575
    %v3578 = vmul.f32 %v3571, %v3576
    %3580 = vrot.lane.b32.xlu0 %v3578, 16
    %v3581 = vpop.permute.xlu0 %3580
    %v3583 = vadd.f32 %v3573, %v3581
    %v3584 = vtanh.pop %v3583
    %3586 = vrot.lane.b32.xlu0 %v3584, 32
    %v3587 = vpop.permute.xlu0 %3586
    %v3589 = vmul.f32 %v3571, %v3587
    %3591 = vrot.lane.b32.xlu0 %v3589, 80
    %v3592 = vpop.permute.xlu0 %3591
    %v3593 = vsel %vm1142, %v3592, 0
    %3595 = vmatprep.subr.mxu0 0.0
    %3596 = vmatpush1.msra.mxu0 0.0
    %3597 = vmatprep.subr.mxu0 0.0
    %3598 = vmatpush1.msra.mxu0 0.0
    %3599 = vmatprep.subr.mxu0 0.0
    %3600 = vmatpush1.msra.mxu0 0.0
    %3601 = vmatprep.subr.mxu0 0.0
    %3602 = vmatpush1.msra.mxu0 0.0
    %3603 = vmatprep.subr.mxu0 0.0
    %3604 = vmatpush1.msra.mxu0 0.0
    %3605 = vmatprep.subr.mxu0 0.0
    %3606 = vmatpush1.msra.mxu0 0.0
    %3607 = vmatprep.subr.mxu0 0.0
    %3608 = vmatpush1.msra.mxu0 0.0
    %3609 = vmatprep.subr.mxu0 0.0
    %3610 = vmatpush1.msra.mxu0 0.0
    %3611 = vmatprep.subr.mxu0 0.0
    %3612 = vmatpush1.msra.mxu0 0.0
    %3613 = vmatprep.subr.mxu0 0.0
    %3614 = vmatpush1.msra.mxu0 0.0
    %3615 = vmatprep.subr.mxu0 0.0
    %3616 = vmatpush1.msra.mxu0 0.0
    %3617 = vmatprep.subr.mxu0 0.0
    %3618 = vmatpush1.msra.mxu0 0.0
    %3619 = vmatprep.subr.mxu0 0.0
    %3620 = vmatpush1.msra.mxu0 0.0
    %3621 = vmatprep.subr.mxu0 0.0
    %3622 = vmatpush1.msra.mxu0 0.0
    %3623 = vmatprep.subr.mxu0 0.0
    %v3624 = vand.u32 %v79, 4294901760
    %3625 = vmatpush1.msra.mxu0 %v3624
    %3626 = vmatprep.subr.mxu0 0.0
    %v3627 = vand.u32 %v78, 4294901760
    %3628 = vmatpush1.msra.mxu0 %v3627
    %3629 = vmatprep.subr.mxu0 0.0
    %3630 = vmatpush2.msra.mxu0 0.0
    %3631 = vmatprep.subr.mxu0 0.0
    %3632 = vmatpush2.msra.mxu0 0.0
    %3633 = vmatprep.subr.mxu0 0.0
    %3634 = vmatpush2.msra.mxu0 0.0
    %3635 = vmatprep.subr.mxu0 0.0
    %3636 = vmatpush2.msra.mxu0 0.0
    %3637 = vmatprep.subr.mxu0 0.0
    %3638 = vmatpush2.msra.mxu0 0.0
    %3639 = vmatprep.subr.mxu0 0.0
    %3640 = vmatpush2.msra.mxu0 0.0
    %3641 = vmatprep.subr.mxu0 0.0
    %3642 = vmatpush2.msra.mxu0 0.0
    %3643 = vmatprep.subr.mxu0 0.0
    %3644 = vmatpush2.msra.mxu0 0.0
    %3645 = vmatprep.subr.mxu0 0.0
    %3646 = vmatpush2.msra.mxu0 0.0
    %3647 = vmatprep.subr.mxu0 0.0
    %3648 = vmatpush2.msra.mxu0 0.0
    %3649 = vmatprep.subr.mxu0 0.0
    %3650 = vmatpush2.msra.mxu0 0.0
    %3651 = vmatprep.subr.mxu0 0.0
    %3652 = vmatpush2.msra.mxu0 0.0
    %3653 = vmatprep.subr.mxu0 0.0
    %3654 = vmatpush2.msra.mxu0 0.0
    %3655 = vmatprep.subr.mxu0 0.0
    %3656 = vmatpush2.msra.mxu0 0.0
    %3657 = vmatprep.subr.mxu0 0.0
    %3658 = vmatpush2.msra.mxu0 0.0
    %3659 = vmatprep.subr.mxu0 0.0
    %3660 = vmatpush2.msra.mxu0 0.0
    %3661 = vmatprep.mubr.f32.mxu0 0.0
    %v3662 = vand.u32 %v3593, 4294901760
    %v3663 = vsub.f32 %v3593, %v3662
    %v3664 = vand.u32 %v3663, 4294901760
    %v3665 = vsub.f32 %v3663, %v3664
    %v3666 = vand.u32 %v3665, 4294901760
    %3667 = vmatmul.mubr.f32.gmra.mxu0 %v3666
    %v3668 = vpop.f32.mrf.mxu0
    %v3669 = vadd.f32 0.0, %v3668
    %v3670 = vpop.f32.mrf.mxu0
    %3671 = vdwg.mxu0
    %3672 = vmatprep.subr.mxu0 0.0
    %3673 = vmatpush1.msra.mxu0 0.0
    %3674 = vmatprep.subr.mxu0 0.0
    %3675 = vmatpush1.msra.mxu0 0.0
    %3676 = vmatprep.subr.mxu0 0.0
    %3677 = vmatpush1.msra.mxu0 0.0
    %3678 = vmatprep.subr.mxu0 0.0
    %3679 = vmatpush1.msra.mxu0 0.0
    %3680 = vmatprep.subr.mxu0 0.0
    %3681 = vmatpush1.msra.mxu0 0.0
    %3682 = vmatprep.subr.mxu0 0.0
    %3683 = vmatpush1.msra.mxu0 0.0
    %3684 = vmatprep.subr.mxu0 0.0
    %3685 = vmatpush1.msra.mxu0 0.0
    %3686 = vmatprep.subr.mxu0 0.0
    %3687 = vmatpush1.msra.mxu0 0.0
    %3688 = vmatprep.subr.mxu0 0.0
    %3689 = vmatpush1.msra.mxu0 0.0
    %3690 = vmatprep.subr.mxu0 0.0
    %3691 = vmatpush1.msra.mxu0 0.0
    %3692 = vmatprep.subr.mxu0 0.0
    %3693 = vmatpush1.msra.mxu0 0.0
    %3694 = vmatprep.subr.mxu0 0.0
    %3695 = vmatpush1.msra.mxu0 0.0
    %3696 = vmatprep.subr.mxu0 0.0
    %3697 = vmatpush1.msra.mxu0 0.0
    %3698 = vmatprep.subr.mxu0 0.0
    %3699 = vmatpush1.msra.mxu0 0.0
    %3700 = vmatprep.subr.mxu0 0.0
    %v3701 = vand.u32 %v79, 4294901760
    %v3702 = vsub.f32 %v79, %v3701
    %v3703 = vand.u32 %v3702, 4294901760
    %v3704 = vsub.f32 %v3702, %v3703
    %v3705 = vand.u32 %v3704, 4294901760
    %3706 = vmatpush1.msra.mxu0 %v3705
    %3707 = vmatprep.subr.mxu0 0.0
    %v3708 = vand.u32 %v78, 4294901760
    %v3709 = vsub.f32 %v78, %v3708
    %v3710 = vand.u32 %v3709, 4294901760
    %v3711 = vsub.f32 %v3709, %v3710
    %v3712 = vand.u32 %v3711, 4294901760
    %3713 = vmatpush1.msra.mxu0 %v3712
    %3714 = vmatprep.subr.mxu0 0.0
    %3715 = vmatpush2.msra.mxu0 0.0
    %3716 = vmatprep.subr.mxu0 0.0
    %3717 = vmatpush2.msra.mxu0 0.0
    %3718 = vmatprep.subr.mxu0 0.0
    %3719 = vmatpush2.msra.mxu0 0.0
    %3720 = vmatprep.subr.mxu0 0.0
    %3721 = vmatpush2.msra.mxu0 0.0
    %3722 = vmatprep.subr.mxu0 0.0
    %3723 = vmatpush2.msra.mxu0 0.0
    %3724 = vmatprep.subr.mxu0 0.0
    %3725 = vmatpush2.msra.mxu0 0.0
    %3726 = vmatprep.subr.mxu0 0.0
    %3727 = vmatpush2.msra.mxu0 0.0
    %3728 = vmatprep.subr.mxu0 0.0
    %3729 = vmatpush2.msra.mxu0 0.0
    %3730 = vmatprep.subr.mxu0 0.0
    %3731 = vmatpush2.msra.mxu0 0.0
    %3732 = vmatprep.subr.mxu0 0.0
    %3733 = vmatpush2.msra.mxu0 0.0
    %3734 = vmatprep.subr.mxu0 0.0
    %3735 = vmatpush2.msra.mxu0 0.0
    %3736 = vmatprep.subr.mxu0 0.0
    %3737 = vmatpush2.msra.mxu0 0.0
    %3738 = vmatprep.subr.mxu0 0.0
    %3739 = vmatpush2.msra.mxu0 0.0
    %3740 = vmatprep.subr.mxu0 0.0
    %3741 = vmatpush2.msra.mxu0 0.0
    %3742 = vmatprep.subr.mxu0 0.0
    %3743 = vmatpush2.msra.mxu0 0.0
    %3744 = vmatprep.subr.mxu0 0.0
    %3745 = vmatpush2.msra.mxu0 0.0
    %3746 = vmatprep.mubr.f32.mxu0 0.0
    %v3747 = vand.u32 %v3593, 4294901760
    %3748 = vmatmul.mubr.f32.gmra.mxu0 %v3747
    %v3749 = vpop.f32.mrf.mxu0
    %v3750 = vadd.f32 %v3669, %v3749
    %v3751 = vpop.f32.mrf.mxu0
    %3752 = vdwg.mxu0
    %3753 = vmatprep.subr.mxu0 0.0
    %3754 = vmatpush1.msra.mxu0 0.0
    %3755 = vmatprep.subr.mxu0 0.0
    %3756 = vmatpush1.msra.mxu0 0.0
    %3757 = vmatprep.subr.mxu0 0.0
    %3758 = vmatpush1.msra.mxu0 0.0
    %3759 = vmatprep.subr.mxu0 0.0
    %3760 = vmatpush1.msra.mxu0 0.0
    %3761 = vmatprep.subr.mxu0 0.0
    %3762 = vmatpush1.msra.mxu0 0.0
    %3763 = vmatprep.subr.mxu0 0.0
    %3764 = vmatpush1.msra.mxu0 0.0
    %3765 = vmatprep.subr.mxu0 0.0
    %3766 = vmatpush1.msra.mxu0 0.0
    %3767 = vmatprep.subr.mxu0 0.0
    %3768 = vmatpush1.msra.mxu0 0.0
    %3769 = vmatprep.subr.mxu0 0.0
    %3770 = vmatpush1.msra.mxu0 0.0
    %3771 = vmatprep.subr.mxu0 0.0
    %3772 = vmatpush1.msra.mxu0 0.0
    %3773 = vmatprep.subr.mxu0 0.0
    %3774 = vmatpush1.msra.mxu0 0.0
    %3775 = vmatprep.subr.mxu0 0.0
    %3776 = vmatpush1.msra.mxu0 0.0
    %3777 = vmatprep.subr.mxu0 0.0
    %3778 = vmatpush1.msra.mxu0 0.0
    %3779 = vmatprep.subr.mxu0 0.0
    %3780 = vmatpush1.msra.mxu0 0.0
    %3781 = vmatprep.subr.mxu0 0.0
    %v3782 = vand.u32 %v79, 4294901760
    %v3783 = vsub.f32 %v79, %v3782
    %3784 = vmatpush1.msra.mxu0 %v3783
    %3785 = vmatprep.subr.mxu0 0.0
    %v3786 = vand.u32 %v78, 4294901760
    %v3787 = vsub.f32 %v78, %v3786
    %3788 = vmatpush1.msra.mxu0 %v3787
    %3789 = vmatprep.subr.mxu0 0.0
    %3790 = vmatpush2.msra.mxu0 0.0
    %3791 = vmatprep.subr.mxu0 0.0
    %3792 = vmatpush2.msra.mxu0 0.0
    %3793 = vmatprep.subr.mxu0 0.0
    %3794 = vmatpush2.msra.mxu0 0.0
    %3795 = vmatprep.subr.mxu0 0.0
    %3796 = vmatpush2.msra.mxu0 0.0
    %3797 = vmatprep.subr.mxu0 0.0
    %3798 = vmatpush2.msra.mxu0 0.0
    %3799 = vmatprep.subr.mxu0 0.0
    %3800 = vmatpush2.msra.mxu0 0.0
    %3801 = vmatprep.subr.mxu0 0.0
    %3802 = vmatpush2.msra.mxu0 0.0
    %3803 = vmatprep.subr.mxu0 0.0
    %3804 = vmatpush2.msra.mxu0 0.0
    %3805 = vmatprep.subr.mxu0 0.0
    %3806 = vmatpush2.msra.mxu0 0.0
    %3807 = vmatprep.subr.mxu0 0.0
    %3808 = vmatpush2.msra.mxu0 0.0
    %3809 = vmatprep.subr.mxu0 0.0
    %3810 = vmatpush2.msra.mxu0 0.0
    %3811 = vmatprep.subr.mxu0 0.0
    %3812 = vmatpush2.msra.mxu0 0.0
    %3813 = vmatprep.subr.mxu0 0.0
    %3814 = vmatpush2.msra.mxu0 0.0
    %3815 = vmatprep.subr.mxu0 0.0
    %3816 = vmatpush2.msra.mxu0 0.0
    %3817 = vmatprep.subr.mxu0 0.0
    %3818 = vmatpush2.msra.mxu0 0.0
    %3819 = vmatprep.subr.mxu0 0.0
    %3820 = vmatpush2.msra.mxu0 0.0
    %3821 = vmatprep.mubr.f32.mxu0 0.0
    %v3822 = vand.u32 %v3593, 4294901760
    %v3823 = vsub.f32 %v3593, %v3822
    %3824 = vmatmul.mubr.f32.gmra.mxu0 %v3823
    %v3825 = vpop.f32.mrf.mxu0
    %v3826 = vadd.f32 %v3750, %v3825
    %v3827 = vpop.f32.mrf.mxu0
    %3828 = vdwg.mxu0
    %3829 = vmatprep.subr.mxu0 0.0
    %3830 = vmatpush1.msra.mxu0 0.0
    %3831 = vmatprep.subr.mxu0 0.0
    %3832 = vmatpush1.msra.mxu0 0.0
    %3833 = vmatprep.subr.mxu0 0.0
    %3834 = vmatpush1.msra.mxu0 0.0
    %3835 = vmatprep.subr.mxu0 0.0
    %3836 = vmatpush1.msra.mxu0 0.0
    %3837 = vmatprep.subr.mxu0 0.0
    %3838 = vmatpush1.msra.mxu0 0.0
    %3839 = vmatprep.subr.mxu0 0.0
    %3840 = vmatpush1.msra.mxu0 0.0
    %3841 = vmatprep.subr.mxu0 0.0
    %3842 = vmatpush1.msra.mxu0 0.0
    %3843 = vmatprep.subr.mxu0 0.0
    %3844 = vmatpush1.msra.mxu0 0.0
    %3845 = vmatprep.subr.mxu0 0.0
    %3846 = vmatpush1.msra.mxu0 0.0
    %3847 = vmatprep.subr.mxu0 0.0
    %3848 = vmatpush1.msra.mxu0 0.0
    %3849 = vmatprep.subr.mxu0 0.0
    %3850 = vmatpush1.msra.mxu0 0.0
    %3851 = vmatprep.subr.mxu0 0.0
    %3852 = vmatpush1.msra.mxu0 0.0
    %3853 = vmatprep.subr.mxu0 0.0
    %3854 = vmatpush1.msra.mxu0 0.0
    %3855 = vmatprep.subr.mxu0 0.0
    %3856 = vmatpush1.msra.mxu0 0.0
    %3857 = vmatprep.subr.mxu0 0.0
    %v3858 = vand.u32 %v79, 4294901760
    %3859 = vmatpush1.msra.mxu0 %v3858
    %3860 = vmatprep.subr.mxu0 0.0
    %v3861 = vand.u32 %v78, 4294901760
    %3862 = vmatpush1.msra.mxu0 %v3861
    %3863 = vmatprep.subr.mxu0 0.0
    %3864 = vmatpush2.msra.mxu0 0.0
    %3865 = vmatprep.subr.mxu0 0.0
    %3866 = vmatpush2.msra.mxu0 0.0
    %3867 = vmatprep.subr.mxu0 0.0
    %3868 = vmatpush2.msra.mxu0 0.0
    %3869 = vmatprep.subr.mxu0 0.0
    %3870 = vmatpush2.msra.mxu0 0.0
    %3871 = vmatprep.subr.mxu0 0.0
    %3872 = vmatpush2.msra.mxu0 0.0
    %3873 = vmatprep.subr.mxu0 0.0
    %3874 = vmatpush2.msra.mxu0 0.0
    %3875 = vmatprep.subr.mxu0 0.0
    %3876 = vmatpush2.msra.mxu0 0.0
    %3877 = vmatprep.subr.mxu0 0.0
    %3878 = vmatpush2.msra.mxu0 0.0
    %3879 = vmatprep.subr.mxu0 0.0
    %3880 = vmatpush2.msra.mxu0 0.0
    %3881 = vmatprep.subr.mxu0 0.0
    %3882 = vmatpush2.msra.mxu0 0.0
    %3883 = vmatprep.subr.mxu0 0.0
    %3884 = vmatpush2.msra.mxu0 0.0
    %3885 = vmatprep.subr.mxu0 0.0
    %3886 = vmatpush2.msra.mxu0 0.0
    %3887 = vmatprep.subr.mxu0 0.0
    %3888 = vmatpush2.msra.mxu0 0.0
    %3889 = vmatprep.subr.mxu0 0.0
    %3890 = vmatpush2.msra.mxu0 0.0
    %3891 = vmatprep.subr.mxu0 0.0
    %3892 = vmatpush2.msra.mxu0 0.0
    %3893 = vmatprep.subr.mxu0 0.0
    %3894 = vmatpush2.msra.mxu0 0.0
    %3895 = vmatprep.mubr.f32.mxu0 0.0
    %v3896 = vand.u32 %v3593, 4294901760
    %v3897 = vsub.f32 %v3593, %v3896
    %v3898 = vand.u32 %v3897, 4294901760
    %3899 = vmatmul.mubr.f32.gmra.mxu0 %v3898
    %v3900 = vpop.f32.mrf.mxu0
    %v3901 = vadd.f32 %v3826, %v3900
    %v3902 = vpop.f32.mrf.mxu0
    %3903 = vdwg.mxu0
    %3904 = vmatprep.subr.mxu0 0.0
    %3905 = vmatpush1.msra.mxu0 0.0
    %3906 = vmatprep.subr.mxu0 0.0
    %3907 = vmatpush1.msra.mxu0 0.0
    %3908 = vmatprep.subr.mxu0 0.0
    %3909 = vmatpush1.msra.mxu0 0.0
    %3910 = vmatprep.subr.mxu0 0.0
    %3911 = vmatpush1.msra.mxu0 0.0
    %3912 = vmatprep.subr.mxu0 0.0
    %3913 = vmatpush1.msra.mxu0 0.0
    %3914 = vmatprep.subr.mxu0 0.0
    %3915 = vmatpush1.msra.mxu0 0.0
    %3916 = vmatprep.subr.mxu0 0.0
    %3917 = vmatpush1.msra.mxu0 0.0
    %3918 = vmatprep.subr.mxu0 0.0
    %3919 = vmatpush1.msra.mxu0 0.0
    %3920 = vmatprep.subr.mxu0 0.0
    %3921 = vmatpush1.msra.mxu0 0.0
    %3922 = vmatprep.subr.mxu0 0.0
    %3923 = vmatpush1.msra.mxu0 0.0
    %3924 = vmatprep.subr.mxu0 0.0
    %3925 = vmatpush1.msra.mxu0 0.0
    %3926 = vmatprep.subr.mxu0 0.0
    %3927 = vmatpush1.msra.mxu0 0.0
    %3928 = vmatprep.subr.mxu0 0.0
    %3929 = vmatpush1.msra.mxu0 0.0
    %3930 = vmatprep.subr.mxu0 0.0
    %3931 = vmatpush1.msra.mxu0 0.0
    %3932 = vmatprep.subr.mxu0 0.0
    %v3933 = vand.u32 %v79, 4294901760
    %v3934 = vsub.f32 %v79, %v3933
    %v3935 = vand.u32 %v3934, 4294901760
    %3936 = vmatpush1.msra.mxu0 %v3935
    %3937 = vmatprep.subr.mxu0 0.0
    %v3938 = vand.u32 %v78, 4294901760
    %v3939 = vsub.f32 %v78, %v3938
    %v3940 = vand.u32 %v3939, 4294901760
    %3941 = vmatpush1.msra.mxu0 %v3940
    %3942 = vmatprep.subr.mxu0 0.0
    %3943 = vmatpush2.msra.mxu0 0.0
    %3944 = vmatprep.subr.mxu0 0.0
    %3945 = vmatpush2.msra.mxu0 0.0
    %3946 = vmatprep.subr.mxu0 0.0
    %3947 = vmatpush2.msra.mxu0 0.0
    %3948 = vmatprep.subr.mxu0 0.0
    %3949 = vmatpush2.msra.mxu0 0.0
    %3950 = vmatprep.subr.mxu0 0.0
    %3951 = vmatpush2.msra.mxu0 0.0
    %3952 = vmatprep.subr.mxu0 0.0
    %3953 = vmatpush2.msra.mxu0 0.0
    %3954 = vmatprep.subr.mxu0 0.0
    %3955 = vmatpush2.msra.mxu0 0.0
    %3956 = vmatprep.subr.mxu0 0.0
    %3957 = vmatpush2.msra.mxu0 0.0
    %3958 = vmatprep.subr.mxu0 0.0
    %3959 = vmatpush2.msra.mxu0 0.0
    %3960 = vmatprep.subr.mxu0 0.0
    %3961 = vmatpush2.msra.mxu0 0.0
    %3962 = vmatprep.subr.mxu0 0.0
    %3963 = vmatpush2.msra.mxu0 0.0
    %3964 = vmatprep.subr.mxu0 0.0
    %3965 = vmatpush2.msra.mxu0 0.0
    %3966 = vmatprep.subr.mxu0 0.0
    %3967 = vmatpush2.msra.mxu0 0.0
    %3968 = vmatprep.subr.mxu0 0.0
    %3969 = vmatpush2.msra.mxu0 0.0
    %3970 = vmatprep.subr.mxu0 0.0
    %3971 = vmatpush2.msra.mxu0 0.0
    %3972 = vmatprep.subr.mxu0 0.0
    %3973 = vmatpush2.msra.mxu0 0.0
    %3974 = vmatprep.mubr.f32.mxu0 0.0
    %v3975 = vand.u32 %v3593, 4294901760
    %3976 = vmatmul.mubr.f32.gmra.mxu0 %v3975
    %v3977 = vpop.f32.mrf.mxu0
    %v3978 = vadd.f32 %v3901, %v3977
    %v3979 = vpop.f32.mrf.mxu0
    %3980 = vdwg.mxu0
    %3981 = vmatprep.subr.mxu0 0.0
    %3982 = vmatpush1.msra.mxu0 0.0
    %3983 = vmatprep.subr.mxu0 0.0
    %3984 = vmatpush1.msra.mxu0 0.0
    %3985 = vmatprep.subr.mxu0 0.0
    %3986 = vmatpush1.msra.mxu0 0.0
    %3987 = vmatprep.subr.mxu0 0.0
    %3988 = vmatpush1.msra.mxu0 0.0
    %3989 = vmatprep.subr.mxu0 0.0
    %3990 = vmatpush1.msra.mxu0 0.0
    %3991 = vmatprep.subr.mxu0 0.0
    %3992 = vmatpush1.msra.mxu0 0.0
    %3993 = vmatprep.subr.mxu0 0.0
    %3994 = vmatpush1.msra.mxu0 0.0
    %3995 = vmatprep.subr.mxu0 0.0
    %3996 = vmatpush1.msra.mxu0 0.0
    %3997 = vmatprep.subr.mxu0 0.0
    %3998 = vmatpush1.msra.mxu0 0.0
    %3999 = vmatprep.subr.mxu0 0.0
    %4000 = vmatpush1.msra.mxu0 0.0
    %4001 = vmatprep.subr.mxu0 0.0
    %4002 = vmatpush1.msra.mxu0 0.0
    %4003 = vmatprep.subr.mxu0 0.0
    %4004 = vmatpush1.msra.mxu0 0.0
    %4005 = vmatprep.subr.mxu0 0.0
    %4006 = vmatpush1.msra.mxu0 0.0
    %4007 = vmatprep.subr.mxu0 0.0
    %4008 = vmatpush1.msra.mxu0 0.0
    %4009 = vmatprep.subr.mxu0 0.0
    %v4010 = vand.u32 %v79, 4294901760
    %4011 = vmatpush1.msra.mxu0 %v4010
    %4012 = vmatprep.subr.mxu0 0.0
    %v4013 = vand.u32 %v78, 4294901760
    %4014 = vmatpush1.msra.mxu0 %v4013
    %4015 = vmatprep.subr.mxu0 0.0
    %4016 = vmatpush2.msra.mxu0 0.0
    %4017 = vmatprep.subr.mxu0 0.0
    %4018 = vmatpush2.msra.mxu0 0.0
    %4019 = vmatprep.subr.mxu0 0.0
    %4020 = vmatpush2.msra.mxu0 0.0
    %4021 = vmatprep.subr.mxu0 0.0
    %4022 = vmatpush2.msra.mxu0 0.0
    %4023 = vmatprep.subr.mxu0 0.0
    %4024 = vmatpush2.msra.mxu0 0.0
    %4025 = vmatprep.subr.mxu0 0.0
    %4026 = vmatpush2.msra.mxu0 0.0
    %4027 = vmatprep.subr.mxu0 0.0
    %4028 = vmatpush2.msra.mxu0 0.0
    %4029 = vmatprep.subr.mxu0 0.0
    %4030 = vmatpush2.msra.mxu0 0.0
    %4031 = vmatprep.subr.mxu0 0.0
    %4032 = vmatpush2.msra.mxu0 0.0
    %4033 = vmatprep.subr.mxu0 0.0
    %4034 = vmatpush2.msra.mxu0 0.0
    %4035 = vmatprep.subr.mxu0 0.0
    %4036 = vmatpush2.msra.mxu0 0.0
    %4037 = vmatprep.subr.mxu0 0.0
    %4038 = vmatpush2.msra.mxu0 0.0
    %4039 = vmatprep.subr.mxu0 0.0
    %4040 = vmatpush2.msra.mxu0 0.0
    %4041 = vmatprep.subr.mxu0 0.0
    %4042 = vmatpush2.msra.mxu0 0.0
    %4043 = vmatprep.subr.mxu0 0.0
    %4044 = vmatpush2.msra.mxu0 0.0
    %4045 = vmatprep.subr.mxu0 0.0
    %4046 = vmatpush2.msra.mxu0 0.0
    %4047 = vmatprep.mubr.f32.mxu0 0.0
    %v4048 = vand.u32 %v3593, 4294901760
    %4049 = vmatmul.mubr.f32.gmra.mxu0 %v4048
    %v4050 = vpop.f32.mrf.mxu0
    %v4051 = vadd.f32 %v3978, %v4050
    %v4052 = vpop.f32.mrf.mxu0
    %4053 = vdwg.mxu0
    %v4054 = vadd.f32 %v4051, %v1099
    %v4055 = vxor.u32 %v4054, 2147483648
    %v4056 = vmul.f32 %v4055, 1.442695
    %v4057 = vpow.pop %v4056
    %v4058 = vadd.f32 %v4057, 1.0
    %v4059 = vrcp.pop %v4058
    %v4060 = vmul.f32 1.0, %v4059
    %v4061 = vtanh.pop %v4054
    %v4062 = vmul.f32 %v4060, %v3583
    %4064 = vrot.lane.b32.xlu0 %v4061, 96
    %v4065 = vpop.permute.xlu0 %4064
    %v4067 = vmul.f32 %v4060, %v4065
    %4069 = vrot.lane.b32.xlu0 %v4067, 16
    %v4070 = vpop.permute.xlu0 %4069
    %v4072 = vadd.f32 %v4062, %v4070
    %v4073 = vtanh.pop %v4072
    %4075 = vrot.lane.b32.xlu0 %v4073, 32
    %v4076 = vpop.permute.xlu0 %4075
    %v4078 = vmul.f32 %v4060, %v4076
    %4080 = vrot.lane.b32.xlu0 %v4078, 80
    %v4081 = vpop.permute.xlu0 %4080
    %v4082 = vsel %vm1142, %v4081, 0
    %4084 = vmatprep.subr.mxu0 0.0
    %4085 = vmatpush1.msra.mxu0 0.0
    %4086 = vmatprep.subr.mxu0 0.0
    %4087 = vmatpush1.msra.mxu0 0.0
    %4088 = vmatprep.subr.mxu0 0.0
    %4089 = vmatpush1.msra.mxu0 0.0
    %4090 = vmatprep.subr.mxu0 0.0
    %4091 = vmatpush1.msra.mxu0 0.0
    %4092 = vmatprep.subr.mxu0 0.0
    %4093 = vmatpush1.msra.mxu0 0.0
    %4094 = vmatprep.subr.mxu0 0.0
    %4095 = vmatpush1.msra.mxu0 0.0
    %4096 = vmatprep.subr.mxu0 0.0
    %4097 = vmatpush1.msra.mxu0 0.0
    %4098 = vmatprep.subr.mxu0 0.0
    %4099 = vmatpush1.msra.mxu0 0.0
    %4100 = vmatprep.subr.mxu0 0.0
    %4101 = vmatpush1.msra.mxu0 0.0
    %4102 = vmatprep.subr.mxu0 0.0
    %4103 = vmatpush1.msra.mxu0 0.0
    %4104 = vmatprep.subr.mxu0 0.0
    %4105 = vmatpush1.msra.mxu0 0.0
    %4106 = vmatprep.subr.mxu0 0.0
    %4107 = vmatpush1.msra.mxu0 0.0
    %4108 = vmatprep.subr.mxu0 0.0
    %4109 = vmatpush1.msra.mxu0 0.0
    %4110 = vmatprep.subr.mxu0 0.0
    %4111 = vmatpush1.msra.mxu0 0.0
    %4112 = vmatprep.subr.mxu0 0.0
    %v4113 = vand.u32 %v79, 4294901760
    %4114 = vmatpush1.msra.mxu0 %v4113
    %4115 = vmatprep.subr.mxu0 0.0
    %v4116 = vand.u32 %v78, 4294901760
    %4117 = vmatpush1.msra.mxu0 %v4116
    %4118 = vmatprep.subr.mxu0 0.0
    %4119 = vmatpush2.msra.mxu0 0.0
    %4120 = vmatprep.subr.mxu0 0.0
    %4121 = vmatpush2.msra.mxu0 0.0
    %4122 = vmatprep.subr.mxu0 0.0
    %4123 = vmatpush2.msra.mxu0 0.0
    %4124 = vmatprep.subr.mxu0 0.0
    %4125 = vmatpush2.msra.mxu0 0.0
    %4126 = vmatprep.subr.mxu0 0.0
    %4127 = vmatpush2.msra.mxu0 0.0
    %4128 = vmatprep.subr.mxu0 0.0
    %4129 = vmatpush2.msra.mxu0 0.0
    %4130 = vmatprep.subr.mxu0 0.0
    %4131 = vmatpush2.msra.mxu0 0.0
    %4132 = vmatprep.subr.mxu0 0.0
    %4133 = vmatpush2.msra.mxu0 0.0
    %4134 = vmatprep.subr.mxu0 0.0
    %4135 = vmatpush2.msra.mxu0 0.0
    %4136 = vmatprep.subr.mxu0 0.0
    %4137 = vmatpush2.msra.mxu0 0.0
    %4138 = vmatprep.subr.mxu0 0.0
    %4139 = vmatpush2.msra.mxu0 0.0
    %4140 = vmatprep.subr.mxu0 0.0
    %4141 = vmatpush2.msra.mxu0 0.0
    %4142 = vmatprep.subr.mxu0 0.0
    %4143 = vmatpush2.msra.mxu0 0.0
    %4144 = vmatprep.subr.mxu0 0.0
    %4145 = vmatpush2.msra.mxu0 0.0
    %4146 = vmatprep.subr.mxu0 0.0
    %4147 = vmatpush2.msra.mxu0 0.0
    %4148 = vmatprep.subr.mxu0 0.0
    %4149 = vmatpush2.msra.mxu0 0.0
    %4150 = vmatprep.mubr.f32.mxu0 0.0
    %v4151 = vand.u32 %v4082, 4294901760
    %v4152 = vsub.f32 %v4082, %v4151
    %v4153 = vand.u32 %v4152, 4294901760
    %v4154 = vsub.f32 %v4152, %v4153
    %v4155 = vand.u32 %v4154, 4294901760
    %4156 = vmatmul.mubr.f32.gmra.mxu0 %v4155
    %v4157 = vpop.f32.mrf.mxu0
    %v4158 = vadd.f32 0.0, %v4157
    %v4159 = vpop.f32.mrf.mxu0
    %4160 = vdwg.mxu0
    %4161 = vmatprep.subr.mxu0 0.0
    %4162 = vmatpush1.msra.mxu0 0.0
    %4163 = vmatprep.subr.mxu0 0.0
    %4164 = vmatpush1.msra.mxu0 0.0
    %4165 = vmatprep.subr.mxu0 0.0
    %4166 = vmatpush1.msra.mxu0 0.0
    %4167 = vmatprep.subr.mxu0 0.0
    %4168 = vmatpush1.msra.mxu0 0.0
    %4169 = vmatprep.subr.mxu0 0.0
    %4170 = vmatpush1.msra.mxu0 0.0
    %4171 = vmatprep.subr.mxu0 0.0
    %4172 = vmatpush1.msra.mxu0 0.0
    %4173 = vmatprep.subr.mxu0 0.0
    %4174 = vmatpush1.msra.mxu0 0.0
    %4175 = vmatprep.subr.mxu0 0.0
    %4176 = vmatpush1.msra.mxu0 0.0
    %4177 = vmatprep.subr.mxu0 0.0
    %4178 = vmatpush1.msra.mxu0 0.0
    %4179 = vmatprep.subr.mxu0 0.0
    %4180 = vmatpush1.msra.mxu0 0.0
    %4181 = vmatprep.subr.mxu0 0.0
    %4182 = vmatpush1.msra.mxu0 0.0
    %4183 = vmatprep.subr.mxu0 0.0
    %4184 = vmatpush1.msra.mxu0 0.0
    %4185 = vmatprep.subr.mxu0 0.0
    %4186 = vmatpush1.msra.mxu0 0.0
    %4187 = vmatprep.subr.mxu0 0.0
    %4188 = vmatpush1.msra.mxu0 0.0
    %4189 = vmatprep.subr.mxu0 0.0
    %v4190 = vand.u32 %v79, 4294901760
    %v4191 = vsub.f32 %v79, %v4190
    %v4192 = vand.u32 %v4191, 4294901760
    %v4193 = vsub.f32 %v4191, %v4192
    %v4194 = vand.u32 %v4193, 4294901760
    %4195 = vmatpush1.msra.mxu0 %v4194
    %4196 = vmatprep.subr.mxu0 0.0
    %v4197 = vand.u32 %v78, 4294901760
    %v4198 = vsub.f32 %v78, %v4197
    %v4199 = vand.u32 %v4198, 4294901760
    %v4200 = vsub.f32 %v4198, %v4199
    %v4201 = vand.u32 %v4200, 4294901760
    %4202 = vmatpush1.msra.mxu0 %v4201
    %4203 = vmatprep.subr.mxu0 0.0
    %4204 = vmatpush2.msra.mxu0 0.0
    %4205 = vmatprep.subr.mxu0 0.0
    %4206 = vmatpush2.msra.mxu0 0.0
    %4207 = vmatprep.subr.mxu0 0.0
    %4208 = vmatpush2.msra.mxu0 0.0
    %4209 = vmatprep.subr.mxu0 0.0
    %4210 = vmatpush2.msra.mxu0 0.0
    %4211 = vmatprep.subr.mxu0 0.0
    %4212 = vmatpush2.msra.mxu0 0.0
    %4213 = vmatprep.subr.mxu0 0.0
    %4214 = vmatpush2.msra.mxu0 0.0
    %4215 = vmatprep.subr.mxu0 0.0
    %4216 = vmatpush2.msra.mxu0 0.0
    %4217 = vmatprep.subr.mxu0 0.0
    %4218 = vmatpush2.msra.mxu0 0.0
    %4219 = vmatprep.subr.mxu0 0.0
    %4220 = vmatpush2.msra.mxu0 0.0
    %4221 = vmatprep.subr.mxu0 0.0
    %4222 = vmatpush2.msra.mxu0 0.0
    %4223 = vmatprep.subr.mxu0 0.0
    %4224 = vmatpush2.msra.mxu0 0.0
    %4225 = vmatprep.subr.mxu0 0.0
    %4226 = vmatpush2.msra.mxu0 0.0
    %4227 = vmatprep.subr.mxu0 0.0
    %4228 = vmatpush2.msra.mxu0 0.0
    %4229 = vmatprep.subr.mxu0 0.0
    %4230 = vmatpush2.msra.mxu0 0.0
    %4231 = vmatprep.subr.mxu0 0.0
    %4232 = vmatpush2.msra.mxu0 0.0
    %4233 = vmatprep.subr.mxu0 0.0
    %4234 = vmatpush2.msra.mxu0 0.0
    %4235 = vmatprep.mubr.f32.mxu0 0.0
    %v4236 = vand.u32 %v4082, 4294901760
    %4237 = vmatmul.mubr.f32.gmra.mxu0 %v4236
    %v4238 = vpop.f32.mrf.mxu0
    %v4239 = vadd.f32 %v4158, %v4238
    %v4240 = vpop.f32.mrf.mxu0
    %4241 = vdwg.mxu0
    %4242 = vmatprep.subr.mxu0 0.0
    %4243 = vmatpush1.msra.mxu0 0.0
    %4244 = vmatprep.subr.mxu0 0.0
    %4245 = vmatpush1.msra.mxu0 0.0
    %4246 = vmatprep.subr.mxu0 0.0
    %4247 = vmatpush1.msra.mxu0 0.0
    %4248 = vmatprep.subr.mxu0 0.0
    %4249 = vmatpush1.msra.mxu0 0.0
    %4250 = vmatprep.subr.mxu0 0.0
    %4251 = vmatpush1.msra.mxu0 0.0
    %4252 = vmatprep.subr.mxu0 0.0
    %4253 = vmatpush1.msra.mxu0 0.0
    %4254 = vmatprep.subr.mxu0 0.0
    %4255 = vmatpush1.msra.mxu0 0.0
    %4256 = vmatprep.subr.mxu0 0.0
    %4257 = vmatpush1.msra.mxu0 0.0
    %4258 = vmatprep.subr.mxu0 0.0
    %4259 = vmatpush1.msra.mxu0 0.0
    %4260 = vmatprep.subr.mxu0 0.0
    %4261 = vmatpush1.msra.mxu0 0.0
    %4262 = vmatprep.subr.mxu0 0.0
    %4263 = vmatpush1.msra.mxu0 0.0
    %4264 = vmatprep.subr.mxu0 0.0
    %4265 = vmatpush1.msra.mxu0 0.0
    %4266 = vmatprep.subr.mxu0 0.0
    %4267 = vmatpush1.msra.mxu0 0.0
    %4268 = vmatprep.subr.mxu0 0.0
    %4269 = vmatpush1.msra.mxu0 0.0
    %4270 = vmatprep.subr.mxu0 0.0
    %v4271 = vand.u32 %v79, 4294901760
    %v4272 = vsub.f32 %v79, %v4271
    %4273 = vmatpush1.msra.mxu0 %v4272
    %4274 = vmatprep.subr.mxu0 0.0
    %v4275 = vand.u32 %v78, 4294901760
    %v4276 = vsub.f32 %v78, %v4275
    %4277 = vmatpush1.msra.mxu0 %v4276
    %4278 = vmatprep.subr.mxu0 0.0
    %4279 = vmatpush2.msra.mxu0 0.0
    %4280 = vmatprep.subr.mxu0 0.0
    %4281 = vmatpush2.msra.mxu0 0.0
    %4282 = vmatprep.subr.mxu0 0.0
    %4283 = vmatpush2.msra.mxu0 0.0
    %4284 = vmatprep.subr.mxu0 0.0
    %4285 = vmatpush2.msra.mxu0 0.0
    %4286 = vmatprep.subr.mxu0 0.0
    %4287 = vmatpush2.msra.mxu0 0.0
    %4288 = vmatprep.subr.mxu0 0.0
    %4289 = vmatpush2.msra.mxu0 0.0
    %4290 = vmatprep.subr.mxu0 0.0
    %4291 = vmatpush2.msra.mxu0 0.0
    %4292 = vmatprep.subr.mxu0 0.0
    %4293 = vmatpush2.msra.mxu0 0.0
    %4294 = vmatprep.subr.mxu0 0.0
    %4295 = vmatpush2.msra.mxu0 0.0
    %4296 = vmatprep.subr.mxu0 0.0
    %4297 = vmatpush2.msra.mxu0 0.0
    %4298 = vmatprep.subr.mxu0 0.0
    %4299 = vmatpush2.msra.mxu0 0.0
    %4300 = vmatprep.subr.mxu0 0.0
    %4301 = vmatpush2.msra.mxu0 0.0
    %4302 = vmatprep.subr.mxu0 0.0
    %4303 = vmatpush2.msra.mxu0 0.0
    %4304 = vmatprep.subr.mxu0 0.0
    %4305 = vmatpush2.msra.mxu0 0.0
    %4306 = vmatprep.subr.mxu0 0.0
    %4307 = vmatpush2.msra.mxu0 0.0
    %4308 = vmatprep.subr.mxu0 0.0
    %4309 = vmatpush2.msra.mxu0 0.0
    %4310 = vmatprep.mubr.f32.mxu0 0.0
    %v4311 = vand.u32 %v4082, 4294901760
    %v4312 = vsub.f32 %v4082, %v4311
    %4313 = vmatmul.mubr.f32.gmra.mxu0 %v4312
    %v4314 = vpop.f32.mrf.mxu0
    %v4315 = vadd.f32 %v4239, %v4314
    %v4316 = vpop.f32.mrf.mxu0
    %4317 = vdwg.mxu0
    %4318 = vmatprep.subr.mxu0 0.0
    %4319 = vmatpush1.msra.mxu0 0.0
    %4320 = vmatprep.subr.mxu0 0.0
    %4321 = vmatpush1.msra.mxu0 0.0
    %4322 = vmatprep.subr.mxu0 0.0
    %4323 = vmatpush1.msra.mxu0 0.0
    %4324 = vmatprep.subr.mxu0 0.0
    %4325 = vmatpush1.msra.mxu0 0.0
    %4326 = vmatprep.subr.mxu0 0.0
    %4327 = vmatpush1.msra.mxu0 0.0
    %4328 = vmatprep.subr.mxu0 0.0
    %4329 = vmatpush1.msra.mxu0 0.0
    %4330 = vmatprep.subr.mxu0 0.0
    %4331 = vmatpush1.msra.mxu0 0.0
    %4332 = vmatprep.subr.mxu0 0.0
    %4333 = vmatpush1.msra.mxu0 0.0
    %4334 = vmatprep.subr.mxu0 0.0
    %4335 = vmatpush1.msra.mxu0 0.0
    %4336 = vmatprep.subr.mxu0 0.0
    %4337 = vmatpush1.msra.mxu0 0.0
    %4338 = vmatprep.subr.mxu0 0.0
    %4339 = vmatpush1.msra.mxu0 0.0
    %4340 = vmatprep.subr.mxu0 0.0
    %4341 = vmatpush1.msra.mxu0 0.0
    %4342 = vmatprep.subr.mxu0 0.0
    %4343 = vmatpush1.msra.mxu0 0.0
    %4344 = vmatprep.subr.mxu0 0.0
    %4345 = vmatpush1.msra.mxu0 0.0
    %4346 = vmatprep.subr.mxu0 0.0
    %v4347 = vand.u32 %v79, 4294901760
    %4348 = vmatpush1.msra.mxu0 %v4347
    %4349 = vmatprep.subr.mxu0 0.0
    %v4350 = vand.u32 %v78, 4294901760
    %4351 = vmatpush1.msra.mxu0 %v4350
    %4352 = vmatprep.subr.mxu0 0.0
    %4353 = vmatpush2.msra.mxu0 0.0
    %4354 = vmatprep.subr.mxu0 0.0
    %4355 = vmatpush2.msra.mxu0 0.0
    %4356 = vmatprep.subr.mxu0 0.0
    %4357 = vmatpush2.msra.mxu0 0.0
    %4358 = vmatprep.subr.mxu0 0.0
    %4359 = vmatpush2.msra.mxu0 0.0
    %4360 = vmatprep.subr.mxu0 0.0
    %4361 = vmatpush2.msra.mxu0 0.0
    %4362 = vmatprep.subr.mxu0 0.0
    %4363 = vmatpush2.msra.mxu0 0.0
    %4364 = vmatprep.subr.mxu0 0.0
    %4365 = vmatpush2.msra.mxu0 0.0
    %4366 = vmatprep.subr.mxu0 0.0
    %4367 = vmatpush2.msra.mxu0 0.0
    %4368 = vmatprep.subr.mxu0 0.0
    %4369 = vmatpush2.msra.mxu0 0.0
    %4370 = vmatprep.subr.mxu0 0.0
    %4371 = vmatpush2.msra.mxu0 0.0
    %4372 = vmatprep.subr.mxu0 0.0
    %4373 = vmatpush2.msra.mxu0 0.0
    %4374 = vmatprep.subr.mxu0 0.0
    %4375 = vmatpush2.msra.mxu0 0.0
    %4376 = vmatprep.subr.mxu0 0.0
    %4377 = vmatpush2.msra.mxu0 0.0
    %4378 = vmatprep.subr.mxu0 0.0
    %4379 = vmatpush2.msra.mxu0 0.0
    %4380 = vmatprep.subr.mxu0 0.0
    %4381 = vmatpush2.msra.mxu0 0.0
    %4382 = vmatprep.subr.mxu0 0.0
    %4383 = vmatpush2.msra.mxu0 0.0
    %4384 = vmatprep.mubr.f32.mxu0 0.0
    %v4385 = vand.u32 %v4082, 4294901760
    %v4386 = vsub.f32 %v4082, %v4385
    %v4387 = vand.u32 %v4386, 4294901760
    %4388 = vmatmul.mubr.f32.gmra.mxu0 %v4387
    %v4389 = vpop.f32.mrf.mxu0
    %v4390 = vadd.f32 %v4315, %v4389
    %v4391 = vpop.f32.mrf.mxu0
    %4392 = vdwg.mxu0
    %4393 = vmatprep.subr.mxu0 0.0
    %4394 = vmatpush1.msra.mxu0 0.0
    %4395 = vmatprep.subr.mxu0 0.0
    %4396 = vmatpush1.msra.mxu0 0.0
    %4397 = vmatprep.subr.mxu0 0.0
    %4398 = vmatpush1.msra.mxu0 0.0
    %4399 = vmatprep.subr.mxu0 0.0
    %4400 = vmatpush1.msra.mxu0 0.0
    %4401 = vmatprep.subr.mxu0 0.0
    %4402 = vmatpush1.msra.mxu0 0.0
    %4403 = vmatprep.subr.mxu0 0.0
    %4404 = vmatpush1.msra.mxu0 0.0
    %4405 = vmatprep.subr.mxu0 0.0
    %4406 = vmatpush1.msra.mxu0 0.0
    %4407 = vmatprep.subr.mxu0 0.0
    %4408 = vmatpush1.msra.mxu0 0.0
    %4409 = vmatprep.subr.mxu0 0.0
    %4410 = vmatpush1.msra.mxu0 0.0
    %4411 = vmatprep.subr.mxu0 0.0
    %4412 = vmatpush1.msra.mxu0 0.0
    %4413 = vmatprep.subr.mxu0 0.0
    %4414 = vmatpush1.msra.mxu0 0.0
    %4415 = vmatprep.subr.mxu0 0.0
    %4416 = vmatpush1.msra.mxu0 0.0
    %4417 = vmatprep.subr.mxu0 0.0
    %4418 = vmatpush1.msra.mxu0 0.0
    %4419 = vmatprep.subr.mxu0 0.0
    %4420 = vmatpush1.msra.mxu0 0.0
    %4421 = vmatprep.subr.mxu0 0.0
    %v4422 = vand.u32 %v79, 4294901760
    %v4423 = vsub.f32 %v79, %v4422
    %v4424 = vand.u32 %v4423, 4294901760
    %4425 = vmatpush1.msra.mxu0 %v4424
    %4426 = vmatprep.subr.mxu0 0.0
    %v4427 = vand.u32 %v78, 4294901760
    %v4428 = vsub.f32 %v78, %v4427
    %v4429 = vand.u32 %v4428, 4294901760
    %4430 = vmatpush1.msra.mxu0 %v4429
    %4431 = vmatprep.subr.mxu0 0.0
    %4432 = vmatpush2.msra.mxu0 0.0
    %4433 = vmatprep.subr.mxu0 0.0
    %4434 = vmatpush2.msra.mxu0 0.0
    %4435 = vmatprep.subr.mxu0 0.0
    %4436 = vmatpush2.msra.mxu0 0.0
    %4437 = vmatprep.subr.mxu0 0.0
    %4438 = vmatpush2.msra.mxu0 0.0
    %4439 = vmatprep.subr.mxu0 0.0
    %4440 = vmatpush2.msra.mxu0 0.0
    %4441 = vmatprep.subr.mxu0 0.0
    %4442 = vmatpush2.msra.mxu0 0.0
    %4443 = vmatprep.subr.mxu0 0.0
    %4444 = vmatpush2.msra.mxu0 0.0
    %4445 = vmatprep.subr.mxu0 0.0
    %4446 = vmatpush2.msra.mxu0 0.0
    %4447 = vmatprep.subr.mxu0 0.0
    %4448 = vmatpush2.msra.mxu0 0.0
    %4449 = vmatprep.subr.mxu0 0.0
    %4450 = vmatpush2.msra.mxu0 0.0
    %4451 = vmatprep.subr.mxu0 0.0
    %4452 = vmatpush2.msra.mxu0 0.0
    %4453 = vmatprep.subr.mxu0 0.0
    %4454 = vmatpush2.msra.mxu0 0.0
    %4455 = vmatprep.subr.mxu0 0.0
    %4456 = vmatpush2.msra.mxu0 0.0
    %4457 = vmatprep.subr.mxu0 0.0
    %4458 = vmatpush2.msra.mxu0 0.0
    %4459 = vmatprep.subr.mxu0 0.0
    %4460 = vmatpush2.msra.mxu0 0.0
    %4461 = vmatprep.subr.mxu0 0.0
    %4462 = vmatpush2.msra.mxu0 0.0
    %4463 = vmatprep.mubr.f32.mxu0 0.0
    %v4464 = vand.u32 %v4082, 4294901760
    %4465 = vmatmul.mubr.f32.gmra.mxu0 %v4464
    %v4466 = vpop.f32.mrf.mxu0
    %v4467 = vadd.f32 %v4390, %v4466
    %v4468 = vpop.f32.mrf.mxu0
    %4469 = vdwg.mxu0
    %4470 = vmatprep.subr.mxu0 0.0
    %4471 = vmatpush1.msra.mxu0 0.0
    %4472 = vmatprep.subr.mxu0 0.0
    %4473 = vmatpush1.msra.mxu0 0.0
    %4474 = vmatprep.subr.mxu0 0.0
    %4475 = vmatpush1.msra.mxu0 0.0
    %4476 = vmatprep.subr.mxu0 0.0
    %4477 = vmatpush1.msra.mxu0 0.0
    %4478 = vmatprep.subr.mxu0 0.0
    %4479 = vmatpush1.msra.mxu0 0.0
    %4480 = vmatprep.subr.mxu0 0.0
    %4481 = vmatpush1.msra.mxu0 0.0
    %4482 = vmatprep.subr.mxu0 0.0
    %4483 = vmatpush1.msra.mxu0 0.0
    %4484 = vmatprep.subr.mxu0 0.0
    %4485 = vmatpush1.msra.mxu0 0.0
    %4486 = vmatprep.subr.mxu0 0.0
    %4487 = vmatpush1.msra.mxu0 0.0
    %4488 = vmatprep.subr.mxu0 0.0
    %4489 = vmatpush1.msra.mxu0 0.0
    %4490 = vmatprep.subr.mxu0 0.0
    %4491 = vmatpush1.msra.mxu0 0.0
    %4492 = vmatprep.subr.mxu0 0.0
    %4493 = vmatpush1.msra.mxu0 0.0
    %4494 = vmatprep.subr.mxu0 0.0
    %4495 = vmatpush1.msra.mxu0 0.0
    %4496 = vmatprep.subr.mxu0 0.0
    %4497 = vmatpush1.msra.mxu0 0.0
    %4498 = vmatprep.subr.mxu0 0.0
    %v4499 = vand.u32 %v79, 4294901760
    %4500 = vmatpush1.msra.mxu0 %v4499
    %4501 = vmatprep.subr.mxu0 0.0
    %v4502 = vand.u32 %v78, 4294901760
    %4503 = vmatpush1.msra.mxu0 %v4502
    %4504 = vmatprep.subr.mxu0 0.0
    %4505 = vmatpush2.msra.mxu0 0.0
    %4506 = vmatprep.subr.mxu0 0.0
    %4507 = vmatpush2.msra.mxu0 0.0
    %4508 = vmatprep.subr.mxu0 0.0
    %4509 = vmatpush2.msra.mxu0 0.0
    %4510 = vmatprep.subr.mxu0 0.0
    %4511 = vmatpush2.msra.mxu0 0.0
    %4512 = vmatprep.subr.mxu0 0.0
    %4513 = vmatpush2.msra.mxu0 0.0
    %4514 = vmatprep.subr.mxu0 0.0
    %4515 = vmatpush2.msra.mxu0 0.0
    %4516 = vmatprep.subr.mxu0 0.0
    %4517 = vmatpush2.msra.mxu0 0.0
    %4518 = vmatprep.subr.mxu0 0.0
    %4519 = vmatpush2.msra.mxu0 0.0
    %4520 = vmatprep.subr.mxu0 0.0
    %4521 = vmatpush2.msra.mxu0 0.0
    %4522 = vmatprep.subr.mxu0 0.0
    %4523 = vmatpush2.msra.mxu0 0.0
    %4524 = vmatprep.subr.mxu0 0.0
    %4525 = vmatpush2.msra.mxu0 0.0
    %4526 = vmatprep.subr.mxu0 0.0
    %4527 = vmatpush2.msra.mxu0 0.0
    %4528 = vmatprep.subr.mxu0 0.0
    %4529 = vmatpush2.msra.mxu0 0.0
    %4530 = vmatprep.subr.mxu0 0.0
    %4531 = vmatpush2.msra.mxu0 0.0
    %4532 = vmatprep.subr.mxu0 0.0
    %4533 = vmatpush2.msra.mxu0 0.0
    %4534 = vmatprep.subr.mxu0 0.0
    %4535 = vmatpush2.msra.mxu0 0.0
    %4536 = vmatprep.mubr.f32.mxu0 0.0
    %v4537 = vand.u32 %v4082, 4294901760
    %4538 = vmatmul.mubr.f32.gmra.mxu0 %v4537
    %v4539 = vpop.f32.mrf.mxu0
    %v4540 = vadd.f32 %v4467, %v4539
    %v4541 = vpop.f32.mrf.mxu0
    %4542 = vdwg.mxu0
    %v4543 = vadd.f32 %v4540, %v1104
    %v4544 = vxor.u32 %v4543, 2147483648
    %v4545 = vmul.f32 %v4544, 1.442695
    %v4546 = vpow.pop %v4545
    %v4547 = vadd.f32 %v4546, 1.0
    %v4548 = vrcp.pop %v4547
    %v4549 = vmul.f32 1.0, %v4548
    %v4550 = vtanh.pop %v4543
    %v4551 = vmul.f32 %v4549, %v4072
    %4553 = vrot.lane.b32.xlu0 %v4550, 96
    %v4554 = vpop.permute.xlu0 %4553
    %v4556 = vmul.f32 %v4549, %v4554
    %4558 = vrot.lane.b32.xlu0 %v4556, 16
    %v4559 = vpop.permute.xlu0 %4558
    %v4561 = vadd.f32 %v4551, %v4559
    %v4562 = vtanh.pop %v4561
    %4564 = vrot.lane.b32.xlu0 %v4562, 32
    %v4565 = vpop.permute.xlu0 %4564
    %v4567 = vmul.f32 %v4549, %v4565
    %4569 = vrot.lane.b32.xlu0 %v4567, 80
    %v4570 = vpop.permute.xlu0 %4569
    %v4571 = vsel %vm1142, %v4570, 0
    %4573 = vmatprep.subr.mxu0 0.0
    %4574 = vmatpush1.msra.mxu0 0.0
    %4575 = vmatprep.subr.mxu0 0.0
    %4576 = vmatpush1.msra.mxu0 0.0
    %4577 = vmatprep.subr.mxu0 0.0
    %4578 = vmatpush1.msra.mxu0 0.0
    %4579 = vmatprep.subr.mxu0 0.0
    %4580 = vmatpush1.msra.mxu0 0.0
    %4581 = vmatprep.subr.mxu0 0.0
    %4582 = vmatpush1.msra.mxu0 0.0
    %4583 = vmatprep.subr.mxu0 0.0
    %4584 = vmatpush1.msra.mxu0 0.0
    %4585 = vmatprep.subr.mxu0 0.0
    %4586 = vmatpush1.msra.mxu0 0.0
    %4587 = vmatprep.subr.mxu0 0.0
    %4588 = vmatpush1.msra.mxu0 0.0
    %4589 = vmatprep.subr.mxu0 0.0
    %4590 = vmatpush1.msra.mxu0 0.0
    %4591 = vmatprep.subr.mxu0 0.0
    %4592 = vmatpush1.msra.mxu0 0.0
    %4593 = vmatprep.subr.mxu0 0.0
    %4594 = vmatpush1.msra.mxu0 0.0
    %4595 = vmatprep.subr.mxu0 0.0
    %4596 = vmatpush1.msra.mxu0 0.0
    %4597 = vmatprep.subr.mxu0 0.0
    %4598 = vmatpush1.msra.mxu0 0.0
    %4599 = vmatprep.subr.mxu0 0.0
    %4600 = vmatpush1.msra.mxu0 0.0
    %4601 = vmatprep.subr.mxu0 0.0
    %v4602 = vand.u32 %v79, 4294901760
    %4603 = vmatpush1.msra.mxu0 %v4602
    %4604 = vmatprep.subr.mxu0 0.0
    %v4605 = vand.u32 %v78, 4294901760
    %4606 = vmatpush1.msra.mxu0 %v4605
    %4607 = vmatprep.subr.mxu0 0.0
    %4608 = vmatpush2.msra.mxu0 0.0
    %4609 = vmatprep.subr.mxu0 0.0
    %4610 = vmatpush2.msra.mxu0 0.0
    %4611 = vmatprep.subr.mxu0 0.0
    %4612 = vmatpush2.msra.mxu0 0.0
    %4613 = vmatprep.subr.mxu0 0.0
    %4614 = vmatpush2.msra.mxu0 0.0
    %4615 = vmatprep.subr.mxu0 0.0
    %4616 = vmatpush2.msra.mxu0 0.0
    %4617 = vmatprep.subr.mxu0 0.0
    %4618 = vmatpush2.msra.mxu0 0.0
    %4619 = vmatprep.subr.mxu0 0.0
    %4620 = vmatpush2.msra.mxu0 0.0
    %4621 = vmatprep.subr.mxu0 0.0
    %4622 = vmatpush2.msra.mxu0 0.0
    %4623 = vmatprep.subr.mxu0 0.0
    %4624 = vmatpush2.msra.mxu0 0.0
    %4625 = vmatprep.subr.mxu0 0.0
    %4626 = vmatpush2.msra.mxu0 0.0
    %4627 = vmatprep.subr.mxu0 0.0
    %4628 = vmatpush2.msra.mxu0 0.0
    %4629 = vmatprep.subr.mxu0 0.0
    %4630 = vmatpush2.msra.mxu0 0.0
    %4631 = vmatprep.subr.mxu0 0.0
    %4632 = vmatpush2.msra.mxu0 0.0
    %4633 = vmatprep.subr.mxu0 0.0
    %4634 = vmatpush2.msra.mxu0 0.0
    %4635 = vmatprep.subr.mxu0 0.0
    %4636 = vmatpush2.msra.mxu0 0.0
    %4637 = vmatprep.subr.mxu0 0.0
    %4638 = vmatpush2.msra.mxu0 0.0
    %4639 = vmatprep.mubr.f32.mxu0 0.0
    %v4640 = vand.u32 %v4571, 4294901760
    %v4641 = vsub.f32 %v4571, %v4640
    %v4642 = vand.u32 %v4641, 4294901760
    %v4643 = vsub.f32 %v4641, %v4642
    %v4644 = vand.u32 %v4643, 4294901760
    %4645 = vmatmul.mubr.f32.gmra.mxu0 %v4644
    %v4646 = vpop.f32.mrf.mxu0
    %v4647 = vadd.f32 0.0, %v4646
    %v4648 = vpop.f32.mrf.mxu0
    %4649 = vdwg.mxu0
    %4650 = vmatprep.subr.mxu0 0.0
    %4651 = vmatpush1.msra.mxu0 0.0
    %4652 = vmatprep.subr.mxu0 0.0
    %4653 = vmatpush1.msra.mxu0 0.0
    %4654 = vmatprep.subr.mxu0 0.0
    %4655 = vmatpush1.msra.mxu0 0.0
    %4656 = vmatprep.subr.mxu0 0.0
    %4657 = vmatpush1.msra.mxu0 0.0
    %4658 = vmatprep.subr.mxu0 0.0
    %4659 = vmatpush1.msra.mxu0 0.0
    %4660 = vmatprep.subr.mxu0 0.0
    %4661 = vmatpush1.msra.mxu0 0.0
    %4662 = vmatprep.subr.mxu0 0.0
    %4663 = vmatpush1.msra.mxu0 0.0
    %4664 = vmatprep.subr.mxu0 0.0
    %4665 = vmatpush1.msra.mxu0 0.0
    %4666 = vmatprep.subr.mxu0 0.0
    %4667 = vmatpush1.msra.mxu0 0.0
    %4668 = vmatprep.subr.mxu0 0.0
    %4669 = vmatpush1.msra.mxu0 0.0
    %4670 = vmatprep.subr.mxu0 0.0
    %4671 = vmatpush1.msra.mxu0 0.0
    %4672 = vmatprep.subr.mxu0 0.0
    %4673 = vmatpush1.msra.mxu0 0.0
    %4674 = vmatprep.subr.mxu0 0.0
    %4675 = vmatpush1.msra.mxu0 0.0
    %4676 = vmatprep.subr.mxu0 0.0
    %4677 = vmatpush1.msra.mxu0 0.0
    %4678 = vmatprep.subr.mxu0 0.0
    %v4679 = vand.u32 %v79, 4294901760
    %v4680 = vsub.f32 %v79, %v4679
    %v4681 = vand.u32 %v4680, 4294901760
    %v4682 = vsub.f32 %v4680, %v4681
    %v4683 = vand.u32 %v4682, 4294901760
    %4684 = vmatpush1.msra.mxu0 %v4683
    %4685 = vmatprep.subr.mxu0 0.0
    %v4686 = vand.u32 %v78, 4294901760
    %v4687 = vsub.f32 %v78, %v4686
    %v4688 = vand.u32 %v4687, 4294901760
    %v4689 = vsub.f32 %v4687, %v4688
    %v4690 = vand.u32 %v4689, 4294901760
    %4691 = vmatpush1.msra.mxu0 %v4690
    %4692 = vmatprep.subr.mxu0 0.0
    %4693 = vmatpush2.msra.mxu0 0.0
    %4694 = vmatprep.subr.mxu0 0.0
    %4695 = vmatpush2.msra.mxu0 0.0
    %4696 = vmatprep.subr.mxu0 0.0
    %4697 = vmatpush2.msra.mxu0 0.0
    %4698 = vmatprep.subr.mxu0 0.0
    %4699 = vmatpush2.msra.mxu0 0.0
    %4700 = vmatprep.subr.mxu0 0.0
    %4701 = vmatpush2.msra.mxu0 0.0
    %4702 = vmatprep.subr.mxu0 0.0
    %4703 = vmatpush2.msra.mxu0 0.0
    %4704 = vmatprep.subr.mxu0 0.0
    %4705 = vmatpush2.msra.mxu0 0.0
    %4706 = vmatprep.subr.mxu0 0.0
    %4707 = vmatpush2.msra.mxu0 0.0
    %4708 = vmatprep.subr.mxu0 0.0
    %4709 = vmatpush2.msra.mxu0 0.0
    %4710 = vmatprep.subr.mxu0 0.0
    %4711 = vmatpush2.msra.mxu0 0.0
    %4712 = vmatprep.subr.mxu0 0.0
    %4713 = vmatpush2.msra.mxu0 0.0
    %4714 = vmatprep.subr.mxu0 0.0
    %4715 = vmatpush2.msra.mxu0 0.0
    %4716 = vmatprep.subr.mxu0 0.0
    %4717 = vmatpush2.msra.mxu0 0.0
    %4718 = vmatprep.subr.mxu0 0.0
    %4719 = vmatpush2.msra.mxu0 0.0
    %4720 = vmatprep.subr.mxu0 0.0
    %4721 = vmatpush2.msra.mxu0 0.0
    %4722 = vmatprep.subr.mxu0 0.0
    %4723 = vmatpush2.msra.mxu0 0.0
    %4724 = vmatprep.mubr.f32.mxu0 0.0
    %v4725 = vand.u32 %v4571, 4294901760
    %4726 = vmatmul.mubr.f32.gmra.mxu0 %v4725
    %v4727 = vpop.f32.mrf.mxu0
    %v4728 = vadd.f32 %v4647, %v4727
    %v4729 = vpop.f32.mrf.mxu0
    %4730 = vdwg.mxu0
    %4731 = vmatprep.subr.mxu0 0.0
    %4732 = vmatpush1.msra.mxu0 0.0
    %4733 = vmatprep.subr.mxu0 0.0
    %4734 = vmatpush1.msra.mxu0 0.0
    %4735 = vmatprep.subr.mxu0 0.0
    %4736 = vmatpush1.msra.mxu0 0.0
    %4737 = vmatprep.subr.mxu0 0.0
    %4738 = vmatpush1.msra.mxu0 0.0
    %4739 = vmatprep.subr.mxu0 0.0
    %4740 = vmatpush1.msra.mxu0 0.0
    %4741 = vmatprep.subr.mxu0 0.0
    %4742 = vmatpush1.msra.mxu0 0.0
    %4743 = vmatprep.subr.mxu0 0.0
    %4744 = vmatpush1.msra.mxu0 0.0
    %4745 = vmatprep.subr.mxu0 0.0
    %4746 = vmatpush1.msra.mxu0 0.0
    %4747 = vmatprep.subr.mxu0 0.0
    %4748 = vmatpush1.msra.mxu0 0.0
    %4749 = vmatprep.subr.mxu0 0.0
    %4750 = vmatpush1.msra.mxu0 0.0
    %4751 = vmatprep.subr.mxu0 0.0
    %4752 = vmatpush1.msra.mxu0 0.0
    %4753 = vmatprep.subr.mxu0 0.0
    %4754 = vmatpush1.msra.mxu0 0.0
    %4755 = vmatprep.subr.mxu0 0.0
    %4756 = vmatpush1.msra.mxu0 0.0
    %4757 = vmatprep.subr.mxu0 0.0
    %4758 = vmatpush1.msra.mxu0 0.0
    %4759 = vmatprep.subr.mxu0 0.0
    %v4760 = vand.u32 %v79, 4294901760
    %v4761 = vsub.f32 %v79, %v4760
    %4762 = vmatpush1.msra.mxu0 %v4761
    %4763 = vmatprep.subr.mxu0 0.0
    %v4764 = vand.u32 %v78, 4294901760
    %v4765 = vsub.f32 %v78, %v4764
    %4766 = vmatpush1.msra.mxu0 %v4765
    %4767 = vmatprep.subr.mxu0 0.0
    %4768 = vmatpush2.msra.mxu0 0.0
    %4769 = vmatprep.subr.mxu0 0.0
    %4770 = vmatpush2.msra.mxu0 0.0
    %4771 = vmatprep.subr.mxu0 0.0
    %4772 = vmatpush2.msra.mxu0 0.0
    %4773 = vmatprep.subr.mxu0 0.0
    %4774 = vmatpush2.msra.mxu0 0.0
    %4775 = vmatprep.subr.mxu0 0.0
    %4776 = vmatpush2.msra.mxu0 0.0
    %4777 = vmatprep.subr.mxu0 0.0
    %4778 = vmatpush2.msra.mxu0 0.0
    %4779 = vmatprep.subr.mxu0 0.0
    %4780 = vmatpush2.msra.mxu0 0.0
    %4781 = vmatprep.subr.mxu0 0.0
    %4782 = vmatpush2.msra.mxu0 0.0
    %4783 = vmatprep.subr.mxu0 0.0
    %4784 = vmatpush2.msra.mxu0 0.0
    %4785 = vmatprep.subr.mxu0 0.0
    %4786 = vmatpush2.msra.mxu0 0.0
    %4787 = vmatprep.subr.mxu0 0.0
    %4788 = vmatpush2.msra.mxu0 0.0
    %4789 = vmatprep.subr.mxu0 0.0
    %4790 = vmatpush2.msra.mxu0 0.0
    %4791 = vmatprep.subr.mxu0 0.0
    %4792 = vmatpush2.msra.mxu0 0.0
    %4793 = vmatprep.subr.mxu0 0.0
    %4794 = vmatpush2.msra.mxu0 0.0
    %4795 = vmatprep.subr.mxu0 0.0
    %4796 = vmatpush2.msra.mxu0 0.0
    %4797 = vmatprep.subr.mxu0 0.0
    %4798 = vmatpush2.msra.mxu0 0.0
    %4799 = vmatprep.mubr.f32.mxu0 0.0
    %v4800 = vand.u32 %v4571, 4294901760
    %v4801 = vsub.f32 %v4571, %v4800
    %4802 = vmatmul.mubr.f32.gmra.mxu0 %v4801
    %v4803 = vpop.f32.mrf.mxu0
    %v4804 = vadd.f32 %v4728, %v4803
    %v4805 = vpop.f32.mrf.mxu0
    %4806 = vdwg.mxu0
    %4807 = vmatprep.subr.mxu0 0.0
    %4808 = vmatpush1.msra.mxu0 0.0
    %4809 = vmatprep.subr.mxu0 0.0
    %4810 = vmatpush1.msra.mxu0 0.0
    %4811 = vmatprep.subr.mxu0 0.0
    %4812 = vmatpush1.msra.mxu0 0.0
    %4813 = vmatprep.subr.mxu0 0.0
    %4814 = vmatpush1.msra.mxu0 0.0
    %4815 = vmatprep.subr.mxu0 0.0
    %4816 = vmatpush1.msra.mxu0 0.0
    %4817 = vmatprep.subr.mxu0 0.0
    %4818 = vmatpush1.msra.mxu0 0.0
    %4819 = vmatprep.subr.mxu0 0.0
    %4820 = vmatpush1.msra.mxu0 0.0
    %4821 = vmatprep.subr.mxu0 0.0
    %4822 = vmatpush1.msra.mxu0 0.0
    %4823 = vmatprep.subr.mxu0 0.0
    %4824 = vmatpush1.msra.mxu0 0.0
    %4825 = vmatprep.subr.mxu0 0.0
    %4826 = vmatpush1.msra.mxu0 0.0
    %4827 = vmatprep.subr.mxu0 0.0
    %4828 = vmatpush1.msra.mxu0 0.0
    %4829 = vmatprep.subr.mxu0 0.0
    %4830 = vmatpush1.msra.mxu0 0.0
    %4831 = vmatprep.subr.mxu0 0.0
    %4832 = vmatpush1.msra.mxu0 0.0
    %4833 = vmatprep.subr.mxu0 0.0
    %4834 = vmatpush1.msra.mxu0 0.0
    %4835 = vmatprep.subr.mxu0 0.0
    %v4836 = vand.u32 %v79, 4294901760
    %4837 = vmatpush1.msra.mxu0 %v4836
    %4838 = vmatprep.subr.mxu0 0.0
    %v4839 = vand.u32 %v78, 4294901760
    %4840 = vmatpush1.msra.mxu0 %v4839
    %4841 = vmatprep.subr.mxu0 0.0
    %4842 = vmatpush2.msra.mxu0 0.0
    %4843 = vmatprep.subr.mxu0 0.0
    %4844 = vmatpush2.msra.mxu0 0.0
    %4845 = vmatprep.subr.mxu0 0.0
    %4846 = vmatpush2.msra.mxu0 0.0
    %4847 = vmatprep.subr.mxu0 0.0
    %4848 = vmatpush2.msra.mxu0 0.0
    %4849 = vmatprep.subr.mxu0 0.0
    %4850 = vmatpush2.msra.mxu0 0.0
    %4851 = vmatprep.subr.mxu0 0.0
    %4852 = vmatpush2.msra.mxu0 0.0
    %4853 = vmatprep.subr.mxu0 0.0
    %4854 = vmatpush2.msra.mxu0 0.0
    %4855 = vmatprep.subr.mxu0 0.0
    %4856 = vmatpush2.msra.mxu0 0.0
    %4857 = vmatprep.subr.mxu0 0.0
    %4858 = vmatpush2.msra.mxu0 0.0
    %4859 = vmatprep.subr.mxu0 0.0
    %4860 = vmatpush2.msra.mxu0 0.0
    %4861 = vmatprep.subr.mxu0 0.0
    %4862 = vmatpush2.msra.mxu0 0.0
    %4863 = vmatprep.subr.mxu0 0.0
    %4864 = vmatpush2.msra.mxu0 0.0
    %4865 = vmatprep.subr.mxu0 0.0
    %4866 = vmatpush2.msra.mxu0 0.0
    %4867 = vmatprep.subr.mxu0 0.0
    %4868 = vmatpush2.msra.mxu0 0.0
    %4869 = vmatprep.subr.mxu0 0.0
    %4870 = vmatpush2.msra.mxu0 0.0
    %4871 = vmatprep.subr.mxu0 0.0
    %4872 = vmatpush2.msra.mxu0 0.0
    %4873 = vmatprep.mubr.f32.mxu0 0.0
    %v4874 = vand.u32 %v4571, 4294901760
    %v4875 = vsub.f32 %v4571, %v4874
    %v4876 = vand.u32 %v4875, 4294901760
    %4877 = vmatmul.mubr.f32.gmra.mxu0 %v4876
    %v4878 = vpop.f32.mrf.mxu0
    %v4879 = vadd.f32 %v4804, %v4878
    %v4880 = vpop.f32.mrf.mxu0
    %4881 = vdwg.mxu0
    %4882 = vmatprep.subr.mxu0 0.0
    %4883 = vmatpush1.msra.mxu0 0.0
    %4884 = vmatprep.subr.mxu0 0.0
    %4885 = vmatpush1.msra.mxu0 0.0
    %4886 = vmatprep.subr.mxu0 0.0
    %4887 = vmatpush1.msra.mxu0 0.0
    %4888 = vmatprep.subr.mxu0 0.0
    %4889 = vmatpush1.msra.mxu0 0.0
    %4890 = vmatprep.subr.mxu0 0.0
    %4891 = vmatpush1.msra.mxu0 0.0
    %4892 = vmatprep.subr.mxu0 0.0
    %4893 = vmatpush1.msra.mxu0 0.0
    %4894 = vmatprep.subr.mxu0 0.0
    %4895 = vmatpush1.msra.mxu0 0.0
    %4896 = vmatprep.subr.mxu0 0.0
    %4897 = vmatpush1.msra.mxu0 0.0
    %4898 = vmatprep.subr.mxu0 0.0
    %4899 = vmatpush1.msra.mxu0 0.0
    %4900 = vmatprep.subr.mxu0 0.0
    %4901 = vmatpush1.msra.mxu0 0.0
    %4902 = vmatprep.subr.mxu0 0.0
    %4903 = vmatpush1.msra.mxu0 0.0
    %4904 = vmatprep.subr.mxu0 0.0
    %4905 = vmatpush1.msra.mxu0 0.0
    %4906 = vmatprep.subr.mxu0 0.0
    %4907 = vmatpush1.msra.mxu0 0.0
    %4908 = vmatprep.subr.mxu0 0.0
    %4909 = vmatpush1.msra.mxu0 0.0
    %4910 = vmatprep.subr.mxu0 0.0
    %v4911 = vand.u32 %v79, 4294901760
    %v4912 = vsub.f32 %v79, %v4911
    %v4913 = vand.u32 %v4912, 4294901760
    %4914 = vmatpush1.msra.mxu0 %v4913
    %4915 = vmatprep.subr.mxu0 0.0
    %v4916 = vand.u32 %v78, 4294901760
    %v4917 = vsub.f32 %v78, %v4916
    %v4918 = vand.u32 %v4917, 4294901760
    %4919 = vmatpush1.msra.mxu0 %v4918
    %4920 = vmatprep.subr.mxu0 0.0
    %4921 = vmatpush2.msra.mxu0 0.0
    %4922 = vmatprep.subr.mxu0 0.0
    %4923 = vmatpush2.msra.mxu0 0.0
    %4924 = vmatprep.subr.mxu0 0.0
    %4925 = vmatpush2.msra.mxu0 0.0
    %4926 = vmatprep.subr.mxu0 0.0
    %4927 = vmatpush2.msra.mxu0 0.0
    %4928 = vmatprep.subr.mxu0 0.0
    %4929 = vmatpush2.msra.mxu0 0.0
    %4930 = vmatprep.subr.mxu0 0.0
    %4931 = vmatpush2.msra.mxu0 0.0
    %4932 = vmatprep.subr.mxu0 0.0
    %4933 = vmatpush2.msra.mxu0 0.0
    %4934 = vmatprep.subr.mxu0 0.0
    %4935 = vmatpush2.msra.mxu0 0.0
    %4936 = vmatprep.subr.mxu0 0.0
    %4937 = vmatpush2.msra.mxu0 0.0
    %4938 = vmatprep.subr.mxu0 0.0
    %4939 = vmatpush2.msra.mxu0 0.0
    %4940 = vmatprep.subr.mxu0 0.0
    %4941 = vmatpush2.msra.mxu0 0.0
    %4942 = vmatprep.subr.mxu0 0.0
    %4943 = vmatpush2.msra.mxu0 0.0
    %4944 = vmatprep.subr.mxu0 0.0
    %4945 = vmatpush2.msra.mxu0 0.0
    %4946 = vmatprep.subr.mxu0 0.0
    %4947 = vmatpush2.msra.mxu0 0.0
    %4948 = vmatprep.subr.mxu0 0.0
    %4949 = vmatpush2.msra.mxu0 0.0
    %4950 = vmatprep.subr.mxu0 0.0
    %4951 = vmatpush2.msra.mxu0 0.0
    %4952 = vmatprep.mubr.f32.mxu0 0.0
    %v4953 = vand.u32 %v4571, 4294901760
    %4954 = vmatmul.mubr.f32.gmra.mxu0 %v4953
    %v4955 = vpop.f32.mrf.mxu0
    %v4956 = vadd.f32 %v4879, %v4955
    %v4957 = vpop.f32.mrf.mxu0
    %4958 = vdwg.mxu0
    %4959 = vmatprep.subr.mxu0 0.0
    %4960 = vmatpush1.msra.mxu0 0.0
    %4961 = vmatprep.subr.mxu0 0.0
    %4962 = vmatpush1.msra.mxu0 0.0
    %4963 = vmatprep.subr.mxu0 0.0
    %4964 = vmatpush1.msra.mxu0 0.0
    %4965 = vmatprep.subr.mxu0 0.0
    %4966 = vmatpush1.msra.mxu0 0.0
    %4967 = vmatprep.subr.mxu0 0.0
    %4968 = vmatpush1.msra.mxu0 0.0
    %4969 = vmatprep.subr.mxu0 0.0
    %4970 = vmatpush1.msra.mxu0 0.0
    %4971 = vmatprep.subr.mxu0 0.0
    %4972 = vmatpush1.msra.mxu0 0.0
    %4973 = vmatprep.subr.mxu0 0.0
    %4974 = vmatpush1.msra.mxu0 0.0
    %4975 = vmatprep.subr.mxu0 0.0
    %4976 = vmatpush1.msra.mxu0 0.0
    %4977 = vmatprep.subr.mxu0 0.0
    %4978 = vmatpush1.msra.mxu0 0.0
    %4979 = vmatprep.subr.mxu0 0.0
    %4980 = vmatpush1.msra.mxu0 0.0
    %4981 = vmatprep.subr.mxu0 0.0
    %4982 = vmatpush1.msra.mxu0 0.0
    %4983 = vmatprep.subr.mxu0 0.0
    %4984 = vmatpush1.msra.mxu0 0.0
    %4985 = vmatprep.subr.mxu0 0.0
    %4986 = vmatpush1.msra.mxu0 0.0
    %4987 = vmatprep.subr.mxu0 0.0
    %v4988 = vand.u32 %v79, 4294901760
    %4989 = vmatpush1.msra.mxu0 %v4988
    %4990 = vmatprep.subr.mxu0 0.0
    %v4991 = vand.u32 %v78, 4294901760
    %4992 = vmatpush1.msra.mxu0 %v4991
    %4993 = vmatprep.subr.mxu0 0.0
    %4994 = vmatpush2.msra.mxu0 0.0
    %4995 = vmatprep.subr.mxu0 0.0
    %4996 = vmatpush2.msra.mxu0 0.0
    %4997 = vmatprep.subr.mxu0 0.0
    %4998 = vmatpush2.msra.mxu0 0.0
    %4999 = vmatprep.subr.mxu0 0.0
    %5000 = vmatpush2.msra.mxu0 0.0
    %5001 = vmatprep.subr.mxu0 0.0
    %5002 = vmatpush2.msra.mxu0 0.0
    %5003 = vmatprep.subr.mxu0 0.0
    %5004 = vmatpush2.msra.mxu0 0.0
    %5005 = vmatprep.subr.mxu0 0.0
    %5006 = vmatpush2.msra.mxu0 0.0
    %5007 = vmatprep.subr.mxu0 0.0
    %5008 = vmatpush2.msra.mxu0 0.0
    %5009 = vmatprep.subr.mxu0 0.0
    %5010 = vmatpush2.msra.mxu0 0.0
    %5011 = vmatprep.subr.mxu0 0.0
    %5012 = vmatpush2.msra.mxu0 0.0
    %5013 = vmatprep.subr.mxu0 0.0
    %5014 = vmatpush2.msra.mxu0 0.0
    %5015 = vmatprep.subr.mxu0 0.0
    %5016 = vmatpush2.msra.mxu0 0.0
    %5017 = vmatprep.subr.mxu0 0.0
    %5018 = vmatpush2.msra.mxu0 0.0
    %5019 = vmatprep.subr.mxu0 0.0
    %5020 = vmatpush2.msra.mxu0 0.0
    %5021 = vmatprep.subr.mxu0 0.0
    %5022 = vmatpush2.msra.mxu0 0.0
    %5023 = vmatprep.subr.mxu0 0.0
    %5024 = vmatpush2.msra.mxu0 0.0
    %5025 = vmatprep.mubr.f32.mxu0 0.0
    %v5026 = vand.u32 %v4571, 4294901760
    %5027 = vmatmul.mubr.f32.gmra.mxu0 %v5026
    %v5028 = vpop.f32.mrf.mxu0
    %v5029 = vadd.f32 %v4956, %v5028
    %v5030 = vpop.f32.mrf.mxu0
    %5031 = vdwg.mxu0
    %v5032 = vadd.f32 %v5029, %v1104
    %v5033 = vxor.u32 %v5032, 2147483648
    %v5034 = vmul.f32 %v5033, 1.442695
    %v5035 = vpow.pop %v5034
    %v5036 = vadd.f32 %v5035, 1.0
    %v5037 = vrcp.pop %v5036
    %v5038 = vmul.f32 1.0, %v5037
    %v5039 = vtanh.pop %v5032
    %v5040 = vmul.f32 %v5038, %v4561
    %5042 = vrot.lane.b32.xlu0 %v5039, 96
    %v5043 = vpop.permute.xlu0 %5042
    %v5045 = vmul.f32 %v5038, %v5043
    %5047 = vrot.lane.b32.xlu0 %v5045, 16
    %v5048 = vpop.permute.xlu0 %5047
    %v5050 = vadd.f32 %v5040, %v5048
    %v5051 = vtanh.pop %v5050
    %5053 = vrot.lane.b32.xlu0 %v5051, 32
    %v5054 = vpop.permute.xlu0 %5053
    %v5056 = vmul.f32 %v5038, %v5054
    %5058 = vrot.lane.b32.xlu0 %v5056, 72
    %v5059 = vpop.permute.xlu0 %5058
    %5061 = vrot.lane.b32.xlu0 %v79, 64
    %v5062 = vpop.permute.xlu0 %5061
    %vm5064 = vcmask 64512
    %v5065 = vsel %vm5064, %v5059, 0
    %5067 = vmatprep.subr.mxu0 0.0
    %5068 = vmatpush1.msra.mxu0 0.0
    %5069 = vmatprep.subr.mxu0 0.0
    %5070 = vmatpush1.msra.mxu0 0.0
    %5071 = vmatprep.subr.mxu0 0.0
    %5072 = vmatpush1.msra.mxu0 0.0
    %5073 = vmatprep.subr.mxu0 0.0
    %5074 = vmatpush1.msra.mxu0 0.0
    %5075 = vmatprep.subr.mxu0 0.0
    %5076 = vmatpush1.msra.mxu0 0.0
    %5077 = vmatprep.subr.mxu0 0.0
    %5078 = vmatpush1.msra.mxu0 0.0
    %5079 = vmatprep.subr.mxu0 0.0
    %5080 = vmatpush1.msra.mxu0 0.0
    %5081 = vmatprep.subr.mxu0 0.0
    %5082 = vmatpush1.msra.mxu0 0.0
    %5083 = vmatprep.subr.mxu0 0.0
    %5084 = vmatpush1.msra.mxu0 0.0
    %5085 = vmatprep.subr.mxu0 0.0
    %5086 = vmatpush1.msra.mxu0 0.0
    %5087 = vmatprep.subr.mxu0 0.0
    %5088 = vmatpush1.msra.mxu0 0.0
    %5089 = vmatprep.subr.mxu0 0.0
    %5090 = vmatpush1.msra.mxu0 0.0
    %5091 = vmatprep.subr.mxu0 0.0
    %5092 = vmatpush1.msra.mxu0 0.0
    %5093 = vmatprep.subr.mxu0 0.0
    %5094 = vmatpush1.msra.mxu0 0.0
    %5095 = vmatprep.subr.mxu0 0.0
    %5096 = vmatpush1.msra.mxu0 0.0
    %5097 = vmatprep.subr.mxu0 0.0
    %v5098 = vand.u32 %v5062, 4294901760
    %5099 = vmatpush1.msra.mxu0 %v5098
    %5100 = vmatprep.subr.mxu0 0.0
    %5101 = vmatpush2.msra.mxu0 0.0
    %5102 = vmatprep.subr.mxu0 0.0
    %5103 = vmatpush2.msra.mxu0 0.0
    %5104 = vmatprep.subr.mxu0 0.0
    %5105 = vmatpush2.msra.mxu0 0.0
    %5106 = vmatprep.subr.mxu0 0.0
    %5107 = vmatpush2.msra.mxu0 0.0
    %5108 = vmatprep.subr.mxu0 0.0
    %5109 = vmatpush2.msra.mxu0 0.0
    %5110 = vmatprep.subr.mxu0 0.0
    %5111 = vmatpush2.msra.mxu0 0.0
    %5112 = vmatprep.subr.mxu0 0.0
    %5113 = vmatpush2.msra.mxu0 0.0
    %5114 = vmatprep.subr.mxu0 0.0
    %5115 = vmatpush2.msra.mxu0 0.0
    %5116 = vmatprep.subr.mxu0 0.0
    %5117 = vmatpush2.msra.mxu0 0.0
    %5118 = vmatprep.subr.mxu0 0.0
    %5119 = vmatpush2.msra.mxu0 0.0
    %5120 = vmatprep.subr.mxu0 0.0
    %5121 = vmatpush2.msra.mxu0 0.0
    %5122 = vmatprep.subr.mxu0 0.0
    %5123 = vmatpush2.msra.mxu0 0.0
    %5124 = vmatprep.subr.mxu0 0.0
    %5125 = vmatpush2.msra.mxu0 0.0
    %5126 = vmatprep.subr.mxu0 0.0
    %5127 = vmatpush2.msra.mxu0 0.0
    %5128 = vmatprep.subr.mxu0 0.0
    %5129 = vmatpush2.msra.mxu0 0.0
    %5130 = vmatprep.subr.mxu0 0.0
    %5131 = vmatpush2.msra.mxu0 0.0
    %5132 = vmatprep.mubr.f32.mxu0 0.0
    %v5133 = vand.u32 %v5065, 4294901760
    %v5134 = vsub.f32 %v5065, %v5133
    %v5135 = vand.u32 %v5134, 4294901760
    %v5136 = vsub.f32 %v5134, %v5135
    %v5137 = vand.u32 %v5136, 4294901760
    %5138 = vmatmul.mubr.f32.gmra.mxu0 %v5137
    %v5139 = vpop.f32.mrf.mxu0
    %v5140 = vadd.f32 0.0, %v5139
    %v5141 = vpop.f32.mrf.mxu0
    %5142 = vdwg.mxu0
    %5143 = vmatprep.subr.mxu0 0.0
    %5144 = vmatpush1.msra.mxu0 0.0
    %5145 = vmatprep.subr.mxu0 0.0
    %5146 = vmatpush1.msra.mxu0 0.0
    %5147 = vmatprep.subr.mxu0 0.0
    %5148 = vmatpush1.msra.mxu0 0.0
    %5149 = vmatprep.subr.mxu0 0.0
    %5150 = vmatpush1.msra.mxu0 0.0
    %5151 = vmatprep.subr.mxu0 0.0
    %5152 = vmatpush1.msra.mxu0 0.0
    %5153 = vmatprep.subr.mxu0 0.0
    %5154 = vmatpush1.msra.mxu0 0.0
    %5155 = vmatprep.subr.mxu0 0.0
    %5156 = vmatpush1.msra.mxu0 0.0
    %5157 = vmatprep.subr.mxu0 0.0
    %5158 = vmatpush1.msra.mxu0 0.0
    %5159 = vmatprep.subr.mxu0 0.0
    %5160 = vmatpush1.msra.mxu0 0.0
    %5161 = vmatprep.subr.mxu0 0.0
    %5162 = vmatpush1.msra.mxu0 0.0
    %5163 = vmatprep.subr.mxu0 0.0
    %5164 = vmatpush1.msra.mxu0 0.0
    %5165 = vmatprep.subr.mxu0 0.0
    %5166 = vmatpush1.msra.mxu0 0.0
    %5167 = vmatprep.subr.mxu0 0.0
    %5168 = vmatpush1.msra.mxu0 0.0
    %5169 = vmatprep.subr.mxu0 0.0
    %5170 = vmatpush1.msra.mxu0 0.0
    %5171 = vmatprep.subr.mxu0 0.0
    %5172 = vmatpush1.msra.mxu0 0.0
    %5173 = vmatprep.subr.mxu0 0.0
    %v5174 = vand.u32 %v5062, 4294901760
    %v5175 = vsub.f32 %v5062, %v5174
    %v5176 = vand.u32 %v5175, 4294901760
    %v5177 = vsub.f32 %v5175, %v5176
    %v5178 = vand.u32 %v5177, 4294901760
    %5179 = vmatpush1.msra.mxu0 %v5178
    %5180 = vmatprep.subr.mxu0 0.0
    %5181 = vmatpush2.msra.mxu0 0.0
    %5182 = vmatprep.subr.mxu0 0.0
    %5183 = vmatpush2.msra.mxu0 0.0
    %5184 = vmatprep.subr.mxu0 0.0
    %5185 = vmatpush2.msra.mxu0 0.0
    %5186 = vmatprep.subr.mxu0 0.0
    %5187 = vmatpush2.msra.mxu0 0.0
    %5188 = vmatprep.subr.mxu0 0.0
    %5189 = vmatpush2.msra.mxu0 0.0
    %5190 = vmatprep.subr.mxu0 0.0
    %5191 = vmatpush2.msra.mxu0 0.0
    %5192 = vmatprep.subr.mxu0 0.0
    %5193 = vmatpush2.msra.mxu0 0.0
    %5194 = vmatprep.subr.mxu0 0.0
    %5195 = vmatpush2.msra.mxu0 0.0
    %5196 = vmatprep.subr.mxu0 0.0
    %5197 = vmatpush2.msra.mxu0 0.0
    %5198 = vmatprep.subr.mxu0 0.0
    %5199 = vmatpush2.msra.mxu0 0.0
    %5200 = vmatprep.subr.mxu0 0.0
    %5201 = vmatpush2.msra.mxu0 0.0
    %5202 = vmatprep.subr.mxu0 0.0
    %5203 = vmatpush2.msra.mxu0 0.0
    %5204 = vmatprep.subr.mxu0 0.0
    %5205 = vmatpush2.msra.mxu0 0.0
    %5206 = vmatprep.subr.mxu0 0.0
    %5207 = vmatpush2.msra.mxu0 0.0
    %5208 = vmatprep.subr.mxu0 0.0
    %5209 = vmatpush2.msra.mxu0 0.0
    %5210 = vmatprep.subr.mxu0 0.0
    %5211 = vmatpush2.msra.mxu0 0.0
    %5212 = vmatprep.mubr.f32.mxu0 0.0
    %v5213 = vand.u32 %v5065, 4294901760
    %5214 = vmatmul.mubr.f32.gmra.mxu0 %v5213
    %v5215 = vpop.f32.mrf.mxu0
    %v5216 = vadd.f32 %v5140, %v5215
    %v5217 = vpop.f32.mrf.mxu0
    %5218 = vdwg.mxu0
    %5219 = vmatprep.subr.mxu0 0.0
    %5220 = vmatpush1.msra.mxu0 0.0
    %5221 = vmatprep.subr.mxu0 0.0
    %5222 = vmatpush1.msra.mxu0 0.0
    %5223 = vmatprep.subr.mxu0 0.0
    %5224 = vmatpush1.msra.mxu0 0.0
    %5225 = vmatprep.subr.mxu0 0.0
    %5226 = vmatpush1.msra.mxu0 0.0
    %5227 = vmatprep.subr.mxu0 0.0
    %5228 = vmatpush1.msra.mxu0 0.0
    %5229 = vmatprep.subr.mxu0 0.0
    %5230 = vmatpush1.msra.mxu0 0.0
    %5231 = vmatprep.subr.mxu0 0.0
    %5232 = vmatpush1.msra.mxu0 0.0
    %5233 = vmatprep.subr.mxu0 0.0
    %5234 = vmatpush1.msra.mxu0 0.0
    %5235 = vmatprep.subr.mxu0 0.0
    %5236 = vmatpush1.msra.mxu0 0.0
    %5237 = vmatprep.subr.mxu0 0.0
    %5238 = vmatpush1.msra.mxu0 0.0
    %5239 = vmatprep.subr.mxu0 0.0
    %5240 = vmatpush1.msra.mxu0 0.0
    %5241 = vmatprep.subr.mxu0 0.0
    %5242 = vmatpush1.msra.mxu0 0.0
    %5243 = vmatprep.subr.mxu0 0.0
    %5244 = vmatpush1.msra.mxu0 0.0
    %5245 = vmatprep.subr.mxu0 0.0
    %5246 = vmatpush1.msra.mxu0 0.0
    %5247 = vmatprep.subr.mxu0 0.0
    %5248 = vmatpush1.msra.mxu0 0.0
    %5249 = vmatprep.subr.mxu0 0.0
    %v5250 = vand.u32 %v5062, 4294901760
    %v5251 = vsub.f32 %v5062, %v5250
    %5252 = vmatpush1.msra.mxu0 %v5251
    %5253 = vmatprep.subr.mxu0 0.0
    %5254 = vmatpush2.msra.mxu0 0.0
    %5255 = vmatprep.subr.mxu0 0.0
    %5256 = vmatpush2.msra.mxu0 0.0
    %5257 = vmatprep.subr.mxu0 0.0
    %5258 = vmatpush2.msra.mxu0 0.0
    %5259 = vmatprep.subr.mxu0 0.0
    %5260 = vmatpush2.msra.mxu0 0.0
    %5261 = vmatprep.subr.mxu0 0.0
    %5262 = vmatpush2.msra.mxu0 0.0
    %5263 = vmatprep.subr.mxu0 0.0
    %5264 = vmatpush2.msra.mxu0 0.0
    %5265 = vmatprep.subr.mxu0 0.0
    %5266 = vmatpush2.msra.mxu0 0.0
    %5267 = vmatprep.subr.mxu0 0.0
    %5268 = vmatpush2.msra.mxu0 0.0
    %5269 = vmatprep.subr.mxu0 0.0
    %5270 = vmatpush2.msra.mxu0 0.0
    %5271 = vmatprep.subr.mxu0 0.0
    %5272 = vmatpush2.msra.mxu0 0.0
    %5273 = vmatprep.subr.mxu0 0.0
    %5274 = vmatpush2.msra.mxu0 0.0
    %5275 = vmatprep.subr.mxu0 0.0
    %5276 = vmatpush2.msra.mxu0 0.0
    %5277 = vmatprep.subr.mxu0 0.0
    %5278 = vmatpush2.msra.mxu0 0.0
    %5279 = vmatprep.subr.mxu0 0.0
    %5280 = vmatpush2.msra.mxu0 0.0
    %5281 = vmatprep.subr.mxu0 0.0
    %5282 = vmatpush2.msra.mxu0 0.0
    %5283 = vmatprep.subr.mxu0 0.0
    %5284 = vmatpush2.msra.mxu0 0.0
    %5285 = vmatprep.mubr.f32.mxu0 0.0
    %v5286 = vand.u32 %v5065, 4294901760
    %v5287 = vsub.f32 %v5065, %v5286
    %5288 = vmatmul.mubr.f32.gmra.mxu0 %v5287
    %v5289 = vpop.f32.mrf.mxu0
    %v5290 = vadd.f32 %v5216, %v5289
    %v5291 = vpop.f32.mrf.mxu0
    %5292 = vdwg.mxu0
    %5293 = vmatprep.subr.mxu0 0.0
    %5294 = vmatpush1.msra.mxu0 0.0
    %5295 = vmatprep.subr.mxu0 0.0
    %5296 = vmatpush1.msra.mxu0 0.0
    %5297 = vmatprep.subr.mxu0 0.0
    %5298 = vmatpush1.msra.mxu0 0.0
    %5299 = vmatprep.subr.mxu0 0.0
    %5300 = vmatpush1.msra.mxu0 0.0
    %5301 = vmatprep.subr.mxu0 0.0
    %5302 = vmatpush1.msra.mxu0 0.0
    %5303 = vmatprep.subr.mxu0 0.0
    %5304 = vmatpush1.msra.mxu0 0.0
    %5305 = vmatprep.subr.mxu0 0.0
    %5306 = vmatpush1.msra.mxu0 0.0
    %5307 = vmatprep.subr.mxu0 0.0
    %5308 = vmatpush1.msra.mxu0 0.0
    %5309 = vmatprep.subr.mxu0 0.0
    %5310 = vmatpush1.msra.mxu0 0.0
    %5311 = vmatprep.subr.mxu0 0.0
    %5312 = vmatpush1.msra.mxu0 0.0
    %5313 = vmatprep.subr.mxu0 0.0
    %5314 = vmatpush1.msra.mxu0 0.0
    %5315 = vmatprep.subr.mxu0 0.0
    %5316 = vmatpush1.msra.mxu0 0.0
    %5317 = vmatprep.subr.mxu0 0.0
    %5318 = vmatpush1.msra.mxu0 0.0
    %5319 = vmatprep.subr.mxu0 0.0
    %5320 = vmatpush1.msra.mxu0 0.0
    %5321 = vmatprep.subr.mxu0 0.0
    %5322 = vmatpush1.msra.mxu0 0.0
    %5323 = vmatprep.subr.mxu0 0.0
    %v5324 = vand.u32 %v5062, 4294901760
    %5325 = vmatpush1.msra.mxu0 %v5324
    %5326 = vmatprep.subr.mxu0 0.0
    %5327 = vmatpush2.msra.mxu0 0.0
    %5328 = vmatprep.subr.mxu0 0.0
    %5329 = vmatpush2.msra.mxu0 0.0
    %5330 = vmatprep.subr.mxu0 0.0
    %5331 = vmatpush2.msra.mxu0 0.0
    %5332 = vmatprep.subr.mxu0 0.0
    %5333 = vmatpush2.msra.mxu0 0.0
    %5334 = vmatprep.subr.mxu0 0.0
    %5335 = vmatpush2.msra.mxu0 0.0
    %5336 = vmatprep.subr.mxu0 0.0
    %5337 = vmatpush2.msra.mxu0 0.0
    %5338 = vmatprep.subr.mxu0 0.0
    %5339 = vmatpush2.msra.mxu0 0.0
    %5340 = vmatprep.subr.mxu0 0.0
    %5341 = vmatpush2.msra.mxu0 0.0
    %5342 = vmatprep.subr.mxu0 0.0
    %5343 = vmatpush2.msra.mxu0 0.0
    %5344 = vmatprep.subr.mxu0 0.0
    %5345 = vmatpush2.msra.mxu0 0.0
    %5346 = vmatprep.subr.mxu0 0.0
    %5347 = vmatpush2.msra.mxu0 0.0
    %5348 = vmatprep.subr.mxu0 0.0
    %5349 = vmatpush2.msra.mxu0 0.0
    %5350 = vmatprep.subr.mxu0 0.0
    %5351 = vmatpush2.msra.mxu0 0.0
    %5352 = vmatprep.subr.mxu0 0.0
    %5353 = vmatpush2.msra.mxu0 0.0
    %5354 = vmatprep.subr.mxu0 0.0
    %5355 = vmatpush2.msra.mxu0 0.0
    %5356 = vmatprep.subr.mxu0 0.0
    %5357 = vmatpush2.msra.mxu0 0.0
    %5358 = vmatprep.mubr.f32.mxu0 0.0
    %v5359 = vand.u32 %v5065, 4294901760
    %v5360 = vsub.f32 %v5065, %v5359
    %v5361 = vand.u32 %v5360, 4294901760
    %5362 = vmatmul.mubr.f32.gmra.mxu0 %v5361
    %v5363 = vpop.f32.mrf.mxu0
    %v5364 = vadd.f32 %v5290, %v5363
    %v5365 = vpop.f32.mrf.mxu0
    %5366 = vdwg.mxu0
    %5367 = vmatprep.subr.mxu0 0.0
    %5368 = vmatpush1.msra.mxu0 0.0
    %5369 = vmatprep.subr.mxu0 0.0
    %5370 = vmatpush1.msra.mxu0 0.0
    %5371 = vmatprep.subr.mxu0 0.0
    %5372 = vmatpush1.msra.mxu0 0.0
    %5373 = vmatprep.subr.mxu0 0.0
    %5374 = vmatpush1.msra.mxu0 0.0
    %5375 = vmatprep.subr.mxu0 0.0
    %5376 = vmatpush1.msra.mxu0 0.0
    %5377 = vmatprep.subr.mxu0 0.0
    %5378 = vmatpush1.msra.mxu0 0.0
    %5379 = vmatprep.subr.mxu0 0.0
    %5380 = vmatpush1.msra.mxu0 0.0
    %5381 = vmatprep.subr.mxu0 0.0
    %5382 = vmatpush1.msra.mxu0 0.0
    %5383 = vmatprep.subr.mxu0 0.0
    %5384 = vmatpush1.msra.mxu0 0.0
    %5385 = vmatprep.subr.mxu0 0.0
    %5386 = vmatpush1.msra.mxu0 0.0
    %5387 = vmatprep.subr.mxu0 0.0
    %5388 = vmatpush1.msra.mxu0 0.0
    %5389 = vmatprep.subr.mxu0 0.0
    %5390 = vmatpush1.msra.mxu0 0.0
    %5391 = vmatprep.subr.mxu0 0.0
    %5392 = vmatpush1.msra.mxu0 0.0
    %5393 = vmatprep.subr.mxu0 0.0
    %5394 = vmatpush1.msra.mxu0 0.0
    %5395 = vmatprep.subr.mxu0 0.0
    %5396 = vmatpush1.msra.mxu0 0.0
    %5397 = vmatprep.subr.mxu0 0.0
    %v5398 = vand.u32 %v5062, 4294901760
    %v5399 = vsub.f32 %v5062, %v5398
    %v5400 = vand.u32 %v5399, 4294901760
    %5401 = vmatpush1.msra.mxu0 %v5400
    %5402 = vmatprep.subr.mxu0 0.0
    %5403 = vmatpush2.msra.mxu0 0.0
    %5404 = vmatprep.subr.mxu0 0.0
    %5405 = vmatpush2.msra.mxu0 0.0
    %5406 = vmatprep.subr.mxu0 0.0
    %5407 = vmatpush2.msra.mxu0 0.0
    %5408 = vmatprep.subr.mxu0 0.0
    %5409 = vmatpush2.msra.mxu0 0.0
    %5410 = vmatprep.subr.mxu0 0.0
    %5411 = vmatpush2.msra.mxu0 0.0
    %5412 = vmatprep.subr.mxu0 0.0
    %5413 = vmatpush2.msra.mxu0 0.0
    %5414 = vmatprep.subr.mxu0 0.0
    %5415 = vmatpush2.msra.mxu0 0.0
    %5416 = vmatprep.subr.mxu0 0.0
    %5417 = vmatpush2.msra.mxu0 0.0
    %5418 = vmatprep.subr.mxu0 0.0
    %5419 = vmatpush2.msra.mxu0 0.0
    %5420 = vmatprep.subr.mxu0 0.0
    %5421 = vmatpush2.msra.mxu0 0.0
    %5422 = vmatprep.subr.mxu0 0.0
    %5423 = vmatpush2.msra.mxu0 0.0
    %5424 = vmatprep.subr.mxu0 0.0
    %5425 = vmatpush2.msra.mxu0 0.0
    %5426 = vmatprep.subr.mxu0 0.0
    %5427 = vmatpush2.msra.mxu0 0.0
    %5428 = vmatprep.subr.mxu0 0.0
    %5429 = vmatpush2.msra.mxu0 0.0
    %5430 = vmatprep.subr.mxu0 0.0
    %5431 = vmatpush2.msra.mxu0 0.0
    %5432 = vmatprep.subr.mxu0 0.0
    %5433 = vmatpush2.msra.mxu0 0.0
    %5434 = vmatprep.mubr.f32.mxu0 0.0
    %v5435 = vand.u32 %v5065, 4294901760
    %5436 = vmatmul.mubr.f32.gmra.mxu0 %v5435
    %v5437 = vpop.f32.mrf.mxu0
    %v5438 = vadd.f32 %v5364, %v5437
    %v5439 = vpop.f32.mrf.mxu0
    %5440 = vdwg.mxu0
    %5441 = vmatprep.subr.mxu0 0.0
    %5442 = vmatpush1.msra.mxu0 0.0
    %5443 = vmatprep.subr.mxu0 0.0
    %5444 = vmatpush1.msra.mxu0 0.0
    %5445 = vmatprep.subr.mxu0 0.0
    %5446 = vmatpush1.msra.mxu0 0.0
    %5447 = vmatprep.subr.mxu0 0.0
    %5448 = vmatpush1.msra.mxu0 0.0
    %5449 = vmatprep.subr.mxu0 0.0
    %5450 = vmatpush1.msra.mxu0 0.0
    %5451 = vmatprep.subr.mxu0 0.0
    %5452 = vmatpush1.msra.mxu0 0.0
    %5453 = vmatprep.subr.mxu0 0.0
    %5454 = vmatpush1.msra.mxu0 0.0
    %5455 = vmatprep.subr.mxu0 0.0
    %5456 = vmatpush1.msra.mxu0 0.0
    %5457 = vmatprep.subr.mxu0 0.0
    %5458 = vmatpush1.msra.mxu0 0.0
    %5459 = vmatprep.subr.mxu0 0.0
    %5460 = vmatpush1.msra.mxu0 0.0
    %5461 = vmatprep.subr.mxu0 0.0
    %5462 = vmatpush1.msra.mxu0 0.0
    %5463 = vmatprep.subr.mxu0 0.0
    %5464 = vmatpush1.msra.mxu0 0.0
    %5465 = vmatprep.subr.mxu0 0.0
    %5466 = vmatpush1.msra.mxu0 0.0
    %5467 = vmatprep.subr.mxu0 0.0
    %5468 = vmatpush1.msra.mxu0 0.0
    %5469 = vmatprep.subr.mxu0 0.0
    %5470 = vmatpush1.msra.mxu0 0.0
    %5471 = vmatprep.subr.mxu0 0.0
    %v5472 = vand.u32 %v5062, 4294901760
    %5473 = vmatpush1.msra.mxu0 %v5472
    %5474 = vmatprep.subr.mxu0 0.0
    %5475 = vmatpush2.msra.mxu0 0.0
    %5476 = vmatprep.subr.mxu0 0.0
    %5477 = vmatpush2.msra.mxu0 0.0
    %5478 = vmatprep.subr.mxu0 0.0
    %5479 = vmatpush2.msra.mxu0 0.0
    %5480 = vmatprep.subr.mxu0 0.0
    %5481 = vmatpush2.msra.mxu0 0.0
    %5482 = vmatprep.subr.mxu0 0.0
    %5483 = vmatpush2.msra.mxu0 0.0
    %5484 = vmatprep.subr.mxu0 0.0
    %5485 = vmatpush2.msra.mxu0 0.0
    %5486 = vmatprep.subr.mxu0 0.0
    %5487 = vmatpush2.msra.mxu0 0.0
    %5488 = vmatprep.subr.mxu0 0.0
    %5489 = vmatpush2.msra.mxu0 0.0
    %5490 = vmatprep.subr.mxu0 0.0
    %5491 = vmatpush2.msra.mxu0 0.0
    %5492 = vmatprep.subr.mxu0 0.0
    %5493 = vmatpush2.msra.mxu0 0.0
    %5494 = vmatprep.subr.mxu0 0.0
    %5495 = vmatpush2.msra.mxu0 0.0
    %5496 = vmatprep.subr.mxu0 0.0
    %5497 = vmatpush2.msra.mxu0 0.0
    %5498 = vmatprep.subr.mxu0 0.0
    %5499 = vmatpush2.msra.mxu0 0.0
    %5500 = vmatprep.subr.mxu0 0.0
    %5501 = vmatpush2.msra.mxu0 0.0
    %5502 = vmatprep.subr.mxu0 0.0
    %5503 = vmatpush2.msra.mxu0 0.0
    %5504 = vmatprep.subr.mxu0 0.0
    %5505 = vmatpush2.msra.mxu0 0.0
    %5506 = vmatprep.mubr.f32.mxu0 0.0
    %v5507 = vand.u32 %v5065, 4294901760
    %5508 = vmatmul.mubr.f32.gmra.mxu0 %v5507
    %v5509 = vpop.f32.mrf.mxu0
    %v5510 = vadd.f32 %v5438, %v5509
    %v5511 = vpop.f32.mrf.mxu0
    %5512 = vdwg.mxu0
    %5514 = vrot.lane.b32.xlu0 %v2095, 64
    %v5515 = vpop.permute.xlu0 %5514
    %5518 = vrot.lane.b32.xlu0 %v2584, 68
    %v5519 = vpop.permute.xlu0 %5518
    %5522 = vrot.lane.b32.xlu0 %v3073, 72
    %v5523 = vpop.permute.xlu0 %5522
    %5526 = vrot.lane.b32.xlu0 %v3562, 76
    %v5527 = vpop.permute.xlu0 %5526
    %5530 = vrot.lane.b32.xlu0 %v4051, 80
    %v5531 = vpop.permute.xlu0 %5530
    %5534 = vrot.lane.b32.xlu0 %v4540, 84
    %v5535 = vpop.permute.xlu0 %5534
    %5538 = vrot.lane.b32.xlu0 %v5029, 88
    %v5539 = vpop.permute.xlu0 %5538
    %5542 = vrot.lane.b32.xlu0 %v5510, 28
    %v5543 = vpop.permute.xlu0 %5542
    %vm5545 = vcmask 31744
    %v5546 = vsel %vm5545, %v5515, %v5519
    %v5547 = vsel %vm5064, %v5546, %v5523
    %vm5548 = vcmask 97280
    %v5549 = vsel %vm5548, %v5547, %v5527
    %v5550 = vsel %vm1142, %v5549, %v5531
    %vm5551 = vcmask 162816
    %v5552 = vsel %vm5551, %v5550, %v5535
    %vm5553 = vcmask 195584
    %v5554 = vsel %vm5553, %v5552, %v5539
    %vm5555 = vcmask 228352
    %v5556 = vsel %vm5555, %v5554, %v5543
    %v5557 = vld [vmem:[#allocation7] sm:$0x1]
    %v5559 = vlaneseq
    %v5560 = vshrl.u32 %v5559, 7
    %v5561 = vsub.s32 0, %v5560
    %v5562 = vrot.slane %v5557, %v5561
    %v5564 = vadd.f32 %v5556, %v5562
    %vm5565 = vcmask 254976
    %5566 = vst.msk [vmem:[%s5] sm:$0x3] %vm5565, %v5564
    // Predicated region
    $region38: #{decoder_forward.1} parent=1 // pred_check
      _
    $region39: #{decoder_forward.1} parent=1 // pred_check_branch
      %5568 = sbr.rel (0) target = $region41
    $region40: #{decoder_forward.1} parent=1 // pred_region
      _
    $region41: #{decoder_forward.1} parent=1 // pred_fallthru
      _
    // Predicated region
    $region42: #{decoder_forward.1} parent=1 // pred_check
      _
    $region43: #{decoder_forward.1} parent=1 // pred_check_branch
      %5570 = sbr.rel (0) target = $region45
    $region44: #{decoder_forward.1} parent=1 // pred_region
      _
    $region45: #{decoder_forward.1} parent=1 // pred_fallthru
      _
    %5571 = vsyncpa [#allocation3], 1
    %5572 = vsyncpa [#allocation5], 1
    %5573 = vsyncpa [#allocation8], 1

</llo_original>
